<compile_context>
chip_gen: v5e
topology: v5e:2x2
jax: 0.10.0
libtpu: 0.0.40
codegen_flags: <defaults>
</compile_context>

<pallas_src>
import functools

import jax
import jax.numpy as jnp
from jax import lax
from jax.experimental import pallas as pl
from jax.experimental.pallas import tpu as pltpu

MATMUL_DTYPE = jnp.bfloat16   # MXU operand dtype
STATE_DTYPE = jnp.float32     # h/c state + gate elementwise stay f32
STORE_DTYPE = jnp.bfloat16    # per-direction hidden streams written to HBM
GX_DTYPE = jnp.bfloat16       # hoisted input-projection scratch (review: halve VMEM)

_LANE = 128
_SUBLANE_BF16 = 16            # bf16 min sublane tile (review: dtype-aware batch pad)


def _round_up(v, m):
    return (v + m - 1) // m * m


# ----------------------------------------------------------------------------
# Per-generation tuning (review: don't hard-code one 32 MiB constant).
# ----------------------------------------------------------------------------
def _tpu_vmem_limit_bytes():
    cap = None
    try:
        info_fn = getattr(pltpu, "get_tpu_info", None)
        if info_fn is not None:
            info = info_fn()
            for name in ("vmem_capacity_bytes", "vmem_size_bytes", "vmem_bytes"):
                v = getattr(info, name, None)
                if v:
                    cap = int(v)
                    break
    except Exception:
        cap = None
    if cap is None:
        cap = 64 * 1024 * 1024          # assume smallest known (v7x per-core)
    # leave headroom for compiler scratch; cap at 100 MiB on 128 MiB chips
    return max(32 * 1024 * 1024, min(cap - 16 * 1024 * 1024, 100 * 1024 * 1024))


def _tpu_cores_per_chip():
    try:
        info_fn = getattr(pltpu, "get_tpu_info", None)
        if info_fn is not None:
            info = info_fn()
            for name in ("num_cores", "core_count", "num_tensorcores",
                         "tensorcore_count"):
                v = getattr(info, name, None)
                if v:
                    return int(v)
    except Exception:
        pass
    return 1


_VMEM_LIMIT = _tpu_vmem_limit_bytes()
_TC_PER_CHIP = _tpu_cores_per_chip()


def _pick_time_chunk(T, Bp, nin, Hp, vmem_limit):
    """Pick Tc so that Tc*Bp fills the MXU rows and the steady-state VMEM fits."""
    Hp4 = 4 * Hp
    target = max(16, -(-256 // Bp))          # aim Tc*Bp >= 256 rows (also fine on v5e)
    target = min(target, 128, T)
    # steady-state VMEM (fused path is the worst case):
    #   x blocks   : 2 dirs * 2 bufs * Tc*Bp*nin * 2B
    #   out blocks : 2 dirs * 2 bufs * Tc*Bp*Hp  * 2B
    #   gx scratch : 2 dirs * Tc*Bp*4Hp * 2B (bf16)
    per_tc = Bp * (8 * nin + 8 * Hp + 16 * Hp)
    fixed = 16 * Hp * (nin + Hp) + 16 * Bp * Hp      # weight scratch + f32 states
    budget = int(vmem_limit * 0.7) - fixed
    if budget > 0:
        target = min(target, max(1, budget // max(per_tc, 1)))
    else:
        target = 1
    return max(1, target)


# ----------------------------------------------------------------------------
# Shared LSTM cell (PyTorch gate order [i, f, g, o], no bias).
# ----------------------------------------------------------------------------
def _lstm_cell(gx_t, h, c, whhT, Hp):
    gates = gx_t.astype(jnp.float32) + jnp.dot(
        h.astype(MATMUL_DTYPE), whhT, preferred_element_type=jnp.float32)
    i_g = jax.nn.sigmoid(gates[:, 0 * Hp:1 * Hp])   # 128-lane aligned slices
    f_g = jax.nn.sigmoid(gates[:, 1 * Hp:2 * Hp])
    g_g = jnp.tanh(gates[:, 2 * Hp:3 * Hp])
    o_g = jax.nn.sigmoid(gates[:, 3 * Hp:4 * Hp])
    c_new = f_g * c + i_g * g_g
    h_new = o_g * jnp.tanh(c_new)
    return h_new, c_new


# ----------------------------------------------------------------------------
# Kernel 1a (fused): both directions per time chunk.  grid=(nc,), serial.
# Weights live in HBM (pl.ANY) and are copied once into VMEM scratch at chunk 0.
# ----------------------------------------------------------------------------
def _bilstm_fused_kernel(xf_ref, xb_ref, wihT_hbm, whhT_hbm,
                         outf_ref, outb_ref,
                         hf, cf, hb, cb, gxf, gxb, wih_v, whh_v, sem):
    c_idx = pl.program_id(0)
    Tc, Bp, nin = xf_ref.shape
    Hp = hf.shape[-1]

    @pl.when(c_idx == 0)
    def _init():
        cp_ih = pltpu.make_async_copy(wihT_hbm, wih_v, sem.at[0])
        cp_hh = pltpu.make_async_copy(whhT_hbm, whh_v, sem.at[1])
        cp_ih.start()
        cp_hh.start()
        hf[...] = jnp.zeros_like(hf)
        cf[...] = jnp.zeros_like(cf)
        hb[...] = jnp.zeros_like(hb)
        cb[...] = jnp.zeros_like(cb)
        cp_ih.wait()
        cp_hh.wait()

    # ---- hoisted input projection: one big MXU matmul per direction per chunk ----
    xf2d = xf_ref[...].reshape(Tc * Bp, nin)
    xb2d = xb_ref[...].reshape(Tc * Bp, nin)
    gxf[...] = jnp.dot(xf2d, wih_v[0], preferred_element_type=jnp.float32
                       ).reshape(Tc, Bp, 4 * Hp).astype(gxf.dtype)
    gxb[...] = jnp.dot(xb2d, wih_v[1], preferred_element_type=jnp.float32
                       ).reshape(Tc, Bp, 4 * Hp).astype(gxb.dtype)

    whhT_f = whh_v[0]
    whhT_b = whh_v[1]

    def step(i, carry):
        hf_v, cf_v, hb_v, cb_v = carry
        hf_n, cf_n = _lstm_cell(gxf[i], hf_v, cf_v, whhT_f, Hp)
        outf_ref[i] = hf_n.astype(outf_ref.dtype)
        j = Tc - 1 - i                           # bwd: reversed within-chunk time
        hb_n, cb_n = _lstm_cell(gxb[j], hb_v, cb_v, whhT_b, Hp)
        outb_ref[j] = hb_n.astype(outb_ref.dtype)
        return hf_n, cf_n, hb_n, cb_n

    carry0 = (hf[...], cf[...], hb[...], cb[...])
    hf_v, cf_v, hb_v, cb_v = lax.fori_loop(0, Tc, step, carry0,
                                           unroll=min(4, Tc))
    hf[...] = hf_v
    cf[...] = cf_v
    hb[...] = hb_v
    cb[...] = cb_v


def bilstm_pallas_fused(x_p, wihT_all, whhT_all, *, time_chunk, vmem_limit):
    Tp, Bp, nin = x_p.shape
    Hp = whhT_all.shape[1]
    Hp4 = whhT_all.shape[2]
    Tc = time_chunk
    assert Tp % Tc == 0, (Tp, Tc)
    nc = Tp // Tc

    grid_spec = pltpu.PrefetchScalarGridSpec(
        num_scalar_prefetch=0,
        grid=(nc,),
        in_specs=[
            pl.BlockSpec((Tc, Bp, nin), lambda c: (c, 0, 0)),            # x, fwd chunk
            pl.BlockSpec((Tc, Bp, nin), lambda c: (nc - 1 - c, 0, 0)),   # x, bwd chunk
            pl.BlockSpec(memory_space=pl.ANY),                           # Wih^T (2,nin,4Hp)
            pl.BlockSpec(memory_space=pl.ANY),                           # Whh^T (2,Hp,4Hp)
        ],
        out_specs=[
            pl.BlockSpec((Tc, Bp, Hp), lambda c: (c, 0, 0)),             # fwd hidden chunk
            pl.BlockSpec((Tc, Bp, Hp), lambda c: (nc - 1 - c, 0, 0)),    # bwd hidden chunk
        ],
        scratch_shapes=[
            pltpu.VMEM((Bp, Hp), STATE_DTYPE),        # h fwd
            pltpu.VMEM((Bp, Hp), STATE_DTYPE),        # c fwd
            pltpu.VMEM((Bp, Hp), STATE_DTYPE),        # h bwd
            pltpu.VMEM((Bp, Hp), STATE_DTYPE),        # c bwd
            pltpu.VMEM((Tc, Bp, Hp4), GX_DTYPE),      # hoisted gates_x fwd (bf16)
            pltpu.VMEM((Tc, Bp, Hp4), GX_DTYPE),      # hoisted gates_x bwd (bf16)
            pltpu.VMEM((2, nin, Hp4), MATMUL_DTYPE),  # Wih^T, single-buffered
            pltpu.VMEM((2, Hp, Hp4), MATMUL_DTYPE),   # Whh^T, single-buffered
            pltpu.SemaphoreType.DMA((2,)),
        ],
    )

    out_fwd, out_bwd = pl.pallas_call(
        _bilstm_fused_kernel,
        out_shape=(jax.ShapeDtypeStruct((Tp, Bp, Hp), STORE_DTYPE),
                   jax.ShapeDtypeStruct((Tp, Bp, Hp), STORE_DTYPE)),
        grid_spec=grid_spec,
        compiler_params=pltpu.CompilerParams(
            dimension_semantics=("arbitrary",),        # serial recurrence
            vmem_limit_bytes=vmem_limit),
    )(x_p, x_p, wihT_all, whhT_all)
    return out_fwd, out_bwd


# ----------------------------------------------------------------------------
# Kernel 1b (direction-split): grid=(2, nc), direction axis "parallel" so a
# 2-TensorCore chip (v7x) runs fwd and bwd on separate cores.
# ----------------------------------------------------------------------------
def _lstm_dir_kernel(x_ref, wihT_hbm, whhT_hbm, out_ref,
                     h_st, c_st, gx, wih_v, whh_v, sem):
    d = pl.program_id(0)          # 0 = forward, 1 = backward
    c_idx = pl.program_id(1)      # time-chunk index (within this direction)
    Tc, Bp, nin = x_ref.shape
    Hp = h_st.shape[-1]

    @pl.when(c_idx == 0)
    def _init():
        # load THIS direction's weights once per direction, reset state
        cp_ih = pltpu.make_async_copy(wihT_hbm.at[d], wih_v, sem.at[0])
        cp_hh = pltpu.make_async_copy(whhT_hbm.at[d], whh_v, sem.at[1])
        cp_ih.start()
        cp_hh.start()
        h_st[...] = jnp.zeros_like(h_st)
        c_st[...] = jnp.zeros_like(c_st)
        cp_ih.wait()
        cp_hh.wait()

    # hoisted input projection for the whole chunk
    x2d = x_ref[...].reshape(Tc * Bp, nin)
    gx[...] = jnp.dot(x2d, wih_v[...], preferred_element_type=jnp.float32
                      ).reshape(Tc, Bp, 4 * Hp).astype(gx.dtype)

    whhT = whh_v[...]

    def step(i, carry):
        h_v, c_v = carry
        # fwd: local time i ; bwd: local time Tc-1-i (chunk already reverse-indexed)
        t_local = i + d * (Tc - 1 - 2 * i)
        h_n, c_n = _lstm_cell(gx[t_local], h_v, c_v, whhT, Hp)
        out_ref[t_local] = h_n.astype(out_ref.dtype)
        return h_n, c_n

    h_v, c_v = lax.fori_loop(0, Tc, step, (h_st[...], c_st[...]),
                             unroll=min(4, Tc))
    h_st[...] = h_v
    c_st[...] = c_v


def bilstm_pallas_split(x_p, wihT_all, whhT_all, *, time_chunk, vmem_limit):
    Tp, Bp, nin = x_p.shape
    Hp = whhT_all.shape[1]
    Hp4 = whhT_all.shape[2]
    Tc = time_chunk
    assert Tp % Tc == 0, (Tp, Tc)
    nc = Tp // Tc

    def x_map(d, c):       # fwd reads chunk c, bwd reads chunk nc-1-c
        return (d * (nc - 1 - c) + (1 - d) * c, 0, 0)

    def out_map(d, c):
        return (d, d * (nc - 1 - c) + (1 - d) * c, 0, 0)

    grid_spec = pltpu.PrefetchScalarGridSpec(
        num_scalar_prefetch=0,
        grid=(2, nc),
        in_specs=[
            pl.BlockSpec((Tc, Bp, nin), x_map),
            pl.BlockSpec(memory_space=pl.ANY),       # Wih^T stacked (2, nin, 4Hp)
            pl.BlockSpec(memory_space=pl.ANY),       # Whh^T stacked (2, Hp, 4Hp)
        ],
        out_specs=pl.BlockSpec((None, Tc, Bp, Hp), out_map),
        scratch_shapes=[
            pltpu.VMEM((Bp, Hp), STATE_DTYPE),        # h
            pltpu.VMEM((Bp, Hp), STATE_DTYPE),        # c
            pltpu.VMEM((Tc, Bp, Hp4), GX_DTYPE),      # hoisted gates_x (bf16)
            pltpu.VMEM((nin, Hp4), MATMUL_DTYPE),     # this direction's Wih^T
            pltpu.VMEM((Hp, Hp4), MATMUL_DTYPE),      # this direction's Whh^T
            pltpu.SemaphoreType.DMA((2,)),
        ],
    )

    out = pl.pallas_call(
        _lstm_dir_kernel,
        out_shape=jax.ShapeDtypeStruct((2, Tp, Bp, Hp), STORE_DTYPE),
        grid_spec=grid_spec,
        compiler_params=pltpu.CompilerParams(
            dimension_semantics=("parallel", "arbitrary"),  # directions across cores
            vmem_limit_bytes=vmem_limit),
    )(x_p, wihT_all, whhT_all)
    return out[0], out[1]


# ----------------------------------------------------------------------------
# Kernel 2: embedding Linear, fused over the two directions (no concat):
#   y = hf @ Wemb_f^T + hb @ Wemb_b^T + b, row-tiled.
# ----------------------------------------------------------------------------
def _emb_kernel(hf_ref, hb_ref, wfT_ref, wbT_ref, b_ref, o_ref):
    acc = jnp.dot(hf_ref[...], wfT_ref[...], preferred_element_type=jnp.float32)
    acc = acc + jnp.dot(hb_ref[...], wbT_ref[...], preferred_element_type=jnp.float32)
    o_ref[...] = (acc + b_ref[...]).astype(o_ref.dtype)


def _pick_row_tile(R, target=512):
    t = min(target, R)             # R and target are multiples of 8
    while R % t != 0:
        t -= 8
    return t


def embedding_pallas(hf2d, hb2d, wfT, wbT, b2d, *, row_tile=512):
    R, Hp = hf2d.shape
    nout_p = wfT.shape[1]
    tm = _pick_row_tile(R, row_tile)
    grid = (R // tm,)

    return pl.pallas_call(
        _emb_kernel,
        # TODO(synk): emit bf16 here if the downstream consumer tolerates it
        #             (halves the HBM-bound writeback); kept f32 = module dtype.
        out_shape=jax.ShapeDtypeStruct((R, nout_p), jnp.float32),
        grid_spec=pltpu.PrefetchScalarGridSpec(
            num_scalar_prefetch=0,
            grid=grid,
            in_specs=[
                pl.BlockSpec((tm, Hp), lambda i: (i, 0)),
                pl.BlockSpec((tm, Hp), lambda i: (i, 0)),
                pl.BlockSpec((Hp, nout_p), lambda i: (0, 0)),   # weights resident
                pl.BlockSpec((Hp, nout_p), lambda i: (0, 0)),
                pl.BlockSpec((1, nout_p), lambda i: (0, 0)),
            ],
            out_specs=pl.BlockSpec((tm, nout_p), lambda i: (i, 0)),
        ),
        compiler_params=pltpu.CompilerParams(
            dimension_semantics=("parallel",),
            vmem_limit_bytes=_VMEM_LIMIT),
    )(hf2d, hb2d, wfT, wbT, b2d)


# ----------------------------------------------------------------------------
# Wrapper-side weight preparation: pad (H->Hp per gate block, nout->nout_p),
# pre-transpose, cast to the MXU dtype, stack the two directions.  Padded
# hidden / batch / time entries stay exactly zero through the recurrence
# (zero gate pre-activations, bias=False -> g=0, c=0, h=0).
# ----------------------------------------------------------------------------
def _prepare_params(params, H, nout, Hp, nout_p):
    def prep_ih(w):  # (4H, nin) -> (nin, 4Hp)
        nin = w.shape[1]
        w4 = w.reshape(4, H, nin)
        w4 = jnp.pad(w4, ((0, 0), (0, Hp - H), (0, 0)))
        return w4.reshape(4 * Hp, nin).T.astype(MATMUL_DTYPE)

    def prep_hh(w):  # (4H, H) -> (Hp, 4Hp)
        w4 = w.reshape(4, H, H)
        w4 = jnp.pad(w4, ((0, 0), (0, Hp - H), (0, Hp - H)))
        return w4.reshape(4 * Hp, Hp).T.astype(MATMUL_DTYPE)

    def prep_emb(w):  # (nout, H) -> (Hp, nout_p)
        w = jnp.pad(w, ((0, nout_p - nout), (0, Hp - H)))
        return w.T.astype(MATMUL_DTYPE)

    wihT_all = jnp.stack([prep_ih(params["wih_f"]), prep_ih(params["wih_b"])])
    whhT_all = jnp.stack([prep_hh(params["whh_f"]), prep_hh(params["whh_b"])])

    w_emb = params["w_emb"]                       # (nout, 2H)
    wembT_f = prep_emb(w_emb[:, :H])
    wembT_b = prep_emb(w_emb[:, H:])
    b2d = jnp.pad(params["b_emb"], (0, nout_p - nout)).astype(jnp.float32)
    b2d = b2d.reshape(1, nout_p)
    return wihT_all, whhT_all, wembT_f, wembT_b, b2d


# ----------------------------------------------------------------------------
# Full module forward
# ----------------------------------------------------------------------------
@functools.partial(jax.jit, static_argnames=("time_chunk", "split_directions"))
def bilstm_module_forward(x, params, *, time_chunk=None, split_directions=None):
    T, B, nin = x.shape
    H = params["whh_f"].shape[1]
    nout = params["w_emb"].shape[0]

    Hp = _round_up(H, _LANE)
    Bp = _round_up(B, _SUBLANE_BF16)
    nout_p = _round_up(nout, _LANE)

    if split_directions is None:
        split_directions = _TC_PER_CHIP >= 2      # v7x: one direction per TensorCore

    if time_chunk is None:
        time_chunk = _pick_time_chunk(T, Bp, nin, Hp, _VMEM_LIMIT)
    # pad T up to a multiple of the chunk (handles prime / awkward T)
    nc = -(-T // time_chunk)
    Tc = -(-T // nc)
    Tp = nc * Tc

    (wihT_all, whhT_all, wembT_f, wembT_b, b2d) = _prepare_params(
        params, H, nout, Hp, nout_p)

    x_p = jnp.pad(x, ((0, Tp - T), (0, Bp - B), (0, 0))).astype(MATMUL_DTYPE)

    if split_directions:
        out_fwd, out_bwd = bilstm_pallas_split(
            x_p, wihT_all, whhT_all, time_chunk=Tc, vmem_limit=_VMEM_LIMIT)
    else:
        out_fwd, out_bwd = bilstm_pallas_fused(
            x_p, wihT_all, whhT_all, time_chunk=Tc, vmem_limit=_VMEM_LIMIT)

    emb = embedding_pallas(out_fwd.reshape(Tp * Bp, Hp),
                           out_bwd.reshape(Tp * Bp, Hp),
                           wembT_f, wembT_b, b2d)
    return emb.reshape(Tp, Bp, nout_p)[:T, :B, :nout]


# ----------------------------------------------------------------------------
# Pure-JAX f32 reference (lax.scan) for a sanity check
# ----------------------------------------------------------------------------
def _lstm_ref_dir(x, wih, whh, H):
    def step(carry, xt):
        h, c = carry
        gates = xt @ wih.T + h @ whh.T
        i = jax.nn.sigmoid(gates[:, :H])
        f = jax.nn.sigmoid(gates[:, H:2 * H])
        g = jnp.tanh(gates[:, 2 * H:3 * H])
        o = jax.nn.sigmoid(gates[:, 3 * H:])
        c = f * c + i * g
        h = o * jnp.tanh(c)
        return (h, c), h

    B = x.shape[1]
    init = (jnp.zeros((B, H), jnp.float32), jnp.zeros((B, H), jnp.float32))
    _, hs = lax.scan(step, init, x)
    return hs


def reference_forward(x, params, nout):
    H = params["whh_f"].shape[1]
    fwd = _lstm_ref_dir(x, params["wih_f"], params["whh_f"], H)
    bwd = _lstm_ref_dir(x[::-1], params["wih_b"], params["whh_b"], H)[::-1]
    rnn_out = jnp.concatenate([fwd, bwd], axis=-1)
    T, B, D = rnn_out.shape
    emb = rnn_out.reshape(T * B, D) @ params["w_emb"].T + params["b_emb"]
    return emb.reshape(T, B, nout)


# ----------------------------------------------------------------------------
if __name__ == "__main__":
    # Small shapes consistent with the module's forward: x is (T, B, nin)
    T, B, nin, H, nout = 8, 2, 16, 32, 8

    key = jax.random.PRNGKey(0)
    ks = jax.random.split(key, 8)

    stdv = 1.0 / (H ** 0.5)            # PyTorch LSTM init range
    stdv_lin = 1.0 / ((2 * H) ** 0.5)  # PyTorch Linear init range

    params = {
        "wih_f": jax.random.uniform(ks[0], (4 * H, nin), jnp.float32, -stdv, stdv),
        "whh_f": jax.random.uniform(ks[1], (4 * H, H), jnp.float32, -stdv, stdv),
        "wih_b": jax.random.uniform(ks[2], (4 * H, nin), jnp.float32, -stdv, stdv),
        "whh_b": jax.random.uniform(ks[3], (4 * H, H), jnp.float32, -stdv, stdv),
        "w_emb": jax.random.uniform(ks[4], (nout, 2 * H), jnp.float32,
                                    -stdv_lin, stdv_lin),
        "b_emb": jax.random.uniform(ks[5], (nout,), jnp.float32,
                                    -stdv_lin, stdv_lin),
    }
    x = jax.random.normal(ks[6], (T, B, nin), jnp.float32)
    ref = jax.block_until_ready(reference_forward(x, params, nout))

    # 1) fused-directions path (default on 1-TC chips), 2 chunks -> exercises carry
    out_fused = jax.block_until_ready(
        bilstm_module_forward(x, params, time_chunk=4, split_directions=False))
    assert out_fused.shape == (T, B, nout), out_fused.shape
    assert jnp.allclose(out_fused, ref, atol=5e-2, rtol=5e-2), \
        float(jnp.max(jnp.abs(out_fused - ref)))

    # 2) direction-split path (v7x: one direction per TensorCore)
    out_split = jax.block_until_ready(
        bilstm_module_forward(x, params, time_chunk=4, split_directions=True))
    assert out_split.shape == (T, B, nout), out_split.shape
    assert jnp.allclose(out_split, ref, atol=5e-2, rtol=5e-2), \
        float(jnp.max(jnp.abs(out_split - ref)))

    # 3) awkward T (exercises the zero-padded time tail) with default path selection
    T2 = 7
    x2 = x[:T2]
    ref2 = jax.block_until_ready(reference_forward(x2, params, nout))
    out2 = jax.block_until_ready(
        bilstm_module_forward(x2, params, time_chunk=4))
    assert out2.shape == (T2, B, nout), out2.shape
    assert jnp.allclose(out2, ref2, atol=5e-2, rtol=5e-2), \
        float(jnp.max(jnp.abs(out2 - ref2)))

    print("KERNEL_OK")
</pallas_src>

<mosaic_0001>
module attributes {stable_mosaic.version = 11 : i64} {
  func.func @_emb_kernel(%arg0: i32, %arg1: memref<128x128xbf16, #tpu.memory_space<vmem>>, %arg2: memref<128x128xbf16, #tpu.memory_space<vmem>>, %arg3: memref<128x128xbf16, #tpu.memory_space<vmem>>, %arg4: memref<128x128xbf16, #tpu.memory_space<vmem>>, %arg5: memref<1x128xf32, #tpu.memory_space<vmem>>, %arg6: memref<128x128xf32, #tpu.memory_space<vmem>>) attributes {dimension_semantics = [#tpu.dimension_semantics<parallel>], iteration_bounds = array<i64: 1>, scalar_prefetch = 0 : i64, scratch_operands = 0 : i64, tpu.core_type = #tpu.core_type<tc>, window_params = [{transform_indices = @transform_0, window_bounds = array<i64: 128, 128>}, {transform_indices = @transform_1, window_bounds = array<i64: 128, 128>}, {pipeline_mode = #tpu.pipeline_mode<synchronous>, transform_indices = @transform_2, window_bounds = array<i64: 128, 128>}, {pipeline_mode = #tpu.pipeline_mode<synchronous>, transform_indices = @transform_3, window_bounds = array<i64: 128, 128>}, {pipeline_mode = #tpu.pipeline_mode<synchronous>, transform_indices = @transform_4, window_bounds = array<i64: 1, 128>}, {transform_indices = @transform_5, window_bounds = array<i64: 128, 128>}]} {
    %c0 = arith.constant 0 : index
    %c0_0 = arith.constant 0 : index
    %0 = vector.load %arg1[%c0, %c0_0] : memref<128x128xbf16, #tpu.memory_space<vmem>>, vector<128x128xbf16>
    %c0_1 = arith.constant 0 : index
    %c0_2 = arith.constant 0 : index
    %1 = vector.load %arg3[%c0_1, %c0_2] : memref<128x128xbf16, #tpu.memory_space<vmem>>, vector<128x128xbf16>
    %cst = arith.constant dense<0.000000e+00> : vector<128x128xf32>
    %2 = tpu.matmul %0, %1, %cst {dimension_numbers = #tpu.dot_dimension_numbers<[1], [0], [0], [1], [0, 0, 1, 1], [], []>} : vector<128x128xbf16>, vector<128x128xbf16>, vector<128x128xf32> -> vector<128x128xf32>
    %c0_3 = arith.constant 0 : index
    %c0_4 = arith.constant 0 : index
    %3 = vector.load %arg2[%c0_3, %c0_4] : memref<128x128xbf16, #tpu.memory_space<vmem>>, vector<128x128xbf16>
    %c0_5 = arith.constant 0 : index
    %c0_6 = arith.constant 0 : index
    %4 = vector.load %arg4[%c0_5, %c0_6] : memref<128x128xbf16, #tpu.memory_space<vmem>>, vector<128x128xbf16>
    %cst_7 = arith.constant dense<0.000000e+00> : vector<128x128xf32>
    %5 = tpu.matmul %3, %4, %cst_7 {dimension_numbers = #tpu.dot_dimension_numbers<[1], [0], [0], [1], [0, 0, 1, 1], [], []>} : vector<128x128xbf16>, vector<128x128xbf16>, vector<128x128xf32> -> vector<128x128xf32>
    %6 = arith.addf %2, %5 : vector<128x128xf32>
    %c0_8 = arith.constant 0 : index
    %c0_9 = arith.constant 0 : index
    %7 = vector.load %arg5[%c0_8, %c0_9] : memref<1x128xf32, #tpu.memory_space<vmem>>, vector<1x128xf32>
    %8 = vector.broadcast %7 : vector<1x128xf32> to vector<128x128xf32>
    %9 = arith.addf %6, %8 : vector<128x128xf32>
    %c0_10 = arith.constant 0 : index
    %c0_11 = arith.constant 0 : index
    %10 = vector.load %arg6[%c0_10, %c0_11] : memref<128x128xf32, #tpu.memory_space<vmem>>, vector<128x128xf32>
    tpu.vector_store %arg6[%c0_10, %c0_11], %9 {strides = array<i32>} : memref<128x128xf32, #tpu.memory_space<vmem>>, vector<128x128xf32>,
    return
  }
  func.func @transform_0(%arg0: i32) -> (i32, i32) {
    %c0_i32 = arith.constant 0 : i32
    %c0_i32_0 = arith.constant 0 : i32
    return %arg0, %c0_i32 : i32, i32
  }
  func.func @transform_1(%arg0: i32) -> (i32, i32) {
    %c0_i32 = arith.constant 0 : i32
    %c0_i32_0 = arith.constant 0 : i32
    return %arg0, %c0_i32 : i32, i32
  }
  func.func @transform_2(%arg0: i32) -> (i32, i32) {
    %c0_i32 = arith.constant 0 : i32
    %c0_i32_0 = arith.constant 0 : i32
    %c0_i32_1 = arith.constant 0 : i32
    return %c0_i32, %c0_i32_0 : i32, i32
  }
  func.func @transform_3(%arg0: i32) -> (i32, i32) {
    %c0_i32 = arith.constant 0 : i32
    %c0_i32_0 = arith.constant 0 : i32
    %c0_i32_1 = arith.constant 0 : i32
    return %c0_i32, %c0_i32_0 : i32, i32
  }
  func.func @transform_4(%arg0: i32) -> (i32, i32) {
    %c0_i32 = arith.constant 0 : i32
    %c0_i32_0 = arith.constant 0 : i32
    %c0_i32_1 = arith.constant 0 : i32
    return %c0_i32, %c0_i32_0 : i32, i32
  }
  func.func @transform_5(%arg0: i32) -> (i32, i32) {
    %c0_i32 = arith.constant 0 : i32
    %c0_i32_0 = arith.constant 0 : i32
    return %arg0, %c0_i32 : i32, i32
  }
}

module attributes {stable_mosaic.version = 11 : i64} {
  func.func @_bilstm_fused_kernel(%arg0: i32, %arg1: memref<4x16x16xbf16, #tpu.memory_space<vmem>>, %arg2: memref<4x16x16xbf16, #tpu.memory_space<vmem>>, %arg3: memref<2x16x512xbf16, #tpu.memory_space<any>>, %arg4: memref<2x128x512xbf16, #tpu.memory_space<any>>, %arg5: memref<4x16x128xbf16, #tpu.memory_space<vmem>>, %arg6: memref<4x16x128xbf16, #tpu.memory_space<vmem>>, %arg7: memref<16x128xf32, #tpu.memory_space<vmem>>, %arg8: memref<16x128xf32, #tpu.memory_space<vmem>>, %arg9: memref<16x128xf32, #tpu.memory_space<vmem>>, %arg10: memref<16x128xf32, #tpu.memory_space<vmem>>, %arg11: memref<4x16x512xbf16, #tpu.memory_space<vmem>>, %arg12: memref<4x16x512xbf16, #tpu.memory_space<vmem>>, %arg13: memref<2x16x512xbf16, #tpu.memory_space<vmem>>, %arg14: memref<2x128x512xbf16, #tpu.memory_space<vmem>>, %arg15: memref<2x!tpu.dma_semaphore, #tpu.memory_space<semaphore_mem>>) attributes {dimension_semantics = [#tpu.dimension_semantics<arbitrary>], iteration_bounds = array<i64: 2>, scalar_prefetch = 0 : i64, scratch_operands = 9 : i64, tpu.core_type = #tpu.core_type<tc>, window_params = [{transform_indices = @transform_0, window_bounds = array<i64: 4, 16, 16>}, {transform_indices = @transform_1, window_bounds = array<i64: 4, 16, 16>}, {}, {}, {transform_indices = @transform_4, window_bounds = array<i64: 4, 16, 128>}, {transform_indices = @transform_5, window_bounds = array<i64: 4, 16, 128>}]} {
    %c0_i32 = arith.constant 0 : i32
    %0 = arith.cmpi eq, %arg0, %c0_i32 : i32
    %1 = arith.extui %0 : i1 to i32
    %c0_i32_0 = arith.constant 0 : i32
    %2 = arith.cmpi ne, %1, %c0_i32_0 : i32
    scf.if %2 {
      %c0_i32_109 = arith.constant 0 : i32
      %331 = tpu.memref_slice %arg15[%c0_i32_109] : memref<2x!tpu.dma_semaphore, #tpu.memory_space<semaphore_mem>> -> memref<1x!tpu.dma_semaphore, #tpu.memory_space<semaphore_mem>>
      %332 = tpu.memref_squeeze %331 : memref<1x!tpu.dma_semaphore, #tpu.memory_space<semaphore_mem>> -> memref<!tpu.dma_semaphore, #tpu.memory_space<semaphore_mem>>
      tpu.enqueue_dma source(%arg3 : memref<2x16x512xbf16, #tpu.memory_space<any>>) target(%arg13 : memref<2x16x512xbf16, #tpu.memory_space<vmem>>) target_semaphore(%332 : memref<!tpu.dma_semaphore, #tpu.memory_space<semaphore_mem>>)
      %c1_i32_110 = arith.constant 1 : i32
      %333 = tpu.memref_slice %arg15[%c1_i32_110] : memref<2x!tpu.dma_semaphore, #tpu.memory_space<semaphore_mem>> -> memref<1x!tpu.dma_semaphore, #tpu.memory_space<semaphore_mem>>
      %334 = tpu.memref_squeeze %333 : memref<1x!tpu.dma_semaphore, #tpu.memory_space<semaphore_mem>> -> memref<!tpu.dma_semaphore, #tpu.memory_space<semaphore_mem>>
      tpu.enqueue_dma source(%arg4 : memref<2x128x512xbf16, #tpu.memory_space<any>>) target(%arg14 : memref<2x128x512xbf16, #tpu.memory_space<vmem>>) target_semaphore(%334 : memref<!tpu.dma_semaphore, #tpu.memory_space<semaphore_mem>>)
      %cst_111 = arith.constant 0.000000e+00 : f32
      %335 = vector.broadcast %cst_111 : f32 to vector<16x128xf32>
      %c0_112 = arith.constant 0 : index
      %c0_113 = arith.constant 0 : index
      %336 = vector.load %arg7[%c0_112, %c0_113] : memref<16x128xf32, #tpu.memory_space<vmem>>, vector<16x128xf32>
      tpu.vector_store %arg7[%c0_112, %c0_113], %335 {strides = array<i32>} : memref<16x128xf32, #tpu.memory_space<vmem>>, vector<16x128xf32>,
      %cst_114 = arith.constant 0.000000e+00 : f32
      %337 = vector.broadcast %cst_114 : f32 to vector<16x128xf32>
      %c0_115 = arith.constant 0 : index
      %c0_116 = arith.constant 0 : index
      %338 = vector.load %arg8[%c0_115, %c0_116] : memref<16x128xf32, #tpu.memory_space<vmem>>, vector<16x128xf32>
      tpu.vector_store %arg8[%c0_115, %c0_116], %337 {strides = array<i32>} : memref<16x128xf32, #tpu.memory_space<vmem>>, vector<16x128xf32>,
      %cst_117 = arith.constant 0.000000e+00 : f32
      %339 = vector.broadcast %cst_117 : f32 to vector<16x128xf32>
      %c0_118 = arith.constant 0 : index
      %c0_119 = arith.constant 0 : index
      %340 = vector.load %arg9[%c0_118, %c0_119] : memref<16x128xf32, #tpu.memory_space<vmem>>, vector<16x128xf32>
      tpu.vector_store %arg9[%c0_118, %c0_119], %339 {strides = array<i32>} : memref<16x128xf32, #tpu.memory_space<vmem>>, vector<16x128xf32>,
      %cst_120 = arith.constant 0.000000e+00 : f32
      %341 = vector.broadcast %cst_120 : f32 to vector<16x128xf32>
      %c0_121 = arith.constant 0 : index
      %c0_122 = arith.constant 0 : index
      %342 = vector.load %arg10[%c0_121, %c0_122] : memref<16x128xf32, #tpu.memory_space<vmem>>, vector<16x128xf32>
      tpu.vector_store %arg10[%c0_121, %c0_122], %341 {strides = array<i32>} : memref<16x128xf32, #tpu.memory_space<vmem>>, vector<16x128xf32>,
      %c0_i32_123 = arith.constant 0 : i32
      %343 = tpu.memref_slice %arg15[%c0_i32_123] : memref<2x!tpu.dma_semaphore, #tpu.memory_space<semaphore_mem>> -> memref<1x!tpu.dma_semaphore, #tpu.memory_space<semaphore_mem>>
      %344 = tpu.memref_squeeze %343 : memref<1x!tpu.dma_semaphore, #tpu.memory_space<semaphore_mem>> -> memref<!tpu.dma_semaphore, #tpu.memory_space<semaphore_mem>>
      tpu.wait_dma2 semaphore(%344 : memref<!tpu.dma_semaphore, #tpu.memory_space<semaphore_mem>>) src(%arg3 : memref<2x16x512xbf16, #tpu.memory_space<any>>) dst(%arg13 : memref<2x16x512xbf16, #tpu.memory_space<vmem>>)
      %c1_i32_124 = arith.constant 1 : i32
      %345 = tpu.memref_slice %arg15[%c1_i32_124] : memref<2x!tpu.dma_semaphore, #tpu.memory_space<semaphore_mem>> -> memref<1x!tpu.dma_semaphore, #tpu.memory_space<semaphore_mem>>
      %346 = tpu.memref_squeeze %345 : memref<1x!tpu.dma_semaphore, #tpu.memory_space<semaphore_mem>> -> memref<!tpu.dma_semaphore, #tpu.memory_space<semaphore_mem>>
      tpu.wait_dma2 semaphore(%346 : memref<!tpu.dma_semaphore, #tpu.memory_space<semaphore_mem>>) src(%arg4 : memref<2x128x512xbf16, #tpu.memory_space<any>>) dst(%arg14 : memref<2x128x512xbf16, #tpu.memory_space<vmem>>)
    } else {
    }
    %c0 = arith.constant 0 : index
    %c0_1 = arith.constant 0 : index
    %c0_2 = arith.constant 0 : index
    %3 = vector.load %arg1[%c0, %c0_1, %c0_2] : memref<4x16x16xbf16, #tpu.memory_space<vmem>>, vector<4x16x16xbf16>
    %4 = vector.shape_cast %3 : vector<4x16x16xbf16> to vector<64x16xbf16>
    %c0_3 = arith.constant 0 : index
    %c0_4 = arith.constant 0 : index
    %c0_5 = arith.constant 0 : index
    %5 = vector.load %arg2[%c0_3, %c0_4, %c0_5] : memref<4x16x16xbf16, #tpu.memory_space<vmem>>, vector<4x16x16xbf16>
    %6 = vector.shape_cast %5 : vector<4x16x16xbf16> to vector<64x16xbf16>
    %c0_6 = arith.constant 0 : index
    %c0_7 = arith.constant 0 : index
    %c0_8 = arith.constant 0 : index
    %7 = vector.load %arg13[%c0_6, %c0_7, %c0_8] : memref<2x16x512xbf16, #tpu.memory_space<vmem>>, vector<1x16x512xbf16>
    %8 = vector.shape_cast %7 : vector<1x16x512xbf16> to vector<16x512xbf16>
    %cst = arith.constant dense<0.000000e+00> : vector<64x512xf32>
    %9 = tpu.matmul %4, %8, %cst {dimension_numbers = #tpu.dot_dimension_numbers<[1], [0], [0], [1], [0, 0, 1, 1], [], []>} : vector<64x16xbf16>, vector<16x512xbf16>, vector<64x512xf32> -> vector<64x512xf32>
    %10 = vector.shape_cast %9 : vector<64x512xf32> to vector<4x16x512xf32>
    %11 = arith.truncf %10 : vector<4x16x512xf32> to vector<4x16x512xbf16>
    %c0_9 = arith.constant 0 : index
    %c0_10 = arith.constant 0 : index
    %c0_11 = arith.constant 0 : index
    %12 = vector.load %arg11[%c0_9, %c0_10, %c0_11] : memref<4x16x512xbf16, #tpu.memory_space<vmem>>, vector<4x16x512xbf16>
    tpu.vector_store %arg11[%c0_9, %c0_10, %c0_11], %11 {strides = array<i32>} : memref<4x16x512xbf16, #tpu.memory_space<vmem>>, vector<4x16x512xbf16>,
    %c1 = arith.constant 1 : index
    %c0_12 = arith.constant 0 : index
    %c0_13 = arith.constant 0 : index
    %13 = vector.load %arg13[%c1, %c0_12, %c0_13] : memref<2x16x512xbf16, #tpu.memory_space<vmem>>, vector<1x16x512xbf16>
    %14 = vector.shape_cast %13 : vector<1x16x512xbf16> to vector<16x512xbf16>
    %cst_14 = arith.constant dense<0.000000e+00> : vector<64x512xf32>
    %15 = tpu.matmul %6, %14, %cst_14 {dimension_numbers = #tpu.dot_dimension_numbers<[1], [0], [0], [1], [0, 0, 1, 1], [], []>} : vector<64x16xbf16>, vector<16x512xbf16>, vector<64x512xf32> -> vector<64x512xf32>
    %16 = vector.shape_cast %15 : vector<64x512xf32> to vector<4x16x512xf32>
    %17 = arith.truncf %16 : vector<4x16x512xf32> to vector<4x16x512xbf16>
    %c0_15 = arith.constant 0 : index
    %c0_16 = arith.constant 0 : index
    %c0_17 = arith.constant 0 : index
    %18 = vector.load %arg12[%c0_15, %c0_16, %c0_17] : memref<4x16x512xbf16, #tpu.memory_space<vmem>>, vector<4x16x512xbf16>
    tpu.vector_store %arg12[%c0_15, %c0_16, %c0_17], %17 {strides = array<i32>} : memref<4x16x512xbf16, #tpu.memory_space<vmem>>, vector<4x16x512xbf16>,
    %c0_18 = arith.constant 0 : index
    %c0_19 = arith.constant 0 : index
    %c0_20 = arith.constant 0 : index
    %19 = vector.load %arg14[%c0_18, %c0_19, %c0_20] : memref<2x128x512xbf16, #tpu.memory_space<vmem>>, vector<1x128x512xbf16>
    %20 = vector.shape_cast %19 : vector<1x128x512xbf16> to vector<128x512xbf16>
    %c1_21 = arith.constant 1 : index
    %c0_22 = arith.constant 0 : index
    %c0_23 = arith.constant 0 : index
    %21 = vector.load %arg14[%c1_21, %c0_22, %c0_23] : memref<2x128x512xbf16, #tpu.memory_space<vmem>>, vector<1x128x512xbf16>
    %22 = vector.shape_cast %21 : vector<1x128x512xbf16> to vector<128x512xbf16>
    %c0_24 = arith.constant 0 : index
    %c0_25 = arith.constant 0 : index
    %23 = vector.load %arg7[%c0_24, %c0_25] : memref<16x128xf32, #tpu.memory_space<vmem>>, vector<16x128xf32>
    %c0_26 = arith.constant 0 : index
    %c0_27 = arith.constant 0 : index
    %24 = vector.load %arg8[%c0_26, %c0_27] : memref<16x128xf32, #tpu.memory_space<vmem>>, vector<16x128xf32>
    %c0_28 = arith.constant 0 : index
    %c0_29 = arith.constant 0 : index
    %25 = vector.load %arg9[%c0_28, %c0_29] : memref<16x128xf32, #tpu.memory_space<vmem>>, vector<16x128xf32>
    %c0_30 = arith.constant 0 : index
    %c0_31 = arith.constant 0 : index
    %26 = vector.load %arg10[%c0_30, %c0_31] : memref<16x128xf32, #tpu.memory_space<vmem>>, vector<16x128xf32>
    %c0_i32_32 = arith.constant 0 : i32
    %27 = arith.index_cast %c0_i32_32 : i32 to index
    %c0_33 = arith.constant 0 : index
    %c0_34 = arith.constant 0 : index
    %28 = vector.load %arg11[%27, %c0_33, %c0_34] : memref<4x16x512xbf16, #tpu.memory_space<vmem>>, vector<1x16x512xbf16>
    %29 = vector.shape_cast %28 : vector<1x16x512xbf16> to vector<16x512xbf16>
    %30 = arith.extf %29 : vector<16x512xbf16> to vector<16x512xf32>
    %31 = arith.truncf %23 : vector<16x128xf32> to vector<16x128xbf16>
    %cst_35 = arith.constant dense<0.000000e+00> : vector<16x512xf32>
    %32 = tpu.matmul %31, %20, %cst_35 {dimension_numbers = #tpu.dot_dimension_numbers<[1], [0], [0], [1], [0, 0, 1, 1], [], []>} : vector<16x128xbf16>, vector<128x512xbf16>, vector<16x512xf32> -> vector<16x512xf32>
    %33 = arith.addf %30, %32 : vector<16x512xf32>
    %34 = vector.extract_strided_slice %33 {offsets = [0, 0], sizes = [16, 128], strides = [1, 1]} : vector<16x512xf32> to vector<16x128xf32>
    %35 = arith.negf %34 : vector<16x128xf32>
    %36 = math.exp %35 : vector<16x128xf32>
    %cst_36 = arith.constant 1.000000e+00 : f32
    %37 = vector.broadcast %cst_36 : f32 to vector<16x128xf32>
    %38 = arith.addf %37, %36 : vector<16x128xf32>
    %39 = arith.divf %37, %38 : vector<16x128xf32>
    %40 = vector.extract_strided_slice %33 {offsets = [0, 128], sizes = [16, 128], strides = [1, 1]} : vector<16x512xf32> to vector<16x128xf32>
    %41 = arith.negf %40 : vector<16x128xf32>
    %42 = math.exp %41 : vector<16x128xf32>
    %cst_37 = arith.constant 1.000000e+00 : f32
    %43 = vector.broadcast %cst_37 : f32 to vector<16x128xf32>
    %44 = arith.addf %43, %42 : vector<16x128xf32>
    %45 = arith.divf %43, %44 : vector<16x128xf32>
    %46 = vector.extract_strided_slice %33 {offsets = [0, 256], sizes = [16, 128], strides = [1, 1]} : vector<16x512xf32> to vector<16x128xf32>
    %47 = math.tanh %46 : vector<16x128xf32>
    %48 = vector.extract_strided_slice %33 {offsets = [0, 384], sizes = [16, 128], strides = [1, 1]} : vector<16x512xf32> to vector<16x128xf32>
    %49 = arith.negf %48 : vector<16x128xf32>
    %50 = math.exp %49 : vector<16x128xf32>
    %cst_38 = arith.constant 1.000000e+00 : f32
    %51 = vector.broadcast %cst_38 : f32 to vector<16x128xf32>
    %52 = arith.addf %51, %50 : vector<16x128xf32>
    %53 = arith.divf %51, %52 : vector<16x128xf32>
    %54 = arith.mulf %45, %24 : vector<16x128xf32>
    %55 = arith.mulf %39, %47 : vector<16x128xf32>
    %56 = arith.addf %54, %55 : vector<16x128xf32>
    %57 = math.tanh %56 : vector<16x128xf32>
    %58 = arith.mulf %53, %57 : vector<16x128xf32>
    %59 = arith.truncf %58 : vector<16x128xf32> to vector<16x128xbf16>
    %60 = arith.index_cast %c0_i32_32 : i32 to index
    %c0_39 = arith.constant 0 : index
    %c0_40 = arith.constant 0 : index
    %61 = vector.load %arg5[%60, %c0_39, %c0_40] : memref<4x16x128xbf16, #tpu.memory_space<vmem>>, vector<1x16x128xbf16>
    %62 = vector.shape_cast %61 : vector<1x16x128xbf16> to vector<16x128xbf16>
    %63 = vector.shape_cast %59 : vector<16x128xbf16> to vector<1x16x128xbf16>
    tpu.vector_store %arg5[%60, %c0_39, %c0_40], %63 {strides = array<i32>} : memref<4x16x128xbf16, #tpu.memory_space<vmem>>, vector<1x16x128xbf16>,
    %c3_i32 = arith.constant 3 : i32
    %64 = arith.subi %c3_i32, %c0_i32_32 : i32
    %65 = arith.index_cast %64 : i32 to index
    %c0_41 = arith.constant 0 : index
    %c0_42 = arith.constant 0 : index
    %66 = vector.load %arg12[%65, %c0_41, %c0_42] : memref<4x16x512xbf16, #tpu.memory_space<vmem>>, vector<1x16x512xbf16>
    %67 = vector.shape_cast %66 : vector<1x16x512xbf16> to vector<16x512xbf16>
    %68 = arith.extf %67 : vector<16x512xbf16> to vector<16x512xf32>
    %69 = arith.truncf %25 : vector<16x128xf32> to vector<16x128xbf16>
    %cst_43 = arith.constant dense<0.000000e+00> : vector<16x512xf32>
    %70 = tpu.matmul %69, %22, %cst_43 {dimension_numbers = #tpu.dot_dimension_numbers<[1], [0], [0], [1], [0, 0, 1, 1], [], []>} : vector<16x128xbf16>, vector<128x512xbf16>, vector<16x512xf32> -> vector<16x512xf32>
    %71 = arith.addf %68, %70 : vector<16x512xf32>
    %72 = vector.extract_strided_slice %71 {offsets = [0, 0], sizes = [16, 128], strides = [1, 1]} : vector<16x512xf32> to vector<16x128xf32>
    %73 = arith.negf %72 : vector<16x128xf32>
    %74 = math.exp %73 : vector<16x128xf32>
    %cst_44 = arith.constant 1.000000e+00 : f32
    %75 = vector.broadcast %cst_44 : f32 to vector<16x128xf32>
    %76 = arith.addf %75, %74 : vector<16x128xf32>
    %77 = arith.divf %75, %76 : vector<16x128xf32>
    %78 = vector.extract_strided_slice %71 {offsets = [0, 128], sizes = [16, 128], strides = [1, 1]} : vector<16x512xf32> to vector<16x128xf32>
    %79 = arith.negf %78 : vector<16x128xf32>
    %80 = math.exp %79 : vector<16x128xf32>
    %cst_45 = arith.constant 1.000000e+00 : f32
    %81 = vector.broadcast %cst_45 : f32 to vector<16x128xf32>
    %82 = arith.addf %81, %80 : vector<16x128xf32>
    %83 = arith.divf %81, %82 : vector<16x128xf32>
    %84 = vector.extract_strided_slice %71 {offsets = [0, 256], sizes = [16, 128], strides = [1, 1]} : vector<16x512xf32> to vector<16x128xf32>
    %85 = math.tanh %84 : vector<16x128xf32>
    %86 = vector.extract_strided_slice %71 {offsets = [0, 384], sizes = [16, 128], strides = [1, 1]} : vector<16x512xf32> to vector<16x128xf32>
    %87 = arith.negf %86 : vector<16x128xf32>
    %88 = math.exp %87 : vector<16x128xf32>
    %cst_46 = arith.constant 1.000000e+00 : f32
    %89 = vector.broadcast %cst_46 : f32 to vector<16x128xf32>
    %90 = arith.addf %89, %88 : vector<16x128xf32>
    %91 = arith.divf %89, %90 : vector<16x128xf32>
    %92 = arith.mulf %83, %26 : vector<16x128xf32>
    %93 = arith.mulf %77, %85 : vector<16x128xf32>
    %94 = arith.addf %92, %93 : vector<16x128xf32>
    %95 = math.tanh %94 : vector<16x128xf32>
    %96 = arith.mulf %91, %95 : vector<16x128xf32>
    %97 = arith.truncf %96 : vector<16x128xf32> to vector<16x128xbf16>
    %98 = arith.index_cast %64 : i32 to index
    %c0_47 = arith.constant 0 : index
    %c0_48 = arith.constant 0 : index
    %99 = vector.load %arg6[%98, %c0_47, %c0_48] : memref<4x16x128xbf16, #tpu.memory_space<vmem>>, vector<1x16x128xbf16>
    %100 = vector.shape_cast %99 : vector<1x16x128xbf16> to vector<16x128xbf16>
    %101 = vector.shape_cast %97 : vector<16x128xbf16> to vector<1x16x128xbf16>
    tpu.vector_store %arg6[%98, %c0_47, %c0_48], %101 {strides = array<i32>} : memref<4x16x128xbf16, #tpu.memory_space<vmem>>, vector<1x16x128xbf16>,
    %c1_i32 = arith.constant 1 : i32
    %102 = arith.index_cast %c1_i32 : i32 to index
    %c0_49 = arith.constant 0 : index
    %c0_50 = arith.constant 0 : index
    %103 = vector.load %arg11[%102, %c0_49, %c0_50] : memref<4x16x512xbf16, #tpu.memory_space<vmem>>, vector<1x16x512xbf16>
    %104 = vector.shape_cast %103 : vector<1x16x512xbf16> to vector<16x512xbf16>
    %105 = arith.extf %104 : vector<16x512xbf16> to vector<16x512xf32>
    %106 = arith.truncf %58 : vector<16x128xf32> to vector<16x128xbf16>
    %cst_51 = arith.constant dense<0.000000e+00> : vector<16x512xf32>
    %107 = tpu.matmul %106, %20, %cst_51 {dimension_numbers = #tpu.dot_dimension_numbers<[1], [0], [0], [1], [0, 0, 1, 1], [], []>} : vector<16x128xbf16>, vector<128x512xbf16>, vector<16x512xf32> -> vector<16x512xf32>
    %108 = arith.addf %105, %107 : vector<16x512xf32>
    %109 = vector.extract_strided_slice %108 {offsets = [0, 0], sizes = [16, 128], strides = [1, 1]} : vector<16x512xf32> to vector<16x128xf32>
    %110 = arith.negf %109 : vector<16x128xf32>
    %111 = math.exp %110 : vector<16x128xf32>
    %cst_52 = arith.constant 1.000000e+00 : f32
    %112 = vector.broadcast %cst_52 : f32 to vector<16x128xf32>
    %113 = arith.addf %112, %111 : vector<16x128xf32>
    %114 = arith.divf %112, %113 : vector<16x128xf32>
    %115 = vector.extract_strided_slice %108 {offsets = [0, 128], sizes = [16, 128], strides = [1, 1]} : vector<16x512xf32> to vector<16x128xf32>
    %116 = arith.negf %115 : vector<16x128xf32>
    %117 = math.exp %116 : vector<16x128xf32>
    %cst_53 = arith.constant 1.000000e+00 : f32
    %118 = vector.broadcast %cst_53 : f32 to vector<16x128xf32>
    %119 = arith.addf %118, %117 : vector<16x128xf32>
    %120 = arith.divf %118, %119 : vector<16x128xf32>
    %121 = vector.extract_strided_slice %108 {offsets = [0, 256], sizes = [16, 128], strides = [1, 1]} : vector<16x512xf32> to vector<16x128xf32>
    %122 = math.tanh %121 : vector<16x128xf32>
    %123 = vector.extract_strided_slice %108 {offsets = [0, 384], sizes = [16, 128], strides = [1, 1]} : vector<16x512xf32> to vector<16x128xf32>
    %124 = arith.negf %123 : vector<16x128xf32>
    %125 = math.exp %124 : vector<16x128xf32>
    %cst_54 = arith.constant 1.000000e+00 : f32
    %126 = vector.broadcast %cst_54 : f32 to vector<16x128xf32>
    %127 = arith.addf %126, %125 : vector<16x128xf32>
    %128 = arith.divf %126, %127 : vector<16x128xf32>
    %129 = arith.mulf %120, %56 : vector<16x128xf32>
    %130 = arith.mulf %114, %122 : vector<16x128xf32>
    %131 = arith.addf %129, %130 : vector<16x128xf32>
    %132 = math.tanh %131 : vector<16x128xf32>
    %133 = arith.mulf %128, %132 : vector<16x128xf32>
    %134 = arith.truncf %133 : vector<16x128xf32> to vector<16x128xbf16>
    %135 = arith.index_cast %c1_i32 : i32 to index
    %c0_55 = arith.constant 0 : index
    %c0_56 = arith.constant 0 : index
    %136 = vector.load %arg5[%135, %c0_55, %c0_56] : memref<4x16x128xbf16, #tpu.memory_space<vmem>>, vector<1x16x128xbf16>
    %137 = vector.shape_cast %136 : vector<1x16x128xbf16> to vector<16x128xbf16>
    %138 = vector.shape_cast %134 : vector<16x128xbf16> to vector<1x16x128xbf16>
    tpu.vector_store %arg5[%135, %c0_55, %c0_56], %138 {strides = array<i32>} : memref<4x16x128xbf16, #tpu.memory_space<vmem>>, vector<1x16x128xbf16>,
    %c3_i32_57 = arith.constant 3 : i32
    %139 = arith.subi %c3_i32_57, %c1_i32 : i32
    %140 = arith.index_cast %139 : i32 to index
    %c0_58 = arith.constant 0 : index
    %c0_59 = arith.constant 0 : index
    %141 = vector.load %arg12[%140, %c0_58, %c0_59] : memref<4x16x512xbf16, #tpu.memory_space<vmem>>, vector<1x16x512xbf16>
    %142 = vector.shape_cast %141 : vector<1x16x512xbf16> to vector<16x512xbf16>
    %143 = arith.extf %142 : vector<16x512xbf16> to vector<16x512xf32>
    %144 = arith.truncf %96 : vector<16x128xf32> to vector<16x128xbf16>
    %cst_60 = arith.constant dense<0.000000e+00> : vector<16x512xf32>
    %145 = tpu.matmul %144, %22, %cst_60 {dimension_numbers = #tpu.dot_dimension_numbers<[1], [0], [0], [1], [0, 0, 1, 1], [], []>} : vector<16x128xbf16>, vector<128x512xbf16>, vector<16x512xf32> -> vector<16x512xf32>
    %146 = arith.addf %143, %145 : vector<16x512xf32>
    %147 = vector.extract_strided_slice %146 {offsets = [0, 0], sizes = [16, 128], strides = [1, 1]} : vector<16x512xf32> to vector<16x128xf32>
    %148 = arith.negf %147 : vector<16x128xf32>
    %149 = math.exp %148 : vector<16x128xf32>
    %cst_61 = arith.constant 1.000000e+00 : f32
    %150 = vector.broadcast %cst_61 : f32 to vector<16x128xf32>
    %151 = arith.addf %150, %149 : vector<16x128xf32>
    %152 = arith.divf %150, %151 : vector<16x128xf32>
    %153 = vector.extract_strided_slice %146 {offsets = [0, 128], sizes = [16, 128], strides = [1, 1]} : vector<16x512xf32> to vector<16x128xf32>
    %154 = arith.negf %153 : vector<16x128xf32>
    %155 = math.exp %154 : vector<16x128xf32>
    %cst_62 = arith.constant 1.000000e+00 : f32
    %156 = vector.broadcast %cst_62 : f32 to vector<16x128xf32>
    %157 = arith.addf %156, %155 : vector<16x128xf32>
    %158 = arith.divf %156, %157 : vector<16x128xf32>
    %159 = vector.extract_strided_slice %146 {offsets = [0, 256], sizes = [16, 128], strides = [1, 1]} : vector<16x512xf32> to vector<16x128xf32>
    %160 = math.tanh %159 : vector<16x128xf32>
    %161 = vector.extract_strided_slice %146 {offsets = [0, 384], sizes = [16, 128], strides = [1, 1]} : vector<16x512xf32> to vector<16x128xf32>
    %162 = arith.negf %161 : vector<16x128xf32>
    %163 = math.exp %162 : vector<16x128xf32>
    %cst_63 = arith.constant 1.000000e+00 : f32
    %164 = vector.broadcast %cst_63 : f32 to vector<16x128xf32>
    %165 = arith.addf %164, %163 : vector<16x128xf32>
    %166 = arith.divf %164, %165 : vector<16x128xf32>
    %167 = arith.mulf %158, %94 : vector<16x128xf32>
    %168 = arith.mulf %152, %160 : vector<16x128xf32>
    %169 = arith.addf %167, %168 : vector<16x128xf32>
    %170 = math.tanh %169 : vector<16x128xf32>
    %171 = arith.mulf %166, %170 : vector<16x128xf32>
    %172 = arith.truncf %171 : vector<16x128xf32> to vector<16x128xbf16>
    %173 = arith.index_cast %139 : i32 to index
    %c0_64 = arith.constant 0 : index
    %c0_65 = arith.constant 0 : index
    %174 = vector.load %arg6[%173, %c0_64, %c0_65] : memref<4x16x128xbf16, #tpu.memory_space<vmem>>, vector<1x16x128xbf16>
    %175 = vector.shape_cast %174 : vector<1x16x128xbf16> to vector<16x128xbf16>
    %176 = vector.shape_cast %172 : vector<16x128xbf16> to vector<1x16x128xbf16>
    tpu.vector_store %arg6[%173, %c0_64, %c0_65], %176 {strides = array<i32>} : memref<4x16x128xbf16, #tpu.memory_space<vmem>>, vector<1x16x128xbf16>,
    %c2_i32 = arith.constant 2 : i32
    %177 = arith.index_cast %c2_i32 : i32 to index
    %c0_66 = arith.constant 0 : index
    %c0_67 = arith.constant 0 : index
    %178 = vector.load %arg11[%177, %c0_66, %c0_67] : memref<4x16x512xbf16, #tpu.memory_space<vmem>>, vector<1x16x512xbf16>
    %179 = vector.shape_cast %178 : vector<1x16x512xbf16> to vector<16x512xbf16>
    %180 = arith.extf %179 : vector<16x512xbf16> to vector<16x512xf32>
    %181 = arith.truncf %133 : vector<16x128xf32> to vector<16x128xbf16>
    %cst_68 = arith.constant dense<0.000000e+00> : vector<16x512xf32>
    %182 = tpu.matmul %181, %20, %cst_68 {dimension_numbers = #tpu.dot_dimension_numbers<[1], [0], [0], [1], [0, 0, 1, 1], [], []>} : vector<16x128xbf16>, vector<128x512xbf16>, vector<16x512xf32> -> vector<16x512xf32>
    %183 = arith.addf %180, %182 : vector<16x512xf32>
    %184 = vector.extract_strided_slice %183 {offsets = [0, 0], sizes = [16, 128], strides = [1, 1]} : vector<16x512xf32> to vector<16x128xf32>
    %185 = arith.negf %184 : vector<16x128xf32>
    %186 = math.exp %185 : vector<16x128xf32>
    %cst_69 = arith.constant 1.000000e+00 : f32
    %187 = vector.broadcast %cst_69 : f32 to vector<16x128xf32>
    %188 = arith.addf %187, %186 : vector<16x128xf32>
    %189 = arith.divf %187, %188 : vector<16x128xf32>
    %190 = vector.extract_strided_slice %183 {offsets = [0, 128], sizes = [16, 128], strides = [1, 1]} : vector<16x512xf32> to vector<16x128xf32>
    %191 = arith.negf %190 : vector<16x128xf32>
    %192 = math.exp %191 : vector<16x128xf32>
    %cst_70 = arith.constant 1.000000e+00 : f32
    %193 = vector.broadcast %cst_70 : f32 to vector<16x128xf32>
    %194 = arith.addf %193, %192 : vector<16x128xf32>
    %195 = arith.divf %193, %194 : vector<16x128xf32>
    %196 = vector.extract_strided_slice %183 {offsets = [0, 256], sizes = [16, 128], strides = [1, 1]} : vector<16x512xf32> to vector<16x128xf32>
    %197 = math.tanh %196 : vector<16x128xf32>
    %198 = vector.extract_strided_slice %183 {offsets = [0, 384], sizes = [16, 128], strides = [1, 1]} : vector<16x512xf32> to vector<16x128xf32>
    %199 = arith.negf %198 : vector<16x128xf32>
    %200 = math.exp %199 : vector<16x128xf32>
    %cst_71 = arith.constant 1.000000e+00 : f32
    %201 = vector.broadcast %cst_71 : f32 to vector<16x128xf32>
    %202 = arith.addf %201, %200 : vector<16x128xf32>
    %203 = arith.divf %201, %202 : vector<16x128xf32>
    %204 = arith.mulf %195, %131 : vector<16x128xf32>
    %205 = arith.mulf %189, %197 : vector<16x128xf32>
    %206 = arith.addf %204, %205 : vector<16x128xf32>
    %207 = math.tanh %206 : vector<16x128xf32>
    %208 = arith.mulf %203, %207 : vector<16x128xf32>
    %209 = arith.truncf %208 : vector<16x128xf32> to vector<16x128xbf16>
    %210 = arith.index_cast %c2_i32 : i32 to index
    %c0_72 = arith.constant 0 : index
    %c0_73 = arith.constant 0 : index
    %211 = vector.load %arg5[%210, %c0_72, %c0_73] : memref<4x16x128xbf16, #tpu.memory_space<vmem>>, vector<1x16x128xbf16>
    %212 = vector.shape_cast %211 : vector<1x16x128xbf16> to vector<16x128xbf16>
    %213 = vector.shape_cast %209 : vector<16x128xbf16> to vector<1x16x128xbf16>
    tpu.vector_store %arg5[%210, %c0_72, %c0_73], %213 {strides = array<i32>} : memref<4x16x128xbf16, #tpu.memory_space<vmem>>, vector<1x16x128xbf16>,
    %c3_i32_74 = arith.constant 3 : i32
    %214 = arith.subi %c3_i32_74, %c2_i32 : i32
    %215 = arith.index_cast %214 : i32 to index
    %c0_75 = arith.constant 0 : index
    %c0_76 = arith.constant 0 : index
    %216 = vector.load %arg12[%215, %c0_75, %c0_76] : memref<4x16x512xbf16, #tpu.memory_space<vmem>>, vector<1x16x512xbf16>
    %217 = vector.shape_cast %216 : vector<1x16x512xbf16> to vector<16x512xbf16>
    %218 = arith.extf %217 : vector<16x512xbf16> to vector<16x512xf32>
    %219 = arith.truncf %171 : vector<16x128xf32> to vector<16x128xbf16>
    %cst_77 = arith.constant dense<0.000000e+00> : vector<16x512xf32>
    %220 = tpu.matmul %219, %22, %cst_77 {dimension_numbers = #tpu.dot_dimension_numbers<[1], [0], [0], [1], [0, 0, 1, 1], [], []>} : vector<16x128xbf16>, vector<128x512xbf16>, vector<16x512xf32> -> vector<16x512xf32>
    %221 = arith.addf %218, %220 : vector<16x512xf32>
    %222 = vector.extract_strided_slice %221 {offsets = [0, 0], sizes = [16, 128], strides = [1, 1]} : vector<16x512xf32> to vector<16x128xf32>
    %223 = arith.negf %222 : vector<16x128xf32>
    %224 = math.exp %223 : vector<16x128xf32>
    %cst_78 = arith.constant 1.000000e+00 : f32
    %225 = vector.broadcast %cst_78 : f32 to vector<16x128xf32>
    %226 = arith.addf %225, %224 : vector<16x128xf32>
    %227 = arith.divf %225, %226 : vector<16x128xf32>
    %228 = vector.extract_strided_slice %221 {offsets = [0, 128], sizes = [16, 128], strides = [1, 1]} : vector<16x512xf32> to vector<16x128xf32>
    %229 = arith.negf %228 : vector<16x128xf32>
    %230 = math.exp %229 : vector<16x128xf32>
    %cst_79 = arith.constant 1.000000e+00 : f32
    %231 = vector.broadcast %cst_79 : f32 to vector<16x128xf32>
    %232 = arith.addf %231, %230 : vector<16x128xf32>
    %233 = arith.divf %231, %232 : vector<16x128xf32>
    %234 = vector.extract_strided_slice %221 {offsets = [0, 256], sizes = [16, 128], strides = [1, 1]} : vector<16x512xf32> to vector<16x128xf32>
    %235 = math.tanh %234 : vector<16x128xf32>
    %236 = vector.extract_strided_slice %221 {offsets = [0, 384], sizes = [16, 128], strides = [1, 1]} : vector<16x512xf32> to vector<16x128xf32>
    %237 = arith.negf %236 : vector<16x128xf32>
    %238 = math.exp %237 : vector<16x128xf32>
    %cst_80 = arith.constant 1.000000e+00 : f32
    %239 = vector.broadcast %cst_80 : f32 to vector<16x128xf32>
    %240 = arith.addf %239, %238 : vector<16x128xf32>
    %241 = arith.divf %239, %240 : vector<16x128xf32>
    %242 = arith.mulf %233, %169 : vector<16x128xf32>
    %243 = arith.mulf %227, %235 : vector<16x128xf32>
    %244 = arith.addf %242, %243 : vector<16x128xf32>
    %245 = math.tanh %244 : vector<16x128xf32>
    %246 = arith.mulf %241, %245 : vector<16x128xf32>
    %247 = arith.truncf %246 : vector<16x128xf32> to vector<16x128xbf16>
    %248 = arith.index_cast %214 : i32 to index
    %c0_81 = arith.constant 0 : index
    %c0_82 = arith.constant 0 : index
    %249 = vector.load %arg6[%248, %c0_81, %c0_82] : memref<4x16x128xbf16, #tpu.memory_space<vmem>>, vector<1x16x128xbf16>
    %250 = vector.shape_cast %249 : vector<1x16x128xbf16> to vector<16x128xbf16>
    %251 = vector.shape_cast %247 : vector<16x128xbf16> to vector<1x16x128xbf16>
    tpu.vector_store %arg6[%248, %c0_81, %c0_82], %251 {strides = array<i32>} : memref<4x16x128xbf16, #tpu.memory_space<vmem>>, vector<1x16x128xbf16>,
    %c3_i32_83 = arith.constant 3 : i32
    %252 = arith.index_cast %c3_i32_83 : i32 to index
    %c0_84 = arith.constant 0 : index
    %c0_85 = arith.constant 0 : index
    %253 = vector.load %arg11[%252, %c0_84, %c0_85] : memref<4x16x512xbf16, #tpu.memory_space<vmem>>, vector<1x16x512xbf16>
    %254 = vector.shape_cast %253 : vector<1x16x512xbf16> to vector<16x512xbf16>
    %255 = arith.extf %254 : vector<16x512xbf16> to vector<16x512xf32>
    %256 = arith.truncf %208 : vector<16x128xf32> to vector<16x128xbf16>
    %cst_86 = arith.constant dense<0.000000e+00> : vector<16x512xf32>
    %257 = tpu.matmul %256, %20, %cst_86 {dimension_numbers = #tpu.dot_dimension_numbers<[1], [0], [0], [1], [0, 0, 1, 1], [], []>} : vector<16x128xbf16>, vector<128x512xbf16>, vector<16x512xf32> -> vector<16x512xf32>
    %258 = arith.addf %255, %257 : vector<16x512xf32>
    %259 = vector.extract_strided_slice %258 {offsets = [0, 0], sizes = [16, 128], strides = [1, 1]} : vector<16x512xf32> to vector<16x128xf32>
    %260 = arith.negf %259 : vector<16x128xf32>
    %261 = math.exp %260 : vector<16x128xf32>
    %cst_87 = arith.constant 1.000000e+00 : f32
    %262 = vector.broadcast %cst_87 : f32 to vector<16x128xf32>
    %263 = arith.addf %262, %261 : vector<16x128xf32>
    %264 = arith.divf %262, %263 : vector<16x128xf32>
    %265 = vector.extract_strided_slice %258 {offsets = [0, 128], sizes = [16, 128], strides = [1, 1]} : vector<16x512xf32> to vector<16x128xf32>
    %266 = arith.negf %265 : vector<16x128xf32>
    %267 = math.exp %266 : vector<16x128xf32>
    %cst_88 = arith.constant 1.000000e+00 : f32
    %268 = vector.broadcast %cst_88 : f32 to vector<16x128xf32>
    %269 = arith.addf %268, %267 : vector<16x128xf32>
    %270 = arith.divf %268, %269 : vector<16x128xf32>
    %271 = vector.extract_strided_slice %258 {offsets = [0, 256], sizes = [16, 128], strides = [1, 1]} : vector<16x512xf32> to vector<16x128xf32>
    %272 = math.tanh %271 : vector<16x128xf32>
    %273 = vector.extract_strided_slice %258 {offsets = [0, 384], sizes = [16, 128], strides = [1, 1]} : vector<16x512xf32> to vector<16x128xf32>
    %274 = arith.negf %273 : vector<16x128xf32>
    %275 = math.exp %274 : vector<16x128xf32>
    %cst_89 = arith.constant 1.000000e+00 : f32
    %276 = vector.broadcast %cst_89 : f32 to vector<16x128xf32>
    %277 = arith.addf %276, %275 : vector<16x128xf32>
    %278 = arith.divf %276, %277 : vector<16x128xf32>
    %279 = arith.mulf %270, %206 : vector<16x128xf32>
    %280 = arith.mulf %264, %272 : vector<16x128xf32>
    %281 = arith.addf %279, %280 : vector<16x128xf32>
    %282 = math.tanh %281 : vector<16x128xf32>
    %283 = arith.mulf %278, %282 : vector<16x128xf32>
    %284 = arith.truncf %283 : vector<16x128xf32> to vector<16x128xbf16>
    %285 = arith.index_cast %c3_i32_83 : i32 to index
    %c0_90 = arith.constant 0 : index
    %c0_91 = arith.constant 0 : index
    %286 = vector.load %arg5[%285, %c0_90, %c0_91] : memref<4x16x128xbf16, #tpu.memory_space<vmem>>, vector<1x16x128xbf16>
    %287 = vector.shape_cast %286 : vector<1x16x128xbf16> to vector<16x128xbf16>
    %288 = vector.shape_cast %284 : vector<16x128xbf16> to vector<1x16x128xbf16>
    tpu.vector_store %arg5[%285, %c0_90, %c0_91], %288 {strides = array<i32>} : memref<4x16x128xbf16, #tpu.memory_space<vmem>>, vector<1x16x128xbf16>,
    %c3_i32_92 = arith.constant 3 : i32
    %289 = arith.subi %c3_i32_92, %c3_i32_83 : i32
    %290 = arith.index_cast %289 : i32 to index
    %c0_93 = arith.constant 0 : index
    %c0_94 = arith.constant 0 : index
    %291 = vector.load %arg12[%290, %c0_93, %c0_94] : memref<4x16x512xbf16, #tpu.memory_space<vmem>>, vector<1x16x512xbf16>
    %292 = vector.shape_cast %291 : vector<1x16x512xbf16> to vector<16x512xbf16>
    %293 = arith.extf %292 : vector<16x512xbf16> to vector<16x512xf32>
    %294 = arith.truncf %246 : vector<16x128xf32> to vector<16x128xbf16>
    %cst_95 = arith.constant dense<0.000000e+00> : vector<16x512xf32>
    %295 = tpu.matmul %294, %22, %cst_95 {dimension_numbers = #tpu.dot_dimension_numbers<[1], [0], [0], [1], [0, 0, 1, 1], [], []>} : vector<16x128xbf16>, vector<128x512xbf16>, vector<16x512xf32> -> vector<16x512xf32>
    %296 = arith.addf %293, %295 : vector<16x512xf32>
    %297 = vector.extract_strided_slice %296 {offsets = [0, 0], sizes = [16, 128], strides = [1, 1]} : vector<16x512xf32> to vector<16x128xf32>
    %298 = arith.negf %297 : vector<16x128xf32>
    %299 = math.exp %298 : vector<16x128xf32>
    %cst_96 = arith.constant 1.000000e+00 : f32
    %300 = vector.broadcast %cst_96 : f32 to vector<16x128xf32>
    %301 = arith.addf %300, %299 : vector<16x128xf32>
    %302 = arith.divf %300, %301 : vector<16x128xf32>
    %303 = vector.extract_strided_slice %296 {offsets = [0, 128], sizes = [16, 128], strides = [1, 1]} : vector<16x512xf32> to vector<16x128xf32>
    %304 = arith.negf %303 : vector<16x128xf32>
    %305 = math.exp %304 : vector<16x128xf32>
    %cst_97 = arith.constant 1.000000e+00 : f32
    %306 = vector.broadcast %cst_97 : f32 to vector<16x128xf32>
    %307 = arith.addf %306, %305 : vector<16x128xf32>
    %308 = arith.divf %306, %307 : vector<16x128xf32>
    %309 = vector.extract_strided_slice %296 {offsets = [0, 256], sizes = [16, 128], strides = [1, 1]} : vector<16x512xf32> to vector<16x128xf32>
    %310 = math.tanh %309 : vector<16x128xf32>
    %311 = vector.extract_strided_slice %296 {offsets = [0, 384], sizes = [16, 128], strides = [1, 1]} : vector<16x512xf32> to vector<16x128xf32>
    %312 = arith.negf %311 : vector<16x128xf32>
    %313 = math.exp %312 : vector<16x128xf32>
    %cst_98 = arith.constant 1.000000e+00 : f32
    %314 = vector.broadcast %cst_98 : f32 to vector<16x128xf32>
    %315 = arith.addf %314, %313 : vector<16x128xf32>
    %316 = arith.divf %314, %315 : vector<16x128xf32>
    %317 = arith.mulf %308, %244 : vector<16x128xf32>
    %318 = arith.mulf %302, %310 : vector<16x128xf32>
    %319 = arith.addf %317, %318 : vector<16x128xf32>
    %320 = math.tanh %319 : vector<16x128xf32>
    %321 = arith.mulf %316, %320 : vector<16x128xf32>
    %322 = arith.truncf %321 : vector<16x128xf32> to vector<16x128xbf16>
    %323 = arith.index_cast %289 : i32 to index
    %c0_99 = arith.constant 0 : index
    %c0_100 = arith.constant 0 : index
    %324 = vector.load %arg6[%323, %c0_99, %c0_100] : memref<4x16x128xbf16, #tpu.memory_space<vmem>>, vector<1x16x128xbf16>
    %325 = vector.shape_cast %324 : vector<1x16x128xbf16> to vector<16x128xbf16>
    %326 = vector.shape_cast %322 : vector<16x128xbf16> to vector<1x16x128xbf16>
    tpu.vector_store %arg6[%323, %c0_99, %c0_100], %326 {strides = array<i32>} : memref<4x16x128xbf16, #tpu.memory_space<vmem>>, vector<1x16x128xbf16>,
    %c4_i32 = arith.constant 4 : i32
    %c0_101 = arith.constant 0 : index
    %c0_102 = arith.constant 0 : index
    %327 = vector.load %arg7[%c0_101, %c0_102] : memref<16x128xf32, #tpu.memory_space<vmem>>, vector<16x128xf32>
    tpu.vector_store %arg7[%c0_101, %c0_102], %283 {strides = array<i32>} : memref<16x128xf32, #tpu.memory_space<vmem>>, vector<16x128xf32>,
    %c0_103 = arith.constant 0 : index
    %c0_104 = arith.constant 0 : index
    %328 = vector.load %arg8[%c0_103, %c0_104] : memref<16x128xf32, #tpu.memory_space<vmem>>, vector<16x128xf32>
    tpu.vector_store %arg8[%c0_103, %c0_104], %281 {strides = array<i32>} : memref<16x128xf32, #tpu.memory_space<vmem>>, vector<16x128xf32>,
    %c0_105 = arith.constant 0 : index
    %c0_106 = arith.constant 0 : index
    %329 = vector.load %arg9[%c0_105, %c0_106] : memref<16x128xf32, #tpu.memory_space<vmem>>, vector<16x128xf32>
    tpu.vector_store %arg9[%c0_105, %c0_106], %321 {strides = array<i32>} : memref<16x128xf32, #tpu.memory_space<vmem>>, vector<16x128xf32>,
    %c0_107 = arith.constant 0 : index
    %c0_108 = arith.constant 0 : index
    %330 = vector.load %arg10[%c0_107, %c0_108] : memref<16x128xf32, #tpu.memory_space<vmem>>, vector<16x128xf32>
    tpu.vector_store %arg10[%c0_107, %c0_108], %319 {strides = array<i32>} : memref<16x128xf32, #tpu.memory_space<vmem>>, vector<16x128xf32>,
    return
  }
  func.func @transform_0(%arg0: i32) -> (i32, i32, i32) {
    %c0_i32 = arith.constant 0 : i32
    %c0_i32_0 = arith.constant 0 : i32
    %c0_i32_1 = arith.constant 0 : i32
    return %arg0, %c0_i32, %c0_i32_0 : i32, i32, i32
  }
  func.func @transform_1(%arg0: i32) -> (i32, i32, i32) {
    %c1_i32 = arith.constant 1 : i32
    %0 = arith.subi %c1_i32, %arg0 : i32
    %c0_i32 = arith.constant 0 : i32
    %c0_i32_0 = arith.constant 0 : i32
    %c0_i32_1 = arith.constant 0 : i32
    return %0, %c0_i32, %c0_i32_0 : i32, i32, i32
  }
  func.func @transform_4(%arg0: i32) -> (i32, i32, i32) {
    %c0_i32 = arith.constant 0 : i32
    %c0_i32_0 = arith.constant 0 : i32
    %c0_i32_1 = arith.constant 0 : i32
    return %arg0, %c0_i32, %c0_i32_0 : i32, i32, i32
  }
  func.func @transform_5(%arg0: i32) -> (i32, i32, i32) {
    %c1_i32 = arith.constant 1 : i32
    %0 = arith.subi %c1_i32, %arg0 : i32
    %c0_i32 = arith.constant 0 : i32
    %c0_i32_0 = arith.constant 0 : i32
    %c0_i32_1 = arith.constant 0 : i32
    return %0, %c0_i32, %c0_i32_0 : i32, i32, i32
  }
}

</mosaic_0001>

<llo_original>
// kernel: bilstm_module_forward.3
$region0: #{bilstm_module_forward.3}
  #allocation0 [shape = 'u32[]', space=smem, size = 0x4, offset = 0x4, fixed_abs, tag = 'smem constant byte address 0x4 - core index']
  #allocation1 [shape = 'u32[72,128]{1,0:T(1,128)}', space=vmem, size = 0x9000, scoped, tag = 'internal scratch']
  %s0 = inlined_call_operand.vmem [shape: bf16[128,128], index: 0, kind: input, shape index: {}]
  %s1 = inlined_call_operand.vmem [shape: bf16[128,128], index: 1, kind: input, shape index: {}]
  %s2 = inlined_call_operand.vmem [shape: bf16[128,128], index: 2, kind: input, shape index: {}]
  %s3 = inlined_call_operand.vmem [shape: bf16[128,128], index: 3, kind: input, shape index: {}]
  %s4 = inlined_call_operand.vmem [shape: f32[1,128], index: 4, kind: input, shape index: {}]
  %s5 = inlined_call_operand.vmem [shape: f32[128,128], index: 5, kind: output, shape index: {}]
  %s6 = sld [smem:[#allocation0]]
  $region30: #{bilstm_module_forward.3} parent=0
    _
  %s8 = ssub.s32 1, %s6
  %s9 = scalar_select 0, %s8, %s6
  // Predicated region
  $region2: #{bilstm_module_forward.3} parent=0 // pred_check
    _
  $region3: #{bilstm_module_forward.3} parent=0 // pred_check_branch
    %11 = sbr.rel (0) target = $region5
  $region4: #{bilstm_module_forward.3} parent=0 // pred_region
    _
  $region5: #{bilstm_module_forward.3} parent=0 // pred_fallthru
    _
  // Predicated region
  $region6: #{bilstm_module_forward.3} parent=0 // pred_check
    _
  $region7: #{bilstm_module_forward.3} parent=0 // pred_check_branch
    %13 = sbr.rel (0) target = $region9
  $region8: #{bilstm_module_forward.3} parent=0 // pred_region
    _
  $region9: #{bilstm_module_forward.3} parent=0 // pred_fallthru
    _
  // Predicated region
  $region10: #{bilstm_module_forward.3} parent=0 // pred_check
    _
  $region11: #{bilstm_module_forward.3} parent=0 // pred_check_branch
    %15 = sbr.rel (0) target = $region13
  $region12: #{bilstm_module_forward.3} parent=0 // pred_region
    _
  $region13: #{bilstm_module_forward.3} parent=0 // pred_fallthru
    _
  // Predicated region
  $region14: #{bilstm_module_forward.3} parent=0 // pred_check
    _
  $region15: #{bilstm_module_forward.3} parent=0 // pred_check_branch
    %17 = sbr.rel (0) target = $region17
  $region16: #{bilstm_module_forward.3} parent=0 // pred_region
    _
  $region17: #{bilstm_module_forward.3} parent=0 // pred_fallthru
    _
  // Predicated region
  $region18: #{bilstm_module_forward.3} parent=0 // pred_check
    _
  $region19: #{bilstm_module_forward.3} parent=0 // pred_check_branch
    %19 = sbr.rel (0) target = $region21
  $region20: #{bilstm_module_forward.3} parent=0 // pred_region
    _
  $region21: #{bilstm_module_forward.3} parent=0 // pred_fallthru
    _
  %v20 = vld [vmem:[%s0] sm:$0xf]
  %v21 = vld [vmem:[%s0 + $0x4] sm:$0xf]
  %v22 = vld [vmem:[%s0 + $0x8] sm:$0xf]
  %v23 = vld [vmem:[%s0 + $0xc] sm:$0xf]
  %v24 = vld [vmem:[%s0 + $0x10] sm:$0xf]
  %v25 = vld [vmem:[%s0 + $0x14] sm:$0xf]
  %v26 = vld [vmem:[%s0 + $0x18] sm:$0xf]
  %v27 = vld [vmem:[%s0 + $0x1c] sm:$0xf]
  %v28 = vld [vmem:[%s0 + $0x20] sm:$0xf]
  %v29 = vld [vmem:[%s0 + $0x24] sm:$0xf]
  %v30 = vld [vmem:[%s0 + $0x28] sm:$0xf]
  %v31 = vld [vmem:[%s0 + $0x2c] sm:$0xf]
  %v32 = vld [vmem:[%s0 + $0x30] sm:$0xf]
  %v33 = vld [vmem:[%s0 + $0x34] sm:$0xf]
  %v34 = vld [vmem:[%s0 + $0x38] sm:$0xf]
  %v35 = vld [vmem:[%s0 + $0x3c] sm:$0xf]
  %v36 = vld [vmem:[%s2] sm:$0xf]
  %v37 = vld [vmem:[%s2 + $0x4] sm:$0xf]
  %v38 = vld [vmem:[%s2 + $0x8] sm:$0xf]
  %v39 = vld [vmem:[%s2 + $0xc] sm:$0xf]
  %v40 = vld [vmem:[%s2 + $0x10] sm:$0xf]
  %v41 = vld [vmem:[%s2 + $0x14] sm:$0xf]
  %v42 = vld [vmem:[%s2 + $0x18] sm:$0xf]
  %v43 = vld [vmem:[%s2 + $0x1c] sm:$0xf]
  %v44 = vld [vmem:[%s2 + $0x20] sm:$0xf]
  %v45 = vld [vmem:[%s2 + $0x24] sm:$0xf]
  %v46 = vld [vmem:[%s2 + $0x28] sm:$0xf]
  %v47 = vld [vmem:[%s2 + $0x2c] sm:$0xf]
  %v48 = vld [vmem:[%s2 + $0x30] sm:$0xf]
  %v49 = vld [vmem:[%s2 + $0x34] sm:$0xf]
  %v50 = vld [vmem:[%s2 + $0x38] sm:$0xf]
  %v51 = vld [vmem:[%s2 + $0x3c] sm:$0xf]
  %v52 = vld [vmem:[%s1] sm:$0xf]
  %v53 = vld [vmem:[%s1 + $0x4] sm:$0xf]
  %v54 = vld [vmem:[%s1 + $0x8] sm:$0xf]
  %v55 = vld [vmem:[%s1 + $0xc] sm:$0xf]
  %v56 = vld [vmem:[%s1 + $0x10] sm:$0xf]
  %v57 = vld [vmem:[%s1 + $0x14] sm:$0xf]
  %v58 = vld [vmem:[%s1 + $0x18] sm:$0xf]
  %v59 = vld [vmem:[%s1 + $0x1c] sm:$0xf]
  %v60 = vld [vmem:[%s1 + $0x20] sm:$0xf]
  %v61 = vld [vmem:[%s1 + $0x24] sm:$0xf]
  %v62 = vld [vmem:[%s1 + $0x28] sm:$0xf]
  %v63 = vld [vmem:[%s1 + $0x2c] sm:$0xf]
  %v64 = vld [vmem:[%s1 + $0x30] sm:$0xf]
  %v65 = vld [vmem:[%s1 + $0x34] sm:$0xf]
  %v66 = vld [vmem:[%s1 + $0x38] sm:$0xf]
  %v67 = vld [vmem:[%s1 + $0x3c] sm:$0xf]
  %v68 = vld [vmem:[%s3] sm:$0xf]
  %v69 = vld [vmem:[%s3 + $0x4] sm:$0xf]
  %v70 = vld [vmem:[%s3 + $0x8] sm:$0xf]
  %v71 = vld [vmem:[%s3 + $0xc] sm:$0xf]
  %v72 = vld [vmem:[%s3 + $0x10] sm:$0xf]
  %v73 = vld [vmem:[%s3 + $0x14] sm:$0xf]
  %v74 = vld [vmem:[%s3 + $0x18] sm:$0xf]
  %v75 = vld [vmem:[%s3 + $0x1c] sm:$0xf]
  %v76 = vld [vmem:[%s3 + $0x20] sm:$0xf]
  %v77 = vld [vmem:[%s3 + $0x24] sm:$0xf]
  %v78 = vld [vmem:[%s3 + $0x28] sm:$0xf]
  %v79 = vld [vmem:[%s3 + $0x2c] sm:$0xf]
  %v80 = vld [vmem:[%s3 + $0x30] sm:$0xf]
  %v81 = vld [vmem:[%s3 + $0x34] sm:$0xf]
  %v82 = vld [vmem:[%s3 + $0x38] sm:$0xf]
  %v83 = vld [vmem:[%s3 + $0x3c] sm:$0xf]
  %v100 = vunpack.c.l.b16 %v52
  %v101 = vunpack.c.l.b16 %v53
  %v102 = vunpack.c.l.b16 %v54
  %v103 = vunpack.c.l.b16 %v55
  %v104 = vunpack.c.l.b16 %v56
  %v105 = vunpack.c.l.b16 %v57
  %v106 = vunpack.c.l.b16 %v58
  %v107 = vunpack.c.l.b16 %v59
  %v108 = vunpack.c.l.b16 %v60
  %v109 = vunpack.c.l.b16 %v61
  %v110 = vunpack.c.l.b16 %v62
  %v111 = vunpack.c.l.b16 %v63
  %v112 = vunpack.c.l.b16 %v64
  %v113 = vunpack.c.l.b16 %v65
  %v114 = vunpack.c.l.b16 %v66
  %v115 = vunpack.c.l.b16 %v67
  %v116 = vpack.c.b16 %v101, %v100
  %v117 = vpack.c.b16 %v103, %v102
  %v118 = vpack.c.b16 %v105, %v104
  %v119 = vpack.c.b16 %v107, %v106
  %v120 = vpack.c.b16 %v109, %v108
  %v121 = vpack.c.b16 %v111, %v110
  %v122 = vpack.c.b16 %v113, %v112
  %v123 = vpack.c.b16 %v115, %v114
  %v148 = vunpack.c.l.b16 %v68
  %v149 = vunpack.c.l.b16 %v69
  %v150 = vunpack.c.l.b16 %v70
  %v151 = vunpack.c.l.b16 %v71
  %v152 = vunpack.c.l.b16 %v72
  %v153 = vunpack.c.l.b16 %v73
  %v154 = vunpack.c.l.b16 %v74
  %v155 = vunpack.c.l.b16 %v75
  %v156 = vunpack.c.l.b16 %v76
  %v157 = vunpack.c.l.b16 %v77
  %v158 = vunpack.c.l.b16 %v78
  %v159 = vunpack.c.l.b16 %v79
  %v160 = vunpack.c.l.b16 %v80
  %v161 = vunpack.c.l.b16 %v81
  %v162 = vunpack.c.l.b16 %v82
  %v163 = vunpack.c.l.b16 %v83
  %v164 = vpack.c.b16 %v149, %v148
  %v165 = vpack.c.b16 %v151, %v150
  %v166 = vpack.c.b16 %v153, %v152
  %v167 = vpack.c.b16 %v155, %v154
  %v168 = vpack.c.b16 %v157, %v156
  %v169 = vpack.c.b16 %v159, %v158
  %v170 = vpack.c.b16 %v161, %v160
  %v171 = vpack.c.b16 %v163, %v162
  %180 = vmatpush.bf16.msra.mxu0 %v171
  %181 = vmatpush.bf16.msra.mxu0 %v170
  %182 = vmatpush.bf16.msra.mxu0 %v169
  %183 = vmatpush.bf16.msra.mxu0 %v168
  %184 = vmatpush.bf16.msra.mxu0 %v167
  %185 = vmatpush.bf16.msra.mxu0 %v166
  %186 = vmatpush.bf16.msra.mxu0 %v165
  %187 = vmatpush.bf16.msra.mxu0 %v164
  %188 = vmatmul.bf16.gmra.mxu0 %v116
  %v189 = vpop.f32.mrf.mxu0
  %v190 = vadd.f32 0.0, %v189
  %v191 = vpop.f32.mrf.mxu0
  %v192 = vadd.f32 0.0, %v191
  %193 = vmatmul.bf16.gmra.mxu0 %v117
  %v194 = vpop.f32.mrf.mxu0
  %v195 = vadd.f32 0.0, %v194
  %v196 = vpop.f32.mrf.mxu0
  %v197 = vadd.f32 0.0, %v196
  %198 = vmatmul.bf16.gmra.mxu0 %v118
  %v199 = vpop.f32.mrf.mxu0
  %v200 = vadd.f32 0.0, %v199
  %v201 = vpop.f32.mrf.mxu0
  %v202 = vadd.f32 0.0, %v201
  %203 = vmatmul.bf16.gmra.mxu0 %v119
  %v204 = vpop.f32.mrf.mxu0
  %v205 = vadd.f32 0.0, %v204
  %v206 = vpop.f32.mrf.mxu0
  %v207 = vadd.f32 0.0, %v206
  %208 = vmatmul.bf16.gmra.mxu0 %v120
  %v209 = vpop.f32.mrf.mxu0
  %v210 = vadd.f32 0.0, %v209
  %v211 = vpop.f32.mrf.mxu0
  %v212 = vadd.f32 0.0, %v211
  %213 = vmatmul.bf16.gmra.mxu0 %v121
  %v214 = vpop.f32.mrf.mxu0
  %v215 = vadd.f32 0.0, %v214
  %v216 = vpop.f32.mrf.mxu0
  %v217 = vadd.f32 0.0, %v216
  %218 = vmatmul.bf16.gmra.mxu0 %v122
  %v219 = vpop.f32.mrf.mxu0
  %v220 = vadd.f32 0.0, %v219
  %v221 = vpop.f32.mrf.mxu0
  %v222 = vadd.f32 0.0, %v221
  %223 = vmatmul.bf16.gmra.mxu0 %v123
  %v224 = vpop.f32.mrf.mxu0
  %v225 = vadd.f32 0.0, %v224
  %v226 = vpop.f32.mrf.mxu0
  %v227 = vadd.f32 0.0, %v226
  %228 = vdwg.mxu0
  %v245 = vunpack.c.l.b16 %v20
  %v246 = vunpack.c.l.b16 %v21
  %v247 = vunpack.c.l.b16 %v22
  %v248 = vunpack.c.l.b16 %v23
  %v249 = vunpack.c.l.b16 %v24
  %v250 = vunpack.c.l.b16 %v25
  %v251 = vunpack.c.l.b16 %v26
  %v252 = vunpack.c.l.b16 %v27
  %v253 = vunpack.c.l.b16 %v28
  %v254 = vunpack.c.l.b16 %v29
  %v255 = vunpack.c.l.b16 %v30
  %v256 = vunpack.c.l.b16 %v31
  %v257 = vunpack.c.l.b16 %v32
  %v258 = vunpack.c.l.b16 %v33
  %v259 = vunpack.c.l.b16 %v34
  %v260 = vunpack.c.l.b16 %v35
  %v261 = vpack.c.b16 %v246, %v245
  %v262 = vpack.c.b16 %v248, %v247
  %v263 = vpack.c.b16 %v250, %v249
  %v264 = vpack.c.b16 %v252, %v251
  %v265 = vpack.c.b16 %v254, %v253
  %v266 = vpack.c.b16 %v256, %v255
  %v267 = vpack.c.b16 %v258, %v257
  %v268 = vpack.c.b16 %v260, %v259
  %v293 = vunpack.c.l.b16 %v36
  %v294 = vunpack.c.l.b16 %v37
  %v295 = vunpack.c.l.b16 %v38
  %v296 = vunpack.c.l.b16 %v39
  %v297 = vunpack.c.l.b16 %v40
  %v298 = vunpack.c.l.b16 %v41
  %v299 = vunpack.c.l.b16 %v42
  %v300 = vunpack.c.l.b16 %v43
  %v301 = vunpack.c.l.b16 %v44
  %v302 = vunpack.c.l.b16 %v45
  %v303 = vunpack.c.l.b16 %v46
  %v304 = vunpack.c.l.b16 %v47
  %v305 = vunpack.c.l.b16 %v48
  %v306 = vunpack.c.l.b16 %v49
  %v307 = vunpack.c.l.b16 %v50
  %v308 = vunpack.c.l.b16 %v51
  %v309 = vpack.c.b16 %v294, %v293
  %v310 = vpack.c.b16 %v296, %v295
  %v311 = vpack.c.b16 %v298, %v297
  %v312 = vpack.c.b16 %v300, %v299
  %v313 = vpack.c.b16 %v302, %v301
  %v314 = vpack.c.b16 %v304, %v303
  %v315 = vpack.c.b16 %v306, %v305
  %v316 = vpack.c.b16 %v308, %v307
  %325 = vmatpush.bf16.msra.mxu0 %v316
  %326 = vmatpush.bf16.msra.mxu0 %v315
  %327 = vmatpush.bf16.msra.mxu0 %v314
  %328 = vmatpush.bf16.msra.mxu0 %v313
  %329 = vmatpush.bf16.msra.mxu0 %v312
  %330 = vmatpush.bf16.msra.mxu0 %v311
  %331 = vmatpush.bf16.msra.mxu0 %v310
  %332 = vmatpush.bf16.msra.mxu0 %v309
  %333 = vmatmul.bf16.gmra.mxu0 %v261
  %v334 = vpop.f32.mrf.mxu0
  %v335 = vadd.f32 %v190, %v334
  %v336 = vpop.f32.mrf.mxu0
  %v337 = vadd.f32 %v192, %v336
  %338 = vmatmul.bf16.gmra.mxu0 %v262
  %v339 = vpop.f32.mrf.mxu0
  %v340 = vadd.f32 %v195, %v339
  %v341 = vpop.f32.mrf.mxu0
  %v342 = vadd.f32 %v197, %v341
  %343 = vmatmul.bf16.gmra.mxu0 %v263
  %v344 = vpop.f32.mrf.mxu0
  %v345 = vadd.f32 %v200, %v344
  %v346 = vpop.f32.mrf.mxu0
  %v347 = vadd.f32 %v202, %v346
  %348 = vmatmul.bf16.gmra.mxu0 %v264
  %v349 = vpop.f32.mrf.mxu0
  %v350 = vadd.f32 %v205, %v349
  %v351 = vpop.f32.mrf.mxu0
  %v352 = vadd.f32 %v207, %v351
  %353 = vmatmul.bf16.gmra.mxu0 %v265
  %v354 = vpop.f32.mrf.mxu0
  %v355 = vadd.f32 %v210, %v354
  %v356 = vpop.f32.mrf.mxu0
  %v357 = vadd.f32 %v212, %v356
  %358 = vmatmul.bf16.gmra.mxu0 %v266
  %v359 = vpop.f32.mrf.mxu0
  %v360 = vadd.f32 %v215, %v359
  %v361 = vpop.f32.mrf.mxu0
  %v362 = vadd.f32 %v217, %v361
  %363 = vmatmul.bf16.gmra.mxu0 %v267
  %v364 = vpop.f32.mrf.mxu0
  %v365 = vadd.f32 %v220, %v364
  %v366 = vpop.f32.mrf.mxu0
  %v367 = vadd.f32 %v222, %v366
  %368 = vmatmul.bf16.gmra.mxu0 %v268
  %v369 = vpop.f32.mrf.mxu0
  %v370 = vadd.f32 %v225, %v369
  %v371 = vpop.f32.mrf.mxu0
  %v372 = vadd.f32 %v227, %v371
  %373 = vdwg.mxu0
  %v374 = vld [vmem:[%s4] sm:$0x1]
  %v376 = vperm.slane %v374, 0
  %v378 = vadd.f32 %v335, %v376
  %v379 = vadd.f32 %v337, %v376
  %v380 = vadd.f32 %v340, %v376
  %v381 = vadd.f32 %v342, %v376
  %v382 = vadd.f32 %v345, %v376
  %v383 = vadd.f32 %v347, %v376
  %v384 = vadd.f32 %v350, %v376
  %v385 = vadd.f32 %v352, %v376
  %v386 = vadd.f32 %v355, %v376
  %v387 = vadd.f32 %v357, %v376
  %v388 = vadd.f32 %v360, %v376
  %v389 = vadd.f32 %v362, %v376
  %v390 = vadd.f32 %v365, %v376
  %v391 = vadd.f32 %v367, %v376
  %v392 = vadd.f32 %v370, %v376
  %v393 = vadd.f32 %v372, %v376
  %394 = vst [vmem:[%s5] sm:$0xff] %v378
  %395 = vst [vmem:[%s5 + $0x8] sm:$0xff] %v379
  %396 = vst [vmem:[%s5 + $0x10] sm:$0xff] %v380
  %397 = vst [vmem:[%s5 + $0x18] sm:$0xff] %v381
  %398 = vst [vmem:[%s5 + $0x20] sm:$0xff] %v382
  %399 = vst [vmem:[%s5 + $0x28] sm:$0xff] %v383
  %400 = vst [vmem:[%s5 + $0x30] sm:$0xff] %v384
  %401 = vst [vmem:[%s5 + $0x38] sm:$0xff] %v385
  %402 = vst [vmem:[%s5 + $0x40] sm:$0xff] %v386
  %403 = vst [vmem:[%s5 + $0x48] sm:$0xff] %v387
  %404 = vst [vmem:[%s5 + $0x50] sm:$0xff] %v388
  %405 = vst [vmem:[%s5 + $0x58] sm:$0xff] %v389
  %406 = vst [vmem:[%s5 + $0x60] sm:$0xff] %v390
  %407 = vst [vmem:[%s5 + $0x68] sm:$0xff] %v391
  %408 = vst [vmem:[%s5 + $0x70] sm:$0xff] %v392
  %409 = vst [vmem:[%s5 + $0x78] sm:$0xff] %v393
  // Predicated region
  $region22: #{bilstm_module_forward.3} parent=0 // pred_check
    _
  $region23: #{bilstm_module_forward.3} parent=0 // pred_check_branch
    %411 = sbr.rel (0) target = $region25
  $region24: #{bilstm_module_forward.3} parent=0 // pred_region
    _
  $region25: #{bilstm_module_forward.3} parent=0 // pred_fallthru
    _
  // Predicated region
  $region26: #{bilstm_module_forward.3} parent=0 // pred_check
    _
  $region27: #{bilstm_module_forward.3} parent=0 // pred_check_branch
    %413 = sbr.rel (0) target = $region29
  $region28: #{bilstm_module_forward.3} parent=0 // pred_region
    _
  $region29: #{bilstm_module_forward.3} parent=0 // pred_fallthru
    _

// kernel: bilstm_module_forward.2
$region0: #{bilstm_module_forward.2}
  #allocation0 [shape = 'u32[]', space=smem, size = 0x4, offset = 0x4, fixed_abs, tag = 'smem constant byte address 0x4 - core index']
  #allocation1 [shape = 'u32[72,128]{1,0:T(1,128)}', space=vmem, size = 0x9000, scoped, tag = 'internal scratch']
  #allocation2 [shape = 'f32[16,128]{1,0:T(8,128)}', space=vmem, size = 0x2000, scoped, tag = 'scratch operand']
  #allocation3 [shape = 'f32[16,128]{1,0:T(8,128)}', space=vmem, size = 0x2000, scoped, tag = 'scratch operand']
  #allocation4 [shape = 'f32[16,128]{1,0:T(8,128)}', space=vmem, size = 0x2000, scoped, tag = 'scratch operand']
  #allocation5 [shape = 'f32[16,128]{1,0:T(8,128)}', space=vmem, size = 0x2000, scoped, tag = 'scratch operand']
  #allocation6 [shape = 'bf16[4,16,512]{2,1,0:T(8,128)(2,1)}', space=vmem, size = 0x10000, scoped, tag = 'scratch operand']
  #allocation7 [shape = 'bf16[4,16,512]{2,1,0:T(8,128)(2,1)}', space=vmem, size = 0x10000, scoped, tag = 'scratch operand']
  #allocation8 [shape = 'bf16[2,16,512]{2,1,0:T(8,128)(2,1)}', space=vmem, size = 0x8000, scoped, tag = 'scratch operand']
  #allocation9 [shape = 'bf16[2,128,512]{2,1,0:T(8,128)(2,1)}', space=vmem, size = 0x40000, scoped, tag = 'scratch operand']
  #allocation10 [shape = 's32[2]{0}', space=sflag, size = 0x8, scoped, tag = 'scratch operand']
  #allocation11 [shape = 's32[]', space=sflag, size = 0x4, offset = 0, fixed_abs, tag = 'sflag constant byte address 0x0 - dummy sync flag']
  #allocation12 [shape = 's32[]', space=sflag, size = 0x4, offset = 0, fixed_abs, tag = 'sflag constant byte address 0x0 - dummy sync flag']
  %s0 = inlined_call_operand.vmem [shape: bf16[8,16,16], index: 0, kind: input, shape index: {}, may-alias: {0,1}]
  %s1 = inlined_call_operand.vmem [shape: bf16[8,16,16], index: 1, kind: input, shape index: {}, may-alias: {0,1}]
  %s2 = inlined_call_operand.vmem [shape: bf16[2,16,512], index: 2, kind: input, shape index: {}]
  %s3 = inlined_call_operand.vmem [shape: bf16[2,128,512], index: 3, kind: input, shape index: {}]
  %s4 = inlined_call_operand.vmem [shape: bf16[8,16,128], index: 4, kind: output, shape index: {0}]
  %s5 = inlined_call_operand.vmem [shape: bf16[8,16,128], index: 5, kind: output, shape index: {1}]
  %6 = xla_tuple %s4, %s5
  %s7 = sld [smem:[#allocation0]]
  $region91: #{bilstm_module_forward.2} parent=0
    _
  %s9 = ssub.s32 1, %s7
  %s10 = scalar_select 0, %s9, %s7
  loop: start=0, step=1, limit=4
  $region2: #{bilstm_module_forward.2} parent=0 // loop_pre_header
    _
  $region3: #{bilstm_module_forward.2} parent=0 // loop_header
    %s12 = sphi 0, %s16
    %p13 = scmp.ge.s32.totalorder %s12, 4
    %s22 = sphi 0, %s24
    %s25 = sphi 0, %s22
    %s26 = sphi 0, %s25
    %s42 = sphi 0, %s26
    %s50 = sphi 0, %s52
    %s53 = sphi 0, %s50
    %s54 = sphi 0, %s53
    %s70 = sphi 0, %s54
    %s76 = sphi 0, %s78
    %s79 = sphi 0, %s76
    %s80 = sphi 0, %s79
    %s96 = sphi 0, %s80
    %s104 = sphi 0, %s106
    %s107 = sphi 0, %s104
    %s108 = sphi 0, %s107
    %s124 = sphi 0, %s108
  $region4: #{bilstm_module_forward.2} parent=0 // loop_header_branch
    %15 = sbr.rel (%p13) target = $region8
  $region5: #{bilstm_module_forward.2} parent=0 // loop_body
    %s17 = ssub.s32 %s12, 1
    %s18 = ssub.s32 %s12, 2
    %s19 = sadd.s32 %s12, 1
    %s20 = ssub.s32 %s12, %s19
    %p21 = scmp.eq.s32.totalorder %s20, 0
    %s23 = sadd.s32 %s22, 1
    %s24 = scalar_select %p21, %s22, %s23
    %p27 = pneg %p21
    %p28 = scmp.eq.s32.totalorder %s12, 1
    %p29 = por %p27, %p28
    %p30 = scmp.ne.s32.totalorder %s22, %s25
    %p31 = scmp.eq.s32.totalorder %s12, 0
    %p32 = por %p30, %p31
    %p33 = scmp.ne.s32.totalorder %s22, %s25
    %p34 = scmp.eq.s32.totalorder %s17, 1
    %p35 = por %p33, %p34
    %p36 = scmp.ne.s32.totalorder %s25, %s26
    %p37 = scmp.eq.s32.totalorder %s17, 0
    %p38 = por %p36, %p37
    %p39 = scmp.ne.s32.totalorder %s25, %s26
    %p40 = scmp.eq.s32.totalorder %s18, 1
    %p41 = por %p39, %p40
    %p43 = scmp.ne.s32.totalorder %s26, %s42
    %p44 = scmp.eq.s32.totalorder %s18, 0
    %p45 = por %p43, %p44
    %s46 = ssub.s32 1, %s12
    %s47 = ssub.s32 1, %s19
    %s48 = ssub.s32 %s46, %s47
    %p49 = scmp.eq.s32.totalorder %s48, 0
    %s51 = sadd.s32 %s50, 1
    %s52 = scalar_select %p49, %s50, %s51
    %p55 = pneg %p49
    %p56 = scmp.eq.s32.totalorder %s12, 1
    %p57 = por %p55, %p56
    %p58 = scmp.ne.s32.totalorder %s50, %s53
    %p59 = scmp.eq.s32.totalorder %s12, 0
    %p60 = por %p58, %p59
    %p61 = scmp.ne.s32.totalorder %s50, %s53
    %p62 = scmp.eq.s32.totalorder %s17, 1
    %p63 = por %p61, %p62
    %p64 = scmp.ne.s32.totalorder %s53, %s54
    %p65 = scmp.eq.s32.totalorder %s17, 0
    %p66 = por %p64, %p65
    %p67 = scmp.ne.s32.totalorder %s53, %s54
    %p68 = scmp.eq.s32.totalorder %s18, 1
    %p69 = por %p67, %p68
    %p71 = scmp.ne.s32.totalorder %s54, %s70
    %p72 = scmp.eq.s32.totalorder %s18, 0
    %p73 = por %p71, %p72
    %s74 = ssub.s32 %s12, %s19
    %p75 = scmp.eq.s32.totalorder %s74, 0
    %s77 = sadd.s32 %s76, 1
    %s78 = scalar_select %p75, %s76, %s77
    %p81 = pneg %p75
    %p82 = scmp.eq.s32.totalorder %s12, 1
    %p83 = por %p81, %p82
    %p84 = scmp.ne.s32.totalorder %s76, %s79
    %p85 = scmp.eq.s32.totalorder %s12, 0
    %p86 = por %p84, %p85
    %p87 = scmp.ne.s32.totalorder %s76, %s79
    %p88 = scmp.eq.s32.totalorder %s17, 1
    %p89 = por %p87, %p88
    %p90 = scmp.ne.s32.totalorder %s79, %s80
    %p91 = scmp.eq.s32.totalorder %s17, 0
    %p92 = por %p90, %p91
    %p93 = scmp.ne.s32.totalorder %s79, %s80
    %p94 = scmp.eq.s32.totalorder %s18, 1
    %p95 = por %p93, %p94
    %p97 = scmp.ne.s32.totalorder %s80, %s96
    %p98 = scmp.eq.s32.totalorder %s18, 0
    %p99 = por %p97, %p98
    %s100 = ssub.s32 1, %s12
    %s101 = ssub.s32 1, %s19
    %s102 = ssub.s32 %s100, %s101
    %p103 = scmp.eq.s32.totalorder %s102, 0
    %s105 = sadd.s32 %s104, 1
    %s106 = scalar_select %p103, %s104, %s105
    %p109 = pneg %p103
    %p110 = scmp.eq.s32.totalorder %s12, 1
    %p111 = por %p109, %p110
    %p112 = scmp.ne.s32.totalorder %s104, %s107
    %p113 = scmp.eq.s32.totalorder %s12, 0
    %p114 = por %p112, %p113
    %p115 = scmp.ne.s32.totalorder %s104, %s107
    %p116 = scmp.eq.s32.totalorder %s17, 1
    %p117 = por %p115, %p116
    %p118 = scmp.ne.s32.totalorder %s107, %s108
    %p119 = scmp.eq.s32.totalorder %s17, 0
    %p120 = por %p118, %p119
    %p121 = scmp.ne.s32.totalorder %s107, %s108
    %p122 = scmp.eq.s32.totalorder %s18, 1
    %p123 = por %p121, %p122
    %p125 = scmp.ne.s32.totalorder %s108, %s124
    %p126 = scmp.eq.s32.totalorder %s18, 0
    %p127 = por %p125, %p126
    %p128 = scmp.le.s32.totalorder 1, %s12
    %p129 = scmp.lt.s32.totalorder %s12, 3
    %p130 = pnand %p128, %p129
    %p131 = pneg %p130
    // Predicated region
    $region9: #{bilstm_module_forward.2} parent=5 // pred_check
      _
    $region10: #{bilstm_module_forward.2} parent=5 // pred_check_branch
      %133 = sbr.rel (%p130) target = $region12
    $region11: #{bilstm_module_forward.2} parent=5 // pred_region
      %s134 = ssub.s32 %s12, 1
    $region12: #{bilstm_module_forward.2} parent=5 // pred_fallthru
      _
    %p135 = scmp.lt.s32.totalorder %s12, 2
    // Predicated region
    $region13: #{bilstm_module_forward.2} parent=5 // pred_check
      %p136 = pneg %p135
    $region14: #{bilstm_module_forward.2} parent=5 // pred_check_branch
      %138 = sbr.rel (%p136) target = $region16
    $region15: #{bilstm_module_forward.2} parent=5 // pred_region
      // Predicated region
      $region17: #{bilstm_module_forward.2} parent=15 // pred_check
        %p139 = pneg %p32
      $region18: #{bilstm_module_forward.2} parent=15 // pred_check_branch
        %141 = sbr.rel (%p139) target = $region20
      $region19: #{bilstm_module_forward.2} parent=15 // pred_region
        %s142 = smul.u32 4, %s12
        %p143 = scmp.lt.s32.totalorder %s142, 7
        %s144 = scalar_select %p143, %s142, 7
        %s145 = smul.addr %s144, 2
        %s146 = smul.addr %s145, 4
        %s147 = scalar_lea.vmem %s0, %s146
        %s148 = smul.u32 4, %s12
      $region20: #{bilstm_module_forward.2} parent=15 // pred_fallthru
        _
      // Predicated region
      $region21: #{bilstm_module_forward.2} parent=15 // pred_check
        %p149 = pneg %p60
      $region22: #{bilstm_module_forward.2} parent=15 // pred_check_branch
        %151 = sbr.rel (%p149) target = $region24
      $region23: #{bilstm_module_forward.2} parent=15 // pred_region
        %s152 = ssub.s32 1, %s12
        %s153 = smul.u32 4, %s152
        %p154 = scmp.lt.s32.totalorder %s153, 7
        %s155 = scalar_select %p154, %s153, 7
        %s156 = smul.addr %s155, 2
        %s157 = smul.addr %s156, 4
        %s158 = scalar_lea.vmem %s1, %s157
        %s159 = ssub.s32 1, %s12
        %s160 = smul.u32 4, %s159
      $region24: #{bilstm_module_forward.2} parent=15 // pred_fallthru
        _
    $region16: #{bilstm_module_forward.2} parent=5 // pred_fallthru
      _
    %p161 = scmp.le.s32.totalorder 1, %s12
    %p162 = scmp.lt.s32.totalorder %s12, 3
    %p163 = pnand %p161, %p162
    %p164 = pneg %p163
    // Predicated region
    $region25: #{bilstm_module_forward.2} parent=5 // pred_check
      _
    $region26: #{bilstm_module_forward.2} parent=5 // pred_check_branch
      %166 = sbr.rel (%p163) target = $region28
    $region27: #{bilstm_module_forward.2} parent=5 // pred_region
      %s167 = ssub.s32 %s12, 1
      %s168 = smul.u32 4, %s17
      %p169 = scmp.lt.s32.totalorder %s168, 7
      %s170 = scalar_select %p169, %s168, 7
      %s171 = smul.addr %s170, 2
      %s172 = smul.addr %s171, 4
      %s173 = scalar_lea.vmem %s0, %s172
      %p174 = pneg %p38
      %p175 = pneg %p35
      %s176 = ssub.s32 1, %s17
      %s177 = smul.u32 4, %s176
      %p178 = scmp.lt.s32.totalorder %s177, 7
      %s179 = scalar_select %p178, %s177, 7
      %s180 = smul.addr %s179, 2
      %s181 = smul.addr %s180, 4
      %s182 = scalar_lea.vmem %s1, %s181
      %p183 = pneg %p66
      %p184 = pneg %p63
      %p185 = pneg %p92
      %p186 = pneg %p89
      %s187 = smul.u32 4, %s17
      %p188 = scmp.lt.s32.totalorder %s187, 7
      %s189 = scalar_select %p188, %s187, 7
      %s190 = smul.addr %s189, 2
      %s191 = smul.addr %s190, 4
      %s192 = scalar_lea.vmem %s4, %s191
      %p193 = pneg %p120
      %p194 = pneg %p117
      %s195 = ssub.s32 1, %s17
      %s196 = smul.u32 4, %s195
      %p197 = scmp.lt.s32.totalorder %s196, 7
      %s198 = scalar_select %p197, %s196, 7
      %s199 = smul.addr %s198, 2
      %s200 = smul.addr %s199, 4
      %s201 = scalar_lea.vmem %s5, %s200
      %s202 = smul.u32 4, %s17
      %p203 = scmp.lt.s32.totalorder %s202, 7
      %s204 = scalar_select %p203, %s202, 7
      %s205 = smul.addr %s204, 2
      %s206 = smul.addr %s205, 4
      %s207 = scalar_lea.vmem %s0, %s206
      %s208 = smul.u32 4, %s17
      %s209 = ssub.s32 1, %s17
      %s210 = smul.u32 4, %s209
      %p211 = scmp.lt.s32.totalorder %s210, 7
      %s212 = scalar_select %p211, %s210, 7
      %s213 = smul.addr %s212, 2
      %s214 = smul.addr %s213, 4
      %s215 = scalar_lea.vmem %s1, %s214
      %s216 = ssub.s32 1, %s17
      %s217 = smul.u32 4, %s216
      %s218 = smul.u32 4, %s17
      %p219 = scmp.lt.s32.totalorder %s218, 7
      %s220 = scalar_select %p219, %s218, 7
      %s221 = smul.addr %s220, 2
      %s222 = smul.addr %s221, 4
      %s223 = scalar_lea.vmem %s4, %s222
      %s224 = smul.u32 4, %s17
      %s225 = ssub.s32 1, %s17
      %s226 = smul.u32 4, %s225
      %p227 = scmp.lt.s32.totalorder %s226, 7
      %s228 = scalar_select %p227, %s226, 7
      %s229 = smul.addr %s228, 2
      %s230 = smul.addr %s229, 4
      %s231 = scalar_lea.vmem %s5, %s230
      %s232 = ssub.s32 1, %s17
      %s233 = smul.u32 4, %s232
      %p235 = scmp.eq.s32.totalorder %s17, 0
      // Predicated region
      $region29: #{bilstm_module_forward.2} parent=27 // pred_check
        %p236 = pneg %p235
      $region30: #{bilstm_module_forward.2} parent=27 // pred_check_branch
        %238 = sbr.rel (%p236) target = $region32
      $region31: #{bilstm_module_forward.2} parent=27 // pred_region
        // Predicated region
        $region33: #{bilstm_module_forward.2} parent=31 // pred_check
          _
        $region34: #{bilstm_module_forward.2} parent=31 // pred_check_branch
          %240 = sbr.rel (0) target = $region36
        $region35: #{bilstm_module_forward.2} parent=31 // pred_region
          loop: start=0, step=1, limit=1
          $region37: #{bilstm_module_forward.2} parent=35 // loop_pre_header
            _
          $region38: #{bilstm_module_forward.2} parent=35 // loop_header
            %s242 = sphi 0, %s246
            %p243 = scmp.ge.s32.totalorder %s242, 1
            %s247 = sphi %s2, %s2
            %s248 = sphi [#allocation8], [#allocation8]
          $region39: #{bilstm_module_forward.2} parent=35 // loop_header_branch
            %245 = sbr.rel (%p243) target = $region43
          $region40: #{bilstm_module_forward.2} parent=35 // loop_body
            %v249 = vld [vmem:[%s247] sm:$0xff]
            %250 = vst [vmem:[%s248] sm:$0xff] %v249
            %v251 = vld [vmem:[%s247 + $0x8] sm:$0xff]
            %252 = vst [vmem:[%s248 + $0x8] sm:$0xff] %v251
            %v253 = vld [vmem:[%s247 + $0x10] sm:$0xff]
            %254 = vst [vmem:[%s248 + $0x10] sm:$0xff] %v253
            %v255 = vld [vmem:[%s247 + $0x18] sm:$0xff]
            %256 = vst [vmem:[%s248 + $0x18] sm:$0xff] %v255
            %v257 = vld [vmem:[%s247 + $0x20] sm:$0xff]
            %258 = vst [vmem:[%s248 + $0x20] sm:$0xff] %v257
            %v259 = vld [vmem:[%s247 + $0x28] sm:$0xff]
            %260 = vst [vmem:[%s248 + $0x28] sm:$0xff] %v259
            %v261 = vld [vmem:[%s247 + $0x30] sm:$0xff]
            %262 = vst [vmem:[%s248 + $0x30] sm:$0xff] %v261
            %v263 = vld [vmem:[%s247 + $0x38] sm:$0xff]
            %264 = vst [vmem:[%s248 + $0x38] sm:$0xff] %v263
          $region41: #{bilstm_module_forward.2} parent=35 // loop_footer
            %s246 = sadd.s32 1, %s242
          $region42: #{bilstm_module_forward.2} parent=35 // loop_footer_branch
            %241 = sbr.rel target = $region38
          $region43: #{bilstm_module_forward.2} parent=35 // loop_exit
            _
        $region36: #{bilstm_module_forward.2} parent=31 // pred_fallthru
          _
        // Predicated region
        $region44: #{bilstm_module_forward.2} parent=31 // pred_check
          _
        $region45: #{bilstm_module_forward.2} parent=31 // pred_check_branch
          %266 = sbr.rel target = $region47
        $region46: #{bilstm_module_forward.2} parent=31 // pred_region
          _
        $region47: #{bilstm_module_forward.2} parent=31 // pred_fallthru
          _
        // Predicated region
        $region48: #{bilstm_module_forward.2} parent=31 // pred_check
          _
        $region49: #{bilstm_module_forward.2} parent=31 // pred_check_branch
          %269 = sbr.rel (0) target = $region51
        $region50: #{bilstm_module_forward.2} parent=31 // pred_region
          %270 = vsyncadd [#allocation10], 1024
        $region51: #{bilstm_module_forward.2} parent=31 // pred_fallthru
          _
        %s271 = scalar_lea.sflag [#allocation10], 1
        // Predicated region
        $region52: #{bilstm_module_forward.2} parent=31 // pred_check
          _
        $region53: #{bilstm_module_forward.2} parent=31 // pred_check_branch
          %273 = sbr.rel (0) target = $region55
        $region54: #{bilstm_module_forward.2} parent=31 // pred_region
          loop: start=0, step=1, limit=1
          $region56: #{bilstm_module_forward.2} parent=54 // loop_pre_header
            _
          $region57: #{bilstm_module_forward.2} parent=54 // loop_header
            %s275 = sphi 0, %s279
            %p276 = scmp.ge.s32.totalorder %s275, 1
            %s280 = sphi %s3, %s3
            %s281 = sphi [#allocation9], [#allocation9]
          $region58: #{bilstm_module_forward.2} parent=54 // loop_header_branch
            %278 = sbr.rel (%p276) target = $region62
          $region59: #{bilstm_module_forward.2} parent=54 // loop_body
            %v282 = vld [vmem:[%s280] sm:$0xff]
            %283 = vst [vmem:[%s281] sm:$0xff] %v282
            %v284 = vld [vmem:[%s280 + $0x8] sm:$0xff]
            %285 = vst [vmem:[%s281 + $0x8] sm:$0xff] %v284
            %v286 = vld [vmem:[%s280 + $0x10] sm:$0xff]
            %287 = vst [vmem:[%s281 + $0x10] sm:$0xff] %v286
            %v288 = vld [vmem:[%s280 + $0x18] sm:$0xff]
            %289 = vst [vmem:[%s281 + $0x18] sm:$0xff] %v288
            %v290 = vld [vmem:[%s280 + $0x20] sm:$0xff]
            %291 = vst [vmem:[%s281 + $0x20] sm:$0xff] %v290
            %v292 = vld [vmem:[%s280 + $0x28] sm:$0xff]
            %293 = vst [vmem:[%s281 + $0x28] sm:$0xff] %v292
            %v294 = vld [vmem:[%s280 + $0x30] sm:$0xff]
            %295 = vst [vmem:[%s281 + $0x30] sm:$0xff] %v294
            %v296 = vld [vmem:[%s280 + $0x38] sm:$0xff]
            %297 = vst [vmem:[%s281 + $0x38] sm:$0xff] %v296
            %v298 = vld [vmem:[%s280 + $0x40] sm:$0xff]
            %299 = vst [vmem:[%s281 + $0x40] sm:$0xff] %v298
            %v300 = vld [vmem:[%s280 + $0x48] sm:$0xff]
            %301 = vst [vmem:[%s281 + $0x48] sm:$0xff] %v300
            %v302 = vld [vmem:[%s280 + $0x50] sm:$0xff]
            %303 = vst [vmem:[%s281 + $0x50] sm:$0xff] %v302
            %v304 = vld [vmem:[%s280 + $0x58] sm:$0xff]
            %305 = vst [vmem:[%s281 + $0x58] sm:$0xff] %v304
            %v306 = vld [vmem:[%s280 + $0x60] sm:$0xff]
            %307 = vst [vmem:[%s281 + $0x60] sm:$0xff] %v306
            %v308 = vld [vmem:[%s280 + $0x68] sm:$0xff]
            %309 = vst [vmem:[%s281 + $0x68] sm:$0xff] %v308
            %v310 = vld [vmem:[%s280 + $0x70] sm:$0xff]
            %311 = vst [vmem:[%s281 + $0x70] sm:$0xff] %v310
            %v312 = vld [vmem:[%s280 + $0x78] sm:$0xff]
            %313 = vst [vmem:[%s281 + $0x78] sm:$0xff] %v312
            %v314 = vld [vmem:[%s280 + $0x80] sm:$0xff]
            %315 = vst [vmem:[%s281 + $0x80] sm:$0xff] %v314
            %v316 = vld [vmem:[%s280 + $0x88] sm:$0xff]
            %317 = vst [vmem:[%s281 + $0x88] sm:$0xff] %v316
            %v318 = vld [vmem:[%s280 + $0x90] sm:$0xff]
            %319 = vst [vmem:[%s281 + $0x90] sm:$0xff] %v318
            %v320 = vld [vmem:[%s280 + $0x98] sm:$0xff]
            %321 = vst [vmem:[%s281 + $0x98] sm:$0xff] %v320
            %v322 = vld [vmem:[%s280 + $0xa0] sm:$0xff]
            %323 = vst [vmem:[%s281 + $0xa0] sm:$0xff] %v322
            %v324 = vld [vmem:[%s280 + $0xa8] sm:$0xff]
            %325 = vst [vmem:[%s281 + $0xa8] sm:$0xff] %v324
            %v326 = vld [vmem:[%s280 + $0xb0] sm:$0xff]
            %327 = vst [vmem:[%s281 + $0xb0] sm:$0xff] %v326
            %v328 = vld [vmem:[%s280 + $0xb8] sm:$0xff]
            %329 = vst [vmem:[%s281 + $0xb8] sm:$0xff] %v328
            %v330 = vld [vmem:[%s280 + $0xc0] sm:$0xff]
            %331 = vst [vmem:[%s281 + $0xc0] sm:$0xff] %v330
            %v332 = vld [vmem:[%s280 + $0xc8] sm:$0xff]
            %333 = vst [vmem:[%s281 + $0xc8] sm:$0xff] %v332
            %v334 = vld [vmem:[%s280 + $0xd0] sm:$0xff]
            %335 = vst [vmem:[%s281 + $0xd0] sm:$0xff] %v334
            %v336 = vld [vmem:[%s280 + $0xd8] sm:$0xff]
            %337 = vst [vmem:[%s281 + $0xd8] sm:$0xff] %v336
            %v338 = vld [vmem:[%s280 + $0xe0] sm:$0xff]
            %339 = vst [vmem:[%s281 + $0xe0] sm:$0xff] %v338
            %v340 = vld [vmem:[%s280 + $0xe8] sm:$0xff]
            %341 = vst [vmem:[%s281 + $0xe8] sm:$0xff] %v340
            %v342 = vld [vmem:[%s280 + $0xf0] sm:$0xff]
            %343 = vst [vmem:[%s281 + $0xf0] sm:$0xff] %v342
            %v344 = vld [vmem:[%s280 + $0xf8] sm:$0xff]
            %345 = vst [vmem:[%s281 + $0xf8] sm:$0xff] %v344
            %v346 = vld [vmem:[%s280 + $0x100] sm:$0xff]
            %347 = vst [vmem:[%s281 + $0x100] sm:$0xff] %v346
            %v348 = vld [vmem:[%s280 + $0x108] sm:$0xff]
            %349 = vst [vmem:[%s281 + $0x108] sm:$0xff] %v348
            %v350 = vld [vmem:[%s280 + $0x110] sm:$0xff]
            %351 = vst [vmem:[%s281 + $0x110] sm:$0xff] %v350
            %v352 = vld [vmem:[%s280 + $0x118] sm:$0xff]
            %353 = vst [vmem:[%s281 + $0x118] sm:$0xff] %v352
            %v354 = vld [vmem:[%s280 + $0x120] sm:$0xff]
            %355 = vst [vmem:[%s281 + $0x120] sm:$0xff] %v354
            %v356 = vld [vmem:[%s280 + $0x128] sm:$0xff]
            %357 = vst [vmem:[%s281 + $0x128] sm:$0xff] %v356
            %v358 = vld [vmem:[%s280 + $0x130] sm:$0xff]
            %359 = vst [vmem:[%s281 + $0x130] sm:$0xff] %v358
            %v360 = vld [vmem:[%s280 + $0x138] sm:$0xff]
            %361 = vst [vmem:[%s281 + $0x138] sm:$0xff] %v360
            %v362 = vld [vmem:[%s280 + $0x140] sm:$0xff]
            %363 = vst [vmem:[%s281 + $0x140] sm:$0xff] %v362
            %v364 = vld [vmem:[%s280 + $0x148] sm:$0xff]
            %365 = vst [vmem:[%s281 + $0x148] sm:$0xff] %v364
            %v366 = vld [vmem:[%s280 + $0x150] sm:$0xff]
            %367 = vst [vmem:[%s281 + $0x150] sm:$0xff] %v366
            %v368 = vld [vmem:[%s280 + $0x158] sm:$0xff]
            %369 = vst [vmem:[%s281 + $0x158] sm:$0xff] %v368
            %v370 = vld [vmem:[%s280 + $0x160] sm:$0xff]
            %371 = vst [vmem:[%s281 + $0x160] sm:$0xff] %v370
            %v372 = vld [vmem:[%s280 + $0x168] sm:$0xff]
            %373 = vst [vmem:[%s281 + $0x168] sm:$0xff] %v372
            %v374 = vld [vmem:[%s280 + $0x170] sm:$0xff]
            %375 = vst [vmem:[%s281 + $0x170] sm:$0xff] %v374
            %v376 = vld [vmem:[%s280 + $0x178] sm:$0xff]
            %377 = vst [vmem:[%s281 + $0x178] sm:$0xff] %v376
            %v378 = vld [vmem:[%s280 + $0x180] sm:$0xff]
            %379 = vst [vmem:[%s281 + $0x180] sm:$0xff] %v378
            %v380 = vld [vmem:[%s280 + $0x188] sm:$0xff]
            %381 = vst [vmem:[%s281 + $0x188] sm:$0xff] %v380
            %v382 = vld [vmem:[%s280 + $0x190] sm:$0xff]
            %383 = vst [vmem:[%s281 + $0x190] sm:$0xff] %v382
            %v384 = vld [vmem:[%s280 + $0x198] sm:$0xff]
            %385 = vst [vmem:[%s281 + $0x198] sm:$0xff] %v384
            %v386 = vld [vmem:[%s280 + $0x1a0] sm:$0xff]
            %387 = vst [vmem:[%s281 + $0x1a0] sm:$0xff] %v386
            %v388 = vld [vmem:[%s280 + $0x1a8] sm:$0xff]
            %389 = vst [vmem:[%s281 + $0x1a8] sm:$0xff] %v388
            %v390 = vld [vmem:[%s280 + $0x1b0] sm:$0xff]
            %391 = vst [vmem:[%s281 + $0x1b0] sm:$0xff] %v390
            %v392 = vld [vmem:[%s280 + $0x1b8] sm:$0xff]
            %393 = vst [vmem:[%s281 + $0x1b8] sm:$0xff] %v392
            %v394 = vld [vmem:[%s280 + $0x1c0] sm:$0xff]
            %395 = vst [vmem:[%s281 + $0x1c0] sm:$0xff] %v394
            %v396 = vld [vmem:[%s280 + $0x1c8] sm:$0xff]
            %397 = vst [vmem:[%s281 + $0x1c8] sm:$0xff] %v396
            %v398 = vld [vmem:[%s280 + $0x1d0] sm:$0xff]
            %399 = vst [vmem:[%s281 + $0x1d0] sm:$0xff] %v398
            %v400 = vld [vmem:[%s280 + $0x1d8] sm:$0xff]
            %401 = vst [vmem:[%s281 + $0x1d8] sm:$0xff] %v400
            %v402 = vld [vmem:[%s280 + $0x1e0] sm:$0xff]
            %403 = vst [vmem:[%s281 + $0x1e0] sm:$0xff] %v402
            %v404 = vld [vmem:[%s280 + $0x1e8] sm:$0xff]
            %405 = vst [vmem:[%s281 + $0x1e8] sm:$0xff] %v404
            %v406 = vld [vmem:[%s280 + $0x1f0] sm:$0xff]
            %407 = vst [vmem:[%s281 + $0x1f0] sm:$0xff] %v406
            %v408 = vld [vmem:[%s280 + $0x1f8] sm:$0xff]
            %409 = vst [vmem:[%s281 + $0x1f8] sm:$0xff] %v408
          $region60: #{bilstm_module_forward.2} parent=54 // loop_footer
            %s279 = sadd.s32 1, %s275
          $region61: #{bilstm_module_forward.2} parent=54 // loop_footer_branch
            %274 = sbr.rel target = $region57
          $region62: #{bilstm_module_forward.2} parent=54 // loop_exit
            _
        $region55: #{bilstm_module_forward.2} parent=31 // pred_fallthru
          _
        // Predicated region
        $region63: #{bilstm_module_forward.2} parent=31 // pred_check
          _
        $region64: #{bilstm_module_forward.2} parent=31 // pred_check_branch
          %411 = sbr.rel target = $region66
        $region65: #{bilstm_module_forward.2} parent=31 // pred_region
          _
        $region66: #{bilstm_module_forward.2} parent=31 // pred_fallthru
          _
        // Predicated region
        $region67: #{bilstm_module_forward.2} parent=31 // pred_check
          _
        $region68: #{bilstm_module_forward.2} parent=31 // pred_check_branch
          %414 = sbr.rel (0) target = $region70
        $region69: #{bilstm_module_forward.2} parent=31 // pred_region
          %415 = vsyncadd %s271, 8192
        $region70: #{bilstm_module_forward.2} parent=31 // pred_fallthru
          _
        %416 = vst [vmem:[#allocation2] sm:$0xff] 0.0
        %417 = vst [vmem:[#allocation2 + $0x8] sm:$0xff] 0.0
        %418 = vst [vmem:[#allocation3] sm:$0xff] 0.0
        %419 = vst [vmem:[#allocation3 + $0x8] sm:$0xff] 0.0
        %420 = vst [vmem:[#allocation4] sm:$0xff] 0.0
        %421 = vst [vmem:[#allocation4 + $0x8] sm:$0xff] 0.0
        %422 = vst [vmem:[#allocation5] sm:$0xff] 0.0
        %423 = vst [vmem:[#allocation5 + $0x8] sm:$0xff] 0.0
        %s424 = smul.u32 4, 2
        %s425 = smul.u32 %s424, 2
        %s426 = smul.u32 %s425, 4
        %s427 = sshll.u32 %s426, 4
        %428 = dma.done [#allocation10], %s427
        %s429 = smul.u32 %s424, 16
        %s430 = smul.u32 %s429, 4
        %s431 = sshll.u32 %s430, 4
        %432 = dma.done %s271, %s431
      $region32: #{bilstm_module_forward.2} parent=27 // pred_fallthru
        _
      %v433 = vld [vmem:[%s207] sm:$0xf]
      %v434 = vld [vmem:[%s207 + $0x4] sm:$0xf]
      %v435 = vld [vmem:[%s207 + $0x8] sm:$0xf]
      %v436 = vld [vmem:[%s207 + $0xc] sm:$0xf]
      %v437 = vld [vmem:[%s207 + $0x10] sm:$0xf]
      %v438 = vld [vmem:[%s207 + $0x14] sm:$0xf]
      %v439 = vld [vmem:[%s207 + $0x18] sm:$0xf]
      %v440 = vld [vmem:[%s207 + $0x1c] sm:$0xf]
      %v441 = vld [vmem:[%s215] sm:$0xf]
      %v442 = vld [vmem:[%s215 + $0x4] sm:$0xf]
      %v443 = vld [vmem:[%s215 + $0x8] sm:$0xf]
      %v444 = vld [vmem:[%s215 + $0xc] sm:$0xf]
      %v445 = vld [vmem:[%s215 + $0x10] sm:$0xf]
      %v446 = vld [vmem:[%s215 + $0x14] sm:$0xf]
      %v447 = vld [vmem:[%s215 + $0x18] sm:$0xf]
      %v448 = vld [vmem:[%s215 + $0x1c] sm:$0xf]
      %v449 = vld [vmem:[#allocation8] sm:$0xff]
      %v450 = vld [vmem:[#allocation8 + $0x8] sm:$0xff]
      %v451 = vld [vmem:[#allocation8 + $0x10] sm:$0xff]
      %v452 = vld [vmem:[#allocation8 + $0x18] sm:$0xff]
      %v461 = vunpack.c.l.b16 %v433
      %v462 = vunpack.c.l.b16 %v434
      %v463 = vunpack.c.l.b16 %v435
      %v464 = vunpack.c.l.b16 %v436
      %v465 = vunpack.c.l.b16 %v437
      %v466 = vunpack.c.l.b16 %v438
      %v467 = vunpack.c.l.b16 %v439
      %v468 = vunpack.c.l.b16 %v440
      %v469 = vpack.c.b16 %v462, %v461
      %v470 = vpack.c.b16 %v464, %v463
      %v471 = vpack.c.b16 %v466, %v465
      %v472 = vpack.c.b16 %v468, %v467
      %v477 = vunpack.c.l.b16 %v449
      %v478 = vunpack.c.h.b16 %v449
      %v479 = vunpack.c.l.b16 %v450
      %v480 = vunpack.c.h.b16 %v450
      %v481 = vunpack.c.l.b16 %v451
      %v482 = vunpack.c.h.b16 %v451
      %v483 = vunpack.c.l.b16 %v452
      %v484 = vunpack.c.h.b16 %v452
      %v485 = vpack.c.b16 %v481, %v477
      %v486 = vpack.c.b16 %v482, %v478
      %v487 = vpack.c.b16 %v483, %v479
      %v488 = vpack.c.b16 %v484, %v480
      %vm493 = vcmask 130048
      %v495 = vsel %vm493, %v469, 0
      %v498 = vsel %vm493, %v470, 0
      %v501 = vsel %vm493, %v471, 0
      %v504 = vsel %vm493, %v472, 0
      %506 = vmatpush.bf16.msra.mxu0 0
      %507 = vmatpush.bf16.msra.mxu0 0
      %508 = vmatpush.bf16.msra.mxu0 0
      %509 = vmatpush.bf16.msra.mxu0 0
      %510 = vmatpush.bf16.msra.mxu0 0
      %511 = vmatpush.bf16.msra.mxu0 0
      %512 = vmatpush.bf16.msra.mxu0 0
      %513 = vmatpush.bf16.msra.mxu0 %v485
      %514 = vmatmul.bf16.gmra.mxu0 %v495
      %v515 = vpop.f32.mrf.mxu0
      %v516 = vadd.f32 0.0, %v515
      %v517 = vpop.f32.mrf.mxu0
      %v518 = vadd.f32 0.0, %v517
      %519 = vmatmul.bf16.gmra.mxu0 %v498
      %v520 = vpop.f32.mrf.mxu0
      %v521 = vadd.f32 0.0, %v520
      %v522 = vpop.f32.mrf.mxu0
      %v523 = vadd.f32 0.0, %v522
      %524 = vmatmul.bf16.gmra.mxu0 %v501
      %v525 = vpop.f32.mrf.mxu0
      %v526 = vadd.f32 0.0, %v525
      %v527 = vpop.f32.mrf.mxu0
      %v528 = vadd.f32 0.0, %v527
      %529 = vmatmul.bf16.gmra.mxu0 %v504
      %v530 = vpop.f32.mrf.mxu0
      %v531 = vadd.f32 0.0, %v530
      %v532 = vpop.f32.mrf.mxu0
      %v533 = vadd.f32 0.0, %v532
      %534 = vdwg.mxu0
      %535 = vmatpush.bf16.msra.mxu0 0
      %536 = vmatpush.bf16.msra.mxu0 0
      %537 = vmatpush.bf16.msra.mxu0 0
      %538 = vmatpush.bf16.msra.mxu0 0
      %539 = vmatpush.bf16.msra.mxu0 0
      %540 = vmatpush.bf16.msra.mxu0 0
      %541 = vmatpush.bf16.msra.mxu0 0
      %542 = vmatpush.bf16.msra.mxu0 %v486
      %543 = vmatmul.bf16.gmra.mxu0 %v495
      %v544 = vpop.f32.mrf.mxu0
      %v545 = vadd.f32 0.0, %v544
      %v546 = vpop.f32.mrf.mxu0
      %v547 = vadd.f32 0.0, %v546
      %548 = vmatmul.bf16.gmra.mxu0 %v498
      %v549 = vpop.f32.mrf.mxu0
      %v550 = vadd.f32 0.0, %v549
      %v551 = vpop.f32.mrf.mxu0
      %v552 = vadd.f32 0.0, %v551
      %553 = vmatmul.bf16.gmra.mxu0 %v501
      %v554 = vpop.f32.mrf.mxu0
      %v555 = vadd.f32 0.0, %v554
      %v556 = vpop.f32.mrf.mxu0
      %v557 = vadd.f32 0.0, %v556
      %558 = vmatmul.bf16.gmra.mxu0 %v504
      %v559 = vpop.f32.mrf.mxu0
      %v560 = vadd.f32 0.0, %v559
      %v561 = vpop.f32.mrf.mxu0
      %v562 = vadd.f32 0.0, %v561
      %563 = vdwg.mxu0
      %564 = vmatpush.bf16.msra.mxu0 0
      %565 = vmatpush.bf16.msra.mxu0 0
      %566 = vmatpush.bf16.msra.mxu0 0
      %567 = vmatpush.bf16.msra.mxu0 0
      %568 = vmatpush.bf16.msra.mxu0 0
      %569 = vmatpush.bf16.msra.mxu0 0
      %570 = vmatpush.bf16.msra.mxu0 0
      %571 = vmatpush.bf16.msra.mxu0 %v487
      %572 = vmatmul.bf16.gmra.mxu0 %v495
      %v573 = vpop.f32.mrf.mxu0
      %v574 = vadd.f32 0.0, %v573
      %v575 = vpop.f32.mrf.mxu0
      %v576 = vadd.f32 0.0, %v575
      %577 = vmatmul.bf16.gmra.mxu0 %v498
      %v578 = vpop.f32.mrf.mxu0
      %v579 = vadd.f32 0.0, %v578
      %v580 = vpop.f32.mrf.mxu0
      %v581 = vadd.f32 0.0, %v580
      %582 = vmatmul.bf16.gmra.mxu0 %v501
      %v583 = vpop.f32.mrf.mxu0
      %v584 = vadd.f32 0.0, %v583
      %v585 = vpop.f32.mrf.mxu0
      %v586 = vadd.f32 0.0, %v585
      %587 = vmatmul.bf16.gmra.mxu0 %v504
      %v588 = vpop.f32.mrf.mxu0
      %v589 = vadd.f32 0.0, %v588
      %v590 = vpop.f32.mrf.mxu0
      %v591 = vadd.f32 0.0, %v590
      %592 = vdwg.mxu0
      %593 = vmatpush.bf16.msra.mxu0 0
      %594 = vmatpush.bf16.msra.mxu0 0
      %595 = vmatpush.bf16.msra.mxu0 0
      %596 = vmatpush.bf16.msra.mxu0 0
      %597 = vmatpush.bf16.msra.mxu0 0
      %598 = vmatpush.bf16.msra.mxu0 0
      %599 = vmatpush.bf16.msra.mxu0 0
      %600 = vmatpush.bf16.msra.mxu0 %v488
      %601 = vmatmul.bf16.gmra.mxu0 %v495
      %v602 = vpop.f32.mrf.mxu0
      %v603 = vadd.f32 0.0, %v602
      %v604 = vpop.f32.mrf.mxu0
      %v605 = vadd.f32 0.0, %v604
      %606 = vmatmul.bf16.gmra.mxu0 %v498
      %v607 = vpop.f32.mrf.mxu0
      %v608 = vadd.f32 0.0, %v607
      %v609 = vpop.f32.mrf.mxu0
      %v610 = vadd.f32 0.0, %v609
      %611 = vmatmul.bf16.gmra.mxu0 %v501
      %v612 = vpop.f32.mrf.mxu0
      %v613 = vadd.f32 0.0, %v612
      %v614 = vpop.f32.mrf.mxu0
      %v615 = vadd.f32 0.0, %v614
      %616 = vmatmul.bf16.gmra.mxu0 %v504
      %v617 = vpop.f32.mrf.mxu0
      %v618 = vadd.f32 0.0, %v617
      %v619 = vpop.f32.mrf.mxu0
      %v620 = vadd.f32 0.0, %v619
      %621 = vdwg.mxu0
      %v622 = vpack.c.bf16 %v545, %v516
      %v623 = vpack.c.bf16 %v603, %v574
      %v624 = vpack.c.bf16 %v547, %v518
      %v625 = vpack.c.bf16 %v605, %v576
      %v626 = vpack.c.bf16 %v550, %v521
      %v627 = vpack.c.bf16 %v608, %v579
      %v628 = vpack.c.bf16 %v552, %v523
      %v629 = vpack.c.bf16 %v610, %v581
      %v630 = vpack.c.bf16 %v555, %v526
      %v631 = vpack.c.bf16 %v613, %v584
      %v632 = vpack.c.bf16 %v557, %v528
      %v633 = vpack.c.bf16 %v615, %v586
      %v634 = vpack.c.bf16 %v560, %v531
      %v635 = vpack.c.bf16 %v618, %v589
      %v636 = vpack.c.bf16 %v562, %v533
      %v637 = vpack.c.bf16 %v620, %v591
      %638 = vst [vmem:[#allocation6] sm:$0xff] %v622
      %639 = vst [vmem:[#allocation6 + $0x8] sm:$0xff] %v623
      %640 = vst [vmem:[#allocation6 + $0x10] sm:$0xff] %v624
      %641 = vst [vmem:[#allocation6 + $0x18] sm:$0xff] %v625
      %642 = vst [vmem:[#allocation6 + $0x20] sm:$0xff] %v626
      %643 = vst [vmem:[#allocation6 + $0x28] sm:$0xff] %v627
      %644 = vst [vmem:[#allocation6 + $0x30] sm:$0xff] %v628
      %645 = vst [vmem:[#allocation6 + $0x38] sm:$0xff] %v629
      %646 = vst [vmem:[#allocation6 + $0x40] sm:$0xff] %v630
      %647 = vst [vmem:[#allocation6 + $0x48] sm:$0xff] %v631
      %648 = vst [vmem:[#allocation6 + $0x50] sm:$0xff] %v632
      %649 = vst [vmem:[#allocation6 + $0x58] sm:$0xff] %v633
      %650 = vst [vmem:[#allocation6 + $0x60] sm:$0xff] %v634
      %651 = vst [vmem:[#allocation6 + $0x68] sm:$0xff] %v635
      %652 = vst [vmem:[#allocation6 + $0x70] sm:$0xff] %v636
      %653 = vst [vmem:[#allocation6 + $0x78] sm:$0xff] %v637
      %s654 = scalar_lea.vmem [#allocation8], 32
      %v655 = vld [vmem:[%s654] sm:$0xff]
      %v656 = vld [vmem:[%s654 + $0x8] sm:$0xff]
      %v657 = vld [vmem:[%s654 + $0x10] sm:$0xff]
      %v658 = vld [vmem:[%s654 + $0x18] sm:$0xff]
      %v667 = vunpack.c.l.b16 %v441
      %v668 = vunpack.c.l.b16 %v442
      %v669 = vunpack.c.l.b16 %v443
      %v670 = vunpack.c.l.b16 %v444
      %v671 = vunpack.c.l.b16 %v445
      %v672 = vunpack.c.l.b16 %v446
      %v673 = vunpack.c.l.b16 %v447
      %v674 = vunpack.c.l.b16 %v448
      %v675 = vpack.c.b16 %v668, %v667
      %v676 = vpack.c.b16 %v670, %v669
      %v677 = vpack.c.b16 %v672, %v671
      %v678 = vpack.c.b16 %v674, %v673
      %v683 = vunpack.c.l.b16 %v655
      %v684 = vunpack.c.h.b16 %v655
      %v685 = vunpack.c.l.b16 %v656
      %v686 = vunpack.c.h.b16 %v656
      %v687 = vunpack.c.l.b16 %v657
      %v688 = vunpack.c.h.b16 %v657
      %v689 = vunpack.c.l.b16 %v658
      %v690 = vunpack.c.h.b16 %v658
      %v691 = vpack.c.b16 %v687, %v683
      %v692 = vpack.c.b16 %v688, %v684
      %v693 = vpack.c.b16 %v689, %v685
      %v694 = vpack.c.b16 %v690, %v686
      %v700 = vsel %vm493, %v675, 0
      %v703 = vsel %vm493, %v676, 0
      %v706 = vsel %vm493, %v677, 0
      %v709 = vsel %vm493, %v678, 0
      %711 = vmatpush.bf16.msra.mxu0 0
      %712 = vmatpush.bf16.msra.mxu0 0
      %713 = vmatpush.bf16.msra.mxu0 0
      %714 = vmatpush.bf16.msra.mxu0 0
      %715 = vmatpush.bf16.msra.mxu0 0
      %716 = vmatpush.bf16.msra.mxu0 0
      %717 = vmatpush.bf16.msra.mxu0 0
      %718 = vmatpush.bf16.msra.mxu0 %v691
      %719 = vmatmul.bf16.gmra.mxu0 %v700
      %v720 = vpop.f32.mrf.mxu0
      %v721 = vadd.f32 0.0, %v720
      %v722 = vpop.f32.mrf.mxu0
      %v723 = vadd.f32 0.0, %v722
      %724 = vmatmul.bf16.gmra.mxu0 %v703
      %v725 = vpop.f32.mrf.mxu0
      %v726 = vadd.f32 0.0, %v725
      %v727 = vpop.f32.mrf.mxu0
      %v728 = vadd.f32 0.0, %v727
      %729 = vmatmul.bf16.gmra.mxu0 %v706
      %v730 = vpop.f32.mrf.mxu0
      %v731 = vadd.f32 0.0, %v730
      %v732 = vpop.f32.mrf.mxu0
      %v733 = vadd.f32 0.0, %v732
      %734 = vmatmul.bf16.gmra.mxu0 %v709
      %v735 = vpop.f32.mrf.mxu0
      %v736 = vadd.f32 0.0, %v735
      %v737 = vpop.f32.mrf.mxu0
      %v738 = vadd.f32 0.0, %v737
      %739 = vdwg.mxu0
      %740 = vmatpush.bf16.msra.mxu0 0
      %741 = vmatpush.bf16.msra.mxu0 0
      %742 = vmatpush.bf16.msra.mxu0 0
      %743 = vmatpush.bf16.msra.mxu0 0
      %744 = vmatpush.bf16.msra.mxu0 0
      %745 = vmatpush.bf16.msra.mxu0 0
      %746 = vmatpush.bf16.msra.mxu0 0
      %747 = vmatpush.bf16.msra.mxu0 %v692
      %748 = vmatmul.bf16.gmra.mxu0 %v700
      %v749 = vpop.f32.mrf.mxu0
      %v750 = vadd.f32 0.0, %v749
      %v751 = vpop.f32.mrf.mxu0
      %v752 = vadd.f32 0.0, %v751
      %753 = vmatmul.bf16.gmra.mxu0 %v703
      %v754 = vpop.f32.mrf.mxu0
      %v755 = vadd.f32 0.0, %v754
      %v756 = vpop.f32.mrf.mxu0
      %v757 = vadd.f32 0.0, %v756
      %758 = vmatmul.bf16.gmra.mxu0 %v706
      %v759 = vpop.f32.mrf.mxu0
      %v760 = vadd.f32 0.0, %v759
      %v761 = vpop.f32.mrf.mxu0
      %v762 = vadd.f32 0.0, %v761
      %763 = vmatmul.bf16.gmra.mxu0 %v709
      %v764 = vpop.f32.mrf.mxu0
      %v765 = vadd.f32 0.0, %v764
      %v766 = vpop.f32.mrf.mxu0
      %v767 = vadd.f32 0.0, %v766
      %768 = vdwg.mxu0
      %769 = vmatpush.bf16.msra.mxu0 0
      %770 = vmatpush.bf16.msra.mxu0 0
      %771 = vmatpush.bf16.msra.mxu0 0
      %772 = vmatpush.bf16.msra.mxu0 0
      %773 = vmatpush.bf16.msra.mxu0 0
      %774 = vmatpush.bf16.msra.mxu0 0
      %775 = vmatpush.bf16.msra.mxu0 0
      %776 = vmatpush.bf16.msra.mxu0 %v693
      %777 = vmatmul.bf16.gmra.mxu0 %v700
      %v778 = vpop.f32.mrf.mxu0
      %v779 = vadd.f32 0.0, %v778
      %v780 = vpop.f32.mrf.mxu0
      %v781 = vadd.f32 0.0, %v780
      %782 = vmatmul.bf16.gmra.mxu0 %v703
      %v783 = vpop.f32.mrf.mxu0
      %v784 = vadd.f32 0.0, %v783
      %v785 = vpop.f32.mrf.mxu0
      %v786 = vadd.f32 0.0, %v785
      %787 = vmatmul.bf16.gmra.mxu0 %v706
      %v788 = vpop.f32.mrf.mxu0
      %v789 = vadd.f32 0.0, %v788
      %v790 = vpop.f32.mrf.mxu0
      %v791 = vadd.f32 0.0, %v790
      %792 = vmatmul.bf16.gmra.mxu0 %v709
      %v793 = vpop.f32.mrf.mxu0
      %v794 = vadd.f32 0.0, %v793
      %v795 = vpop.f32.mrf.mxu0
      %v796 = vadd.f32 0.0, %v795
      %797 = vdwg.mxu0
      %798 = vmatpush.bf16.msra.mxu0 0
      %799 = vmatpush.bf16.msra.mxu0 0
      %800 = vmatpush.bf16.msra.mxu0 0
      %801 = vmatpush.bf16.msra.mxu0 0
      %802 = vmatpush.bf16.msra.mxu0 0
      %803 = vmatpush.bf16.msra.mxu0 0
      %804 = vmatpush.bf16.msra.mxu0 0
      %805 = vmatpush.bf16.msra.mxu0 %v694
      %806 = vmatmul.bf16.gmra.mxu0 %v700
      %v807 = vpop.f32.mrf.mxu0
      %v808 = vadd.f32 0.0, %v807
      %v809 = vpop.f32.mrf.mxu0
      %v810 = vadd.f32 0.0, %v809
      %811 = vmatmul.bf16.gmra.mxu0 %v703
      %v812 = vpop.f32.mrf.mxu0
      %v813 = vadd.f32 0.0, %v812
      %v814 = vpop.f32.mrf.mxu0
      %v815 = vadd.f32 0.0, %v814
      %816 = vmatmul.bf16.gmra.mxu0 %v706
      %v817 = vpop.f32.mrf.mxu0
      %v818 = vadd.f32 0.0, %v817
      %v819 = vpop.f32.mrf.mxu0
      %v820 = vadd.f32 0.0, %v819
      %821 = vmatmul.bf16.gmra.mxu0 %v709
      %v822 = vpop.f32.mrf.mxu0
      %v823 = vadd.f32 0.0, %v822
      %v824 = vpop.f32.mrf.mxu0
      %v825 = vadd.f32 0.0, %v824
      %826 = vdwg.mxu0
      %v827 = vpack.c.bf16 %v750, %v721
      %v828 = vpack.c.bf16 %v808, %v779
      %v829 = vpack.c.bf16 %v752, %v723
      %v830 = vpack.c.bf16 %v810, %v781
      %v831 = vpack.c.bf16 %v755, %v726
      %v832 = vpack.c.bf16 %v813, %v784
      %v833 = vpack.c.bf16 %v757, %v728
      %v834 = vpack.c.bf16 %v815, %v786
      %v835 = vpack.c.bf16 %v760, %v731
      %v836 = vpack.c.bf16 %v818, %v789
      %v837 = vpack.c.bf16 %v762, %v733
      %v838 = vpack.c.bf16 %v820, %v791
      %v839 = vpack.c.bf16 %v765, %v736
      %v840 = vpack.c.bf16 %v823, %v794
      %v841 = vpack.c.bf16 %v767, %v738
      %v842 = vpack.c.bf16 %v825, %v796
      %843 = vst [vmem:[#allocation7] sm:$0xff] %v827
      %844 = vst [vmem:[#allocation7 + $0x8] sm:$0xff] %v828
      %845 = vst [vmem:[#allocation7 + $0x10] sm:$0xff] %v829
      %846 = vst [vmem:[#allocation7 + $0x18] sm:$0xff] %v830
      %847 = vst [vmem:[#allocation7 + $0x20] sm:$0xff] %v831
      %848 = vst [vmem:[#allocation7 + $0x28] sm:$0xff] %v832
      %849 = vst [vmem:[#allocation7 + $0x30] sm:$0xff] %v833
      %850 = vst [vmem:[#allocation7 + $0x38] sm:$0xff] %v834
      %851 = vst [vmem:[#allocation7 + $0x40] sm:$0xff] %v835
      %852 = vst [vmem:[#allocation7 + $0x48] sm:$0xff] %v836
      %853 = vst [vmem:[#allocation7 + $0x50] sm:$0xff] %v837
      %854 = vst [vmem:[#allocation7 + $0x58] sm:$0xff] %v838
      %855 = vst [vmem:[#allocation7 + $0x60] sm:$0xff] %v839
      %856 = vst [vmem:[#allocation7 + $0x68] sm:$0xff] %v840
      %857 = vst [vmem:[#allocation7 + $0x70] sm:$0xff] %v841
      %858 = vst [vmem:[#allocation7 + $0x78] sm:$0xff] %v842
      %v859 = vld [vmem:[#allocation9] sm:$0xff]
      %v860 = vld [vmem:[#allocation9 + $0x8] sm:$0xff]
      %v861 = vld [vmem:[#allocation9 + $0x10] sm:$0xff]
      %v862 = vld [vmem:[#allocation9 + $0x18] sm:$0xff]
      %v863 = vld [vmem:[#allocation9 + $0x20] sm:$0xff]
      %v864 = vld [vmem:[#allocation9 + $0x28] sm:$0xff]
      %v865 = vld [vmem:[#allocation9 + $0x30] sm:$0xff]
      %v866 = vld [vmem:[#allocation9 + $0x38] sm:$0xff]
      %v867 = vld [vmem:[#allocation9 + $0x40] sm:$0xff]
      %v868 = vld [vmem:[#allocation9 + $0x48] sm:$0xff]
      %v869 = vld [vmem:[#allocation9 + $0x50] sm:$0xff]
      %v870 = vld [vmem:[#allocation9 + $0x58] sm:$0xff]
      %v871 = vld [vmem:[#allocation9 + $0x60] sm:$0xff]
      %v872 = vld [vmem:[#allocation9 + $0x68] sm:$0xff]
      %v873 = vld [vmem:[#allocation9 + $0x70] sm:$0xff]
      %v874 = vld [vmem:[#allocation9 + $0x78] sm:$0xff]
      %v875 = vld [vmem:[#allocation9 + $0x80] sm:$0xff]
      %v876 = vld [vmem:[#allocation9 + $0x88] sm:$0xff]
      %v877 = vld [vmem:[#allocation9 + $0x90] sm:$0xff]
      %v878 = vld [vmem:[#allocation9 + $0x98] sm:$0xff]
      %v879 = vld [vmem:[#allocation9 + $0xa0] sm:$0xff]
      %v880 = vld [vmem:[#allocation9 + $0xa8] sm:$0xff]
      %v881 = vld [vmem:[#allocation9 + $0xb0] sm:$0xff]
      %v882 = vld [vmem:[#allocation9 + $0xb8] sm:$0xff]
      %v883 = vld [vmem:[#allocation9 + $0xc0] sm:$0xff]
      %v884 = vld [vmem:[#allocation9 + $0xc8] sm:$0xff]
      %v885 = vld [vmem:[#allocation9 + $0xd0] sm:$0xff]
      %v886 = vld [vmem:[#allocation9 + $0xd8] sm:$0xff]
      %v887 = vld [vmem:[#allocation9 + $0xe0] sm:$0xff]
      %v888 = vld [vmem:[#allocation9 + $0xe8] sm:$0xff]
      %v889 = vld [vmem:[#allocation9 + $0xf0] sm:$0xff]
      %v890 = vld [vmem:[#allocation9 + $0xf8] sm:$0xff]
      %s891 = scalar_lea.vmem [#allocation9], 256
      %v892 = vld [vmem:[%s891] sm:$0xff]
      %v893 = vld [vmem:[%s891 + $0x8] sm:$0xff]
      %v894 = vld [vmem:[%s891 + $0x10] sm:$0xff]
      %v895 = vld [vmem:[%s891 + $0x18] sm:$0xff]
      %v896 = vld [vmem:[%s891 + $0x20] sm:$0xff]
      %v897 = vld [vmem:[%s891 + $0x28] sm:$0xff]
      %v898 = vld [vmem:[%s891 + $0x30] sm:$0xff]
      %v899 = vld [vmem:[%s891 + $0x38] sm:$0xff]
      %v900 = vld [vmem:[%s891 + $0x40] sm:$0xff]
      %v901 = vld [vmem:[%s891 + $0x48] sm:$0xff]
      %v902 = vld [vmem:[%s891 + $0x50] sm:$0xff]
      %v903 = vld [vmem:[%s891 + $0x58] sm:$0xff]
      %v904 = vld [vmem:[%s891 + $0x60] sm:$0xff]
      %v905 = vld [vmem:[%s891 + $0x68] sm:$0xff]
      %v906 = vld [vmem:[%s891 + $0x70] sm:$0xff]
      %v907 = vld [vmem:[%s891 + $0x78] sm:$0xff]
      %v908 = vld [vmem:[%s891 + $0x80] sm:$0xff]
      %v909 = vld [vmem:[%s891 + $0x88] sm:$0xff]
      %v910 = vld [vmem:[%s891 + $0x90] sm:$0xff]
      %v911 = vld [vmem:[%s891 + $0x98] sm:$0xff]
      %v912 = vld [vmem:[%s891 + $0xa0] sm:$0xff]
      %v913 = vld [vmem:[%s891 + $0xa8] sm:$0xff]
      %v914 = vld [vmem:[%s891 + $0xb0] sm:$0xff]
      %v915 = vld [vmem:[%s891 + $0xb8] sm:$0xff]
      %v916 = vld [vmem:[%s891 + $0xc0] sm:$0xff]
      %v917 = vld [vmem:[%s891 + $0xc8] sm:$0xff]
      %v918 = vld [vmem:[%s891 + $0xd0] sm:$0xff]
      %v919 = vld [vmem:[%s891 + $0xd8] sm:$0xff]
      %v920 = vld [vmem:[%s891 + $0xe0] sm:$0xff]
      %v921 = vld [vmem:[%s891 + $0xe8] sm:$0xff]
      %v922 = vld [vmem:[%s891 + $0xf0] sm:$0xff]
      %v923 = vld [vmem:[%s891 + $0xf8] sm:$0xff]
      %v924 = vld [vmem:[#allocation2] sm:$0xff]
      %v925 = vld [vmem:[#allocation2 + $0x8] sm:$0xff]
      %v926 = vld [vmem:[#allocation3] sm:$0xff]
      %v927 = vld [vmem:[#allocation3 + $0x8] sm:$0xff]
      %v928 = vld [vmem:[#allocation4] sm:$0xff]
      %v929 = vld [vmem:[#allocation4 + $0x8] sm:$0xff]
      %v930 = vld [vmem:[#allocation5] sm:$0xff]
      %v931 = vld [vmem:[#allocation5 + $0x8] sm:$0xff]
      %v932 = vld [vmem:[#allocation6] sm:$0xff]
      %v933 = vld [vmem:[#allocation6 + $0x8] sm:$0xff]
      %v934 = vld [vmem:[#allocation6 + $0x10] sm:$0xff]
      %v935 = vld [vmem:[#allocation6 + $0x18] sm:$0xff]
      %v936 = vunpack.c.l.bf16 %v932
      %v937 = vunpack.c.h.bf16 %v932
      %v938 = vunpack.c.l.bf16 %v933
      %v939 = vunpack.c.h.bf16 %v933
      %v940 = vunpack.c.l.bf16 %v934
      %v941 = vunpack.c.h.bf16 %v934
      %v942 = vunpack.c.l.bf16 %v935
      %v943 = vunpack.c.h.bf16 %v935
      %v944 = vpack.c.bf16 %v925, %v924
      %v977 = vunpack.c.l.b16 %v859
      %v978 = vunpack.c.h.b16 %v859
      %v979 = vunpack.c.l.b16 %v860
      %v980 = vunpack.c.h.b16 %v860
      %v981 = vunpack.c.l.b16 %v861
      %v982 = vunpack.c.h.b16 %v861
      %v983 = vunpack.c.l.b16 %v862
      %v984 = vunpack.c.h.b16 %v862
      %v985 = vunpack.c.l.b16 %v863
      %v986 = vunpack.c.h.b16 %v863
      %v987 = vunpack.c.l.b16 %v864
      %v988 = vunpack.c.h.b16 %v864
      %v989 = vunpack.c.l.b16 %v865
      %v990 = vunpack.c.h.b16 %v865
      %v991 = vunpack.c.l.b16 %v866
      %v992 = vunpack.c.h.b16 %v866
      %v993 = vunpack.c.l.b16 %v867
      %v994 = vunpack.c.h.b16 %v867
      %v995 = vunpack.c.l.b16 %v868
      %v996 = vunpack.c.h.b16 %v868
      %v997 = vunpack.c.l.b16 %v869
      %v998 = vunpack.c.h.b16 %v869
      %v999 = vunpack.c.l.b16 %v870
      %v1000 = vunpack.c.h.b16 %v870
      %v1001 = vunpack.c.l.b16 %v871
      %v1002 = vunpack.c.h.b16 %v871
      %v1003 = vunpack.c.l.b16 %v872
      %v1004 = vunpack.c.h.b16 %v872
      %v1005 = vunpack.c.l.b16 %v873
      %v1006 = vunpack.c.h.b16 %v873
      %v1007 = vunpack.c.l.b16 %v874
      %v1008 = vunpack.c.h.b16 %v874
      %v1009 = vunpack.c.l.b16 %v875
      %v1010 = vunpack.c.h.b16 %v875
      %v1011 = vunpack.c.l.b16 %v876
      %v1012 = vunpack.c.h.b16 %v876
      %v1013 = vunpack.c.l.b16 %v877
      %v1014 = vunpack.c.h.b16 %v877
      %v1015 = vunpack.c.l.b16 %v878
      %v1016 = vunpack.c.h.b16 %v878
      %v1017 = vunpack.c.l.b16 %v879
      %v1018 = vunpack.c.h.b16 %v879
      %v1019 = vunpack.c.l.b16 %v880
      %v1020 = vunpack.c.h.b16 %v880
      %v1021 = vunpack.c.l.b16 %v881
      %v1022 = vunpack.c.h.b16 %v881
      %v1023 = vunpack.c.l.b16 %v882
      %v1024 = vunpack.c.h.b16 %v882
      %v1025 = vunpack.c.l.b16 %v883
      %v1026 = vunpack.c.h.b16 %v883
      %v1027 = vunpack.c.l.b16 %v884
      %v1028 = vunpack.c.h.b16 %v884
      %v1029 = vunpack.c.l.b16 %v885
      %v1030 = vunpack.c.h.b16 %v885
      %v1031 = vunpack.c.l.b16 %v886
      %v1032 = vunpack.c.h.b16 %v886
      %v1033 = vunpack.c.l.b16 %v887
      %v1034 = vunpack.c.h.b16 %v887
      %v1035 = vunpack.c.l.b16 %v888
      %v1036 = vunpack.c.h.b16 %v888
      %v1037 = vunpack.c.l.b16 %v889
      %v1038 = vunpack.c.h.b16 %v889
      %v1039 = vunpack.c.l.b16 %v890
      %v1040 = vunpack.c.h.b16 %v890
      %v1041 = vpack.c.b16 %v981, %v977
      %v1042 = vpack.c.b16 %v982, %v978
      %v1043 = vpack.c.b16 %v983, %v979
      %v1044 = vpack.c.b16 %v984, %v980
      %v1045 = vpack.c.b16 %v989, %v985
      %v1046 = vpack.c.b16 %v990, %v986
      %v1047 = vpack.c.b16 %v991, %v987
      %v1048 = vpack.c.b16 %v992, %v988
      %v1049 = vpack.c.b16 %v997, %v993
      %v1050 = vpack.c.b16 %v998, %v994
      %v1051 = vpack.c.b16 %v999, %v995
      %v1052 = vpack.c.b16 %v1000, %v996
      %v1053 = vpack.c.b16 %v1005, %v1001
      %v1054 = vpack.c.b16 %v1006, %v1002
      %v1055 = vpack.c.b16 %v1007, %v1003
      %v1056 = vpack.c.b16 %v1008, %v1004
      %v1057 = vpack.c.b16 %v1013, %v1009
      %v1058 = vpack.c.b16 %v1014, %v1010
      %v1059 = vpack.c.b16 %v1015, %v1011
      %v1060 = vpack.c.b16 %v1016, %v1012
      %v1061 = vpack.c.b16 %v1021, %v1017
      %v1062 = vpack.c.b16 %v1022, %v1018
      %v1063 = vpack.c.b16 %v1023, %v1019
      %v1064 = vpack.c.b16 %v1024, %v1020
      %v1065 = vpack.c.b16 %v1029, %v1025
      %v1066 = vpack.c.b16 %v1030, %v1026
      %v1067 = vpack.c.b16 %v1031, %v1027
      %v1068 = vpack.c.b16 %v1032, %v1028
      %v1069 = vpack.c.b16 %v1037, %v1033
      %v1070 = vpack.c.b16 %v1038, %v1034
      %v1071 = vpack.c.b16 %v1039, %v1035
      %v1072 = vpack.c.b16 %v1040, %v1036
      %1105 = vmatpush.bf16.msra.mxu0 %v1069
      %1106 = vmatpush.bf16.msra.mxu0 %v1065
      %1107 = vmatpush.bf16.msra.mxu0 %v1061
      %1108 = vmatpush.bf16.msra.mxu0 %v1057
      %1109 = vmatpush.bf16.msra.mxu0 %v1053
      %1110 = vmatpush.bf16.msra.mxu0 %v1049
      %1111 = vmatpush.bf16.msra.mxu0 %v1045
      %1112 = vmatpush.bf16.msra.mxu0 %v1041
      %1113 = vmatmul.bf16.gmra.mxu0 %v944
      %v1114 = vpop.f32.mrf.mxu0
      %v1115 = vadd.f32 0.0, %v1114
      %v1116 = vpop.f32.mrf.mxu0
      %v1117 = vadd.f32 0.0, %v1116
      %1118 = vdwg.mxu0
      %1119 = vmatpush.bf16.msra.mxu0 %v1070
      %1120 = vmatpush.bf16.msra.mxu0 %v1066
      %1121 = vmatpush.bf16.msra.mxu0 %v1062
      %1122 = vmatpush.bf16.msra.mxu0 %v1058
      %1123 = vmatpush.bf16.msra.mxu0 %v1054
      %1124 = vmatpush.bf16.msra.mxu0 %v1050
      %1125 = vmatpush.bf16.msra.mxu0 %v1046
      %1126 = vmatpush.bf16.msra.mxu0 %v1042
      %1127 = vmatmul.bf16.gmra.mxu0 %v944
      %v1128 = vpop.f32.mrf.mxu0
      %v1129 = vadd.f32 0.0, %v1128
      %v1130 = vpop.f32.mrf.mxu0
      %v1131 = vadd.f32 0.0, %v1130
      %1132 = vdwg.mxu0
      %1133 = vmatpush.bf16.msra.mxu0 %v1071
      %1134 = vmatpush.bf16.msra.mxu0 %v1067
      %1135 = vmatpush.bf16.msra.mxu0 %v1063
      %1136 = vmatpush.bf16.msra.mxu0 %v1059
      %1137 = vmatpush.bf16.msra.mxu0 %v1055
      %1138 = vmatpush.bf16.msra.mxu0 %v1051
      %1139 = vmatpush.bf16.msra.mxu0 %v1047
      %1140 = vmatpush.bf16.msra.mxu0 %v1043
      %1141 = vmatmul.bf16.gmra.mxu0 %v944
      %v1142 = vpop.f32.mrf.mxu0
      %v1143 = vadd.f32 0.0, %v1142
      %v1144 = vpop.f32.mrf.mxu0
      %v1145 = vadd.f32 0.0, %v1144
      %1146 = vdwg.mxu0
      %1147 = vmatpush.bf16.msra.mxu0 %v1072
      %1148 = vmatpush.bf16.msra.mxu0 %v1068
      %1149 = vmatpush.bf16.msra.mxu0 %v1064
      %1150 = vmatpush.bf16.msra.mxu0 %v1060
      %1151 = vmatpush.bf16.msra.mxu0 %v1056
      %1152 = vmatpush.bf16.msra.mxu0 %v1052
      %1153 = vmatpush.bf16.msra.mxu0 %v1048
      %1154 = vmatpush.bf16.msra.mxu0 %v1044
      %1155 = vmatmul.bf16.gmra.mxu0 %v944
      %v1156 = vpop.f32.mrf.mxu0
      %v1157 = vadd.f32 0.0, %v1156
      %v1158 = vpop.f32.mrf.mxu0
      %v1159 = vadd.f32 0.0, %v1158
      %1160 = vdwg.mxu0
      %v1161 = vadd.f32 %v936, %v1115
      %v1162 = vadd.f32 %v937, %v1129
      %v1163 = vadd.f32 %v938, %v1143
      %v1164 = vadd.f32 %v939, %v1157
      %v1165 = vadd.f32 %v940, %v1117
      %v1166 = vadd.f32 %v941, %v1131
      %v1167 = vadd.f32 %v942, %v1145
      %v1168 = vadd.f32 %v943, %v1159
      %v1169 = vxor.u32 %v1161, 2147483648
      %v1170 = vxor.u32 %v1165, 2147483648
      %v1171 = vmul.f32 %v1169, 1.442695
      %v1172 = vpow.pop %v1171
      %v1173 = vmul.f32 %v1170, 1.442695
      %v1174 = vpow.pop %v1173
      %v1175 = vadd.f32 %v1172, 1.0
      %v1176 = vadd.f32 %v1174, 1.0
      %v1177 = vrcp.pop %v1175
      %v1178 = vmul.f32 %v1175, %v1177
      %v1179 = vsub.f32 1.0, %v1178
      %v1180 = vmul.f32 %v1177, %v1179
      %v1181 = vadd.f32 %v1177, %v1180
      %vm1182 = vweird.f32 %v1175
      %vm1183 = vweird.f32 %v1177
      %vm1184 = vmor %vm1182, %vm1183
      %v1185 = vsel %vm1184, %v1177, %v1181
      %v1186 = vand.u32 2147483647, %v1175
      %vm1187 = vcmp.eq.f32.partialorder %v1186, 8.507059e+37
      %v1188 = vand.u32 %v1175, 2147483648
      %v1189 = vor.u32 1.1754944e-38, %v1188
      %v1190 = vsel %vm1187, %v1189, %v1185
      %v1191 = vmul.f32 1.0, %v1190
      %v1192 = vrcp.pop %v1176
      %v1193 = vmul.f32 %v1176, %v1192
      %v1194 = vsub.f32 1.0, %v1193
      %v1195 = vmul.f32 %v1192, %v1194
      %v1196 = vadd.f32 %v1192, %v1195
      %vm1197 = vweird.f32 %v1176
      %vm1198 = vweird.f32 %v1192
      %vm1199 = vmor %vm1197, %vm1198
      %v1200 = vsel %vm1199, %v1192, %v1196
      %v1201 = vand.u32 2147483647, %v1176
      %vm1202 = vcmp.eq.f32.partialorder %v1201, 8.507059e+37
      %v1203 = vand.u32 %v1176, 2147483648
      %v1204 = vor.u32 1.1754944e-38, %v1203
      %v1205 = vsel %vm1202, %v1204, %v1200
      %v1206 = vmul.f32 1.0, %v1205
      %v1207 = vxor.u32 %v1162, 2147483648
      %v1208 = vxor.u32 %v1166, 2147483648
      %v1209 = vmul.f32 %v1207, 1.442695
      %v1210 = vpow.pop %v1209
      %v1211 = vmul.f32 %v1208, 1.442695
      %v1212 = vpow.pop %v1211
      %v1213 = vadd.f32 %v1210, 1.0
      %v1214 = vadd.f32 %v1212, 1.0
      %v1215 = vrcp.pop %v1213
      %v1216 = vmul.f32 %v1213, %v1215
      %v1217 = vsub.f32 1.0, %v1216
      %v1218 = vmul.f32 %v1215, %v1217
      %v1219 = vadd.f32 %v1215, %v1218
      %vm1220 = vweird.f32 %v1213
      %vm1221 = vweird.f32 %v1215
      %vm1222 = vmor %vm1220, %vm1221
      %v1223 = vsel %vm1222, %v1215, %v1219
      %v1224 = vand.u32 2147483647, %v1213
      %vm1225 = vcmp.eq.f32.partialorder %v1224, 8.507059e+37
      %v1226 = vand.u32 %v1213, 2147483648
      %v1227 = vor.u32 1.1754944e-38, %v1226
      %v1228 = vsel %vm1225, %v1227, %v1223
      %v1229 = vmul.f32 1.0, %v1228
      %v1230 = vrcp.pop %v1214
      %v1231 = vmul.f32 %v1214, %v1230
      %v1232 = vsub.f32 1.0, %v1231
      %v1233 = vmul.f32 %v1230, %v1232
      %v1234 = vadd.f32 %v1230, %v1233
      %vm1235 = vweird.f32 %v1214
      %vm1236 = vweird.f32 %v1230
      %vm1237 = vmor %vm1235, %vm1236
      %v1238 = vsel %vm1237, %v1230, %v1234
      %v1239 = vand.u32 2147483647, %v1214
      %vm1240 = vcmp.eq.f32.partialorder %v1239, 8.507059e+37
      %v1241 = vand.u32 %v1214, 2147483648
      %v1242 = vor.u32 1.1754944e-38, %v1241
      %v1243 = vsel %vm1240, %v1242, %v1238
      %v1244 = vmul.f32 1.0, %v1243
      %v1245 = vtanh.pop %v1163
      %v1246 = vtanh.pop %v1167
      %v1247 = vxor.u32 %v1164, 2147483648
      %v1248 = vxor.u32 %v1168, 2147483648
      %v1249 = vmul.f32 %v1247, 1.442695
      %v1250 = vpow.pop %v1249
      %v1251 = vmul.f32 %v1248, 1.442695
      %v1252 = vpow.pop %v1251
      %v1253 = vadd.f32 %v1250, 1.0
      %v1254 = vadd.f32 %v1252, 1.0
      %v1255 = vrcp.pop %v1253
      %v1256 = vmul.f32 %v1253, %v1255
      %v1257 = vsub.f32 1.0, %v1256
      %v1258 = vmul.f32 %v1255, %v1257
      %v1259 = vadd.f32 %v1255, %v1258
      %vm1260 = vweird.f32 %v1253
      %vm1261 = vweird.f32 %v1255
      %vm1262 = vmor %vm1260, %vm1261
      %v1263 = vsel %vm1262, %v1255, %v1259
      %v1264 = vand.u32 2147483647, %v1253
      %vm1265 = vcmp.eq.f32.partialorder %v1264, 8.507059e+37
      %v1266 = vand.u32 %v1253, 2147483648
      %v1267 = vor.u32 1.1754944e-38, %v1266
      %v1268 = vsel %vm1265, %v1267, %v1263
      %v1269 = vmul.f32 1.0, %v1268
      %v1270 = vrcp.pop %v1254
      %v1271 = vmul.f32 %v1254, %v1270
      %v1272 = vsub.f32 1.0, %v1271
      %v1273 = vmul.f32 %v1270, %v1272
      %v1274 = vadd.f32 %v1270, %v1273
      %vm1275 = vweird.f32 %v1254
      %vm1276 = vweird.f32 %v1270
      %vm1277 = vmor %vm1275, %vm1276
      %v1278 = vsel %vm1277, %v1270, %v1274
      %v1279 = vand.u32 2147483647, %v1254
      %vm1280 = vcmp.eq.f32.partialorder %v1279, 8.507059e+37
      %v1281 = vand.u32 %v1254, 2147483648
      %v1282 = vor.u32 1.1754944e-38, %v1281
      %v1283 = vsel %vm1280, %v1282, %v1278
      %v1284 = vmul.f32 1.0, %v1283
      %v1285 = vmul.f32 %v1229, %v926
      %v1286 = vmul.f32 %v1244, %v927
      %v1287 = vmul.f32 %v1191, %v1245
      %v1288 = vmul.f32 %v1206, %v1246
      %v1289 = vadd.f32 %v1285, %v1287
      %v1290 = vadd.f32 %v1286, %v1288
      %v1291 = vtanh.pop %v1289
      %v1292 = vtanh.pop %v1290
      %v1293 = vmul.f32 %v1269, %v1291
      %v1294 = vmul.f32 %v1284, %v1292
      %v1295 = vpack.c.bf16 %v1293, %v1293
      %v1296 = vpack.c.bf16 %v1294, %v1294
      %1297 = vst [vmem:[%s223] sm:$0xf] %v1295
      %1298 = vst [vmem:[%s223 + $0x4] sm:$0xf] %v1296
      %s1299 = scalar_lea.vmem [#allocation7], 96
      %v1300 = vld [vmem:[%s1299] sm:$0xff]
      %v1301 = vld [vmem:[%s1299 + $0x8] sm:$0xff]
      %v1302 = vld [vmem:[%s1299 + $0x10] sm:$0xff]
      %v1303 = vld [vmem:[%s1299 + $0x18] sm:$0xff]
      %v1304 = vunpack.c.l.bf16 %v1300
      %v1305 = vunpack.c.h.bf16 %v1300
      %v1306 = vunpack.c.l.bf16 %v1301
      %v1307 = vunpack.c.h.bf16 %v1301
      %v1308 = vunpack.c.l.bf16 %v1302
      %v1309 = vunpack.c.h.bf16 %v1302
      %v1310 = vunpack.c.l.bf16 %v1303
      %v1311 = vunpack.c.h.bf16 %v1303
      %v1312 = vpack.c.bf16 %v929, %v928
      %v1345 = vunpack.c.l.b16 %v892
      %v1346 = vunpack.c.h.b16 %v892
      %v1347 = vunpack.c.l.b16 %v893
      %v1348 = vunpack.c.h.b16 %v893
      %v1349 = vunpack.c.l.b16 %v894
      %v1350 = vunpack.c.h.b16 %v894
      %v1351 = vunpack.c.l.b16 %v895
      %v1352 = vunpack.c.h.b16 %v895
      %v1353 = vunpack.c.l.b16 %v896
      %v1354 = vunpack.c.h.b16 %v896
      %v1355 = vunpack.c.l.b16 %v897
      %v1356 = vunpack.c.h.b16 %v897
      %v1357 = vunpack.c.l.b16 %v898
      %v1358 = vunpack.c.h.b16 %v898
      %v1359 = vunpack.c.l.b16 %v899
      %v1360 = vunpack.c.h.b16 %v899
      %v1361 = vunpack.c.l.b16 %v900
      %v1362 = vunpack.c.h.b16 %v900
      %v1363 = vunpack.c.l.b16 %v901
      %v1364 = vunpack.c.h.b16 %v901
      %v1365 = vunpack.c.l.b16 %v902
      %v1366 = vunpack.c.h.b16 %v902
      %v1367 = vunpack.c.l.b16 %v903
      %v1368 = vunpack.c.h.b16 %v903
      %v1369 = vunpack.c.l.b16 %v904
      %v1370 = vunpack.c.h.b16 %v904
      %v1371 = vunpack.c.l.b16 %v905
      %v1372 = vunpack.c.h.b16 %v905
      %v1373 = vunpack.c.l.b16 %v906
      %v1374 = vunpack.c.h.b16 %v906
      %v1375 = vunpack.c.l.b16 %v907
      %v1376 = vunpack.c.h.b16 %v907
      %v1377 = vunpack.c.l.b16 %v908
      %v1378 = vunpack.c.h.b16 %v908
      %v1379 = vunpack.c.l.b16 %v909
      %v1380 = vunpack.c.h.b16 %v909
      %v1381 = vunpack.c.l.b16 %v910
      %v1382 = vunpack.c.h.b16 %v910
      %v1383 = vunpack.c.l.b16 %v911
      %v1384 = vunpack.c.h.b16 %v911
      %v1385 = vunpack.c.l.b16 %v912
      %v1386 = vunpack.c.h.b16 %v912
      %v1387 = vunpack.c.l.b16 %v913
      %v1388 = vunpack.c.h.b16 %v913
      %v1389 = vunpack.c.l.b16 %v914
      %v1390 = vunpack.c.h.b16 %v914
      %v1391 = vunpack.c.l.b16 %v915
      %v1392 = vunpack.c.h.b16 %v915
      %v1393 = vunpack.c.l.b16 %v916
      %v1394 = vunpack.c.h.b16 %v916
      %v1395 = vunpack.c.l.b16 %v917
      %v1396 = vunpack.c.h.b16 %v917
      %v1397 = vunpack.c.l.b16 %v918
      %v1398 = vunpack.c.h.b16 %v918
      %v1399 = vunpack.c.l.b16 %v919
      %v1400 = vunpack.c.h.b16 %v919
      %v1401 = vunpack.c.l.b16 %v920
      %v1402 = vunpack.c.h.b16 %v920
      %v1403 = vunpack.c.l.b16 %v921
      %v1404 = vunpack.c.h.b16 %v921
      %v1405 = vunpack.c.l.b16 %v922
      %v1406 = vunpack.c.h.b16 %v922
      %v1407 = vunpack.c.l.b16 %v923
      %v1408 = vunpack.c.h.b16 %v923
      %v1409 = vpack.c.b16 %v1349, %v1345
      %v1410 = vpack.c.b16 %v1350, %v1346
      %v1411 = vpack.c.b16 %v1351, %v1347
      %v1412 = vpack.c.b16 %v1352, %v1348
      %v1413 = vpack.c.b16 %v1357, %v1353
      %v1414 = vpack.c.b16 %v1358, %v1354
      %v1415 = vpack.c.b16 %v1359, %v1355
      %v1416 = vpack.c.b16 %v1360, %v1356
      %v1417 = vpack.c.b16 %v1365, %v1361
      %v1418 = vpack.c.b16 %v1366, %v1362
      %v1419 = vpack.c.b16 %v1367, %v1363
      %v1420 = vpack.c.b16 %v1368, %v1364
      %v1421 = vpack.c.b16 %v1373, %v1369
      %v1422 = vpack.c.b16 %v1374, %v1370
      %v1423 = vpack.c.b16 %v1375, %v1371
      %v1424 = vpack.c.b16 %v1376, %v1372
      %v1425 = vpack.c.b16 %v1381, %v1377
      %v1426 = vpack.c.b16 %v1382, %v1378
      %v1427 = vpack.c.b16 %v1383, %v1379
      %v1428 = vpack.c.b16 %v1384, %v1380
      %v1429 = vpack.c.b16 %v1389, %v1385
      %v1430 = vpack.c.b16 %v1390, %v1386
      %v1431 = vpack.c.b16 %v1391, %v1387
      %v1432 = vpack.c.b16 %v1392, %v1388
      %v1433 = vpack.c.b16 %v1397, %v1393
      %v1434 = vpack.c.b16 %v1398, %v1394
      %v1435 = vpack.c.b16 %v1399, %v1395
      %v1436 = vpack.c.b16 %v1400, %v1396
      %v1437 = vpack.c.b16 %v1405, %v1401
      %v1438 = vpack.c.b16 %v1406, %v1402
      %v1439 = vpack.c.b16 %v1407, %v1403
      %v1440 = vpack.c.b16 %v1408, %v1404
      %1473 = vmatpush.bf16.msra.mxu0 %v1437
      %1474 = vmatpush.bf16.msra.mxu0 %v1433
      %1475 = vmatpush.bf16.msra.mxu0 %v1429
      %1476 = vmatpush.bf16.msra.mxu0 %v1425
      %1477 = vmatpush.bf16.msra.mxu0 %v1421
      %1478 = vmatpush.bf16.msra.mxu0 %v1417
      %1479 = vmatpush.bf16.msra.mxu0 %v1413
      %1480 = vmatpush.bf16.msra.mxu0 %v1409
      %1481 = vmatmul.bf16.gmra.mxu0 %v1312
      %v1482 = vpop.f32.mrf.mxu0
      %v1483 = vadd.f32 0.0, %v1482
      %v1484 = vpop.f32.mrf.mxu0
      %v1485 = vadd.f32 0.0, %v1484
      %1486 = vdwg.mxu0
      %1487 = vmatpush.bf16.msra.mxu0 %v1438
      %1488 = vmatpush.bf16.msra.mxu0 %v1434
      %1489 = vmatpush.bf16.msra.mxu0 %v1430
      %1490 = vmatpush.bf16.msra.mxu0 %v1426
      %1491 = vmatpush.bf16.msra.mxu0 %v1422
      %1492 = vmatpush.bf16.msra.mxu0 %v1418
      %1493 = vmatpush.bf16.msra.mxu0 %v1414
      %1494 = vmatpush.bf16.msra.mxu0 %v1410
      %1495 = vmatmul.bf16.gmra.mxu0 %v1312
      %v1496 = vpop.f32.mrf.mxu0
      %v1497 = vadd.f32 0.0, %v1496
      %v1498 = vpop.f32.mrf.mxu0
      %v1499 = vadd.f32 0.0, %v1498
      %1500 = vdwg.mxu0
      %1501 = vmatpush.bf16.msra.mxu0 %v1439
      %1502 = vmatpush.bf16.msra.mxu0 %v1435
      %1503 = vmatpush.bf16.msra.mxu0 %v1431
      %1504 = vmatpush.bf16.msra.mxu0 %v1427
      %1505 = vmatpush.bf16.msra.mxu0 %v1423
      %1506 = vmatpush.bf16.msra.mxu0 %v1419
      %1507 = vmatpush.bf16.msra.mxu0 %v1415
      %1508 = vmatpush.bf16.msra.mxu0 %v1411
      %1509 = vmatmul.bf16.gmra.mxu0 %v1312
      %v1510 = vpop.f32.mrf.mxu0
      %v1511 = vadd.f32 0.0, %v1510
      %v1512 = vpop.f32.mrf.mxu0
      %v1513 = vadd.f32 0.0, %v1512
      %1514 = vdwg.mxu0
      %1515 = vmatpush.bf16.msra.mxu0 %v1440
      %1516 = vmatpush.bf16.msra.mxu0 %v1436
      %1517 = vmatpush.bf16.msra.mxu0 %v1432
      %1518 = vmatpush.bf16.msra.mxu0 %v1428
      %1519 = vmatpush.bf16.msra.mxu0 %v1424
      %1520 = vmatpush.bf16.msra.mxu0 %v1420
      %1521 = vmatpush.bf16.msra.mxu0 %v1416
      %1522 = vmatpush.bf16.msra.mxu0 %v1412
      %1523 = vmatmul.bf16.gmra.mxu0 %v1312
      %v1524 = vpop.f32.mrf.mxu0
      %v1525 = vadd.f32 0.0, %v1524
      %v1526 = vpop.f32.mrf.mxu0
      %v1527 = vadd.f32 0.0, %v1526
      %1528 = vdwg.mxu0
      %v1529 = vadd.f32 %v1304, %v1483
      %v1530 = vadd.f32 %v1305, %v1497
      %v1531 = vadd.f32 %v1306, %v1511
      %v1532 = vadd.f32 %v1307, %v1525
      %v1533 = vadd.f32 %v1308, %v1485
      %v1534 = vadd.f32 %v1309, %v1499
      %v1535 = vadd.f32 %v1310, %v1513
      %v1536 = vadd.f32 %v1311, %v1527
      %v1537 = vxor.u32 %v1529, 2147483648
      %v1538 = vxor.u32 %v1533, 2147483648
      %v1539 = vmul.f32 %v1537, 1.442695
      %v1540 = vpow.pop %v1539
      %v1541 = vmul.f32 %v1538, 1.442695
      %v1542 = vpow.pop %v1541
      %v1543 = vadd.f32 %v1540, 1.0
      %v1544 = vadd.f32 %v1542, 1.0
      %v1545 = vrcp.pop %v1543
      %v1546 = vmul.f32 %v1543, %v1545
      %v1547 = vsub.f32 1.0, %v1546
      %v1548 = vmul.f32 %v1545, %v1547
      %v1549 = vadd.f32 %v1545, %v1548
      %vm1550 = vweird.f32 %v1543
      %vm1551 = vweird.f32 %v1545
      %vm1552 = vmor %vm1550, %vm1551
      %v1553 = vsel %vm1552, %v1545, %v1549
      %v1554 = vand.u32 2147483647, %v1543
      %vm1555 = vcmp.eq.f32.partialorder %v1554, 8.507059e+37
      %v1556 = vand.u32 %v1543, 2147483648
      %v1557 = vor.u32 1.1754944e-38, %v1556
      %v1558 = vsel %vm1555, %v1557, %v1553
      %v1559 = vmul.f32 1.0, %v1558
      %v1560 = vrcp.pop %v1544
      %v1561 = vmul.f32 %v1544, %v1560
      %v1562 = vsub.f32 1.0, %v1561
      %v1563 = vmul.f32 %v1560, %v1562
      %v1564 = vadd.f32 %v1560, %v1563
      %vm1565 = vweird.f32 %v1544
      %vm1566 = vweird.f32 %v1560
      %vm1567 = vmor %vm1565, %vm1566
      %v1568 = vsel %vm1567, %v1560, %v1564
      %v1569 = vand.u32 2147483647, %v1544
      %vm1570 = vcmp.eq.f32.partialorder %v1569, 8.507059e+37
      %v1571 = vand.u32 %v1544, 2147483648
      %v1572 = vor.u32 1.1754944e-38, %v1571
      %v1573 = vsel %vm1570, %v1572, %v1568
      %v1574 = vmul.f32 1.0, %v1573
      %v1575 = vxor.u32 %v1530, 2147483648
      %v1576 = vxor.u32 %v1534, 2147483648
      %v1577 = vmul.f32 %v1575, 1.442695
      %v1578 = vpow.pop %v1577
      %v1579 = vmul.f32 %v1576, 1.442695
      %v1580 = vpow.pop %v1579
      %v1581 = vadd.f32 %v1578, 1.0
      %v1582 = vadd.f32 %v1580, 1.0
      %v1583 = vrcp.pop %v1581
      %v1584 = vmul.f32 %v1581, %v1583
      %v1585 = vsub.f32 1.0, %v1584
      %v1586 = vmul.f32 %v1583, %v1585
      %v1587 = vadd.f32 %v1583, %v1586
      %vm1588 = vweird.f32 %v1581
      %vm1589 = vweird.f32 %v1583
      %vm1590 = vmor %vm1588, %vm1589
      %v1591 = vsel %vm1590, %v1583, %v1587
      %v1592 = vand.u32 2147483647, %v1581
      %vm1593 = vcmp.eq.f32.partialorder %v1592, 8.507059e+37
      %v1594 = vand.u32 %v1581, 2147483648
      %v1595 = vor.u32 1.1754944e-38, %v1594
      %v1596 = vsel %vm1593, %v1595, %v1591
      %v1597 = vmul.f32 1.0, %v1596
      %v1598 = vrcp.pop %v1582
      %v1599 = vmul.f32 %v1582, %v1598
      %v1600 = vsub.f32 1.0, %v1599
      %v1601 = vmul.f32 %v1598, %v1600
      %v1602 = vadd.f32 %v1598, %v1601
      %vm1603 = vweird.f32 %v1582
      %vm1604 = vweird.f32 %v1598
      %vm1605 = vmor %vm1603, %vm1604
      %v1606 = vsel %vm1605, %v1598, %v1602
      %v1607 = vand.u32 2147483647, %v1582
      %vm1608 = vcmp.eq.f32.partialorder %v1607, 8.507059e+37
      %v1609 = vand.u32 %v1582, 2147483648
      %v1610 = vor.u32 1.1754944e-38, %v1609
      %v1611 = vsel %vm1608, %v1610, %v1606
      %v1612 = vmul.f32 1.0, %v1611
      %v1613 = vtanh.pop %v1531
      %v1614 = vtanh.pop %v1535
      %v1615 = vxor.u32 %v1532, 2147483648
      %v1616 = vxor.u32 %v1536, 2147483648
      %v1617 = vmul.f32 %v1615, 1.442695
      %v1618 = vpow.pop %v1617
      %v1619 = vmul.f32 %v1616, 1.442695
      %v1620 = vpow.pop %v1619
      %v1621 = vadd.f32 %v1618, 1.0
      %v1622 = vadd.f32 %v1620, 1.0
      %v1623 = vrcp.pop %v1621
      %v1624 = vmul.f32 %v1621, %v1623
      %v1625 = vsub.f32 1.0, %v1624
      %v1626 = vmul.f32 %v1623, %v1625
      %v1627 = vadd.f32 %v1623, %v1626
      %vm1628 = vweird.f32 %v1621
      %vm1629 = vweird.f32 %v1623
      %vm1630 = vmor %vm1628, %vm1629
      %v1631 = vsel %vm1630, %v1623, %v1627
      %v1632 = vand.u32 2147483647, %v1621
      %vm1633 = vcmp.eq.f32.partialorder %v1632, 8.507059e+37
      %v1634 = vand.u32 %v1621, 2147483648
      %v1635 = vor.u32 1.1754944e-38, %v1634
      %v1636 = vsel %vm1633, %v1635, %v1631
      %v1637 = vmul.f32 1.0, %v1636
      %v1638 = vrcp.pop %v1622
      %v1639 = vmul.f32 %v1622, %v1638
      %v1640 = vsub.f32 1.0, %v1639
      %v1641 = vmul.f32 %v1638, %v1640
      %v1642 = vadd.f32 %v1638, %v1641
      %vm1643 = vweird.f32 %v1622
      %vm1644 = vweird.f32 %v1638
      %vm1645 = vmor %vm1643, %vm1644
      %v1646 = vsel %vm1645, %v1638, %v1642
      %v1647 = vand.u32 2147483647, %v1622
      %vm1648 = vcmp.eq.f32.partialorder %v1647, 8.507059e+37
      %v1649 = vand.u32 %v1622, 2147483648
      %v1650 = vor.u32 1.1754944e-38, %v1649
      %v1651 = vsel %vm1648, %v1650, %v1646
      %v1652 = vmul.f32 1.0, %v1651
      %v1653 = vmul.f32 %v1597, %v930
      %v1654 = vmul.f32 %v1612, %v931
      %v1655 = vmul.f32 %v1559, %v1613
      %v1656 = vmul.f32 %v1574, %v1614
      %v1657 = vadd.f32 %v1653, %v1655
      %v1658 = vadd.f32 %v1654, %v1656
      %v1659 = vtanh.pop %v1657
      %v1660 = vtanh.pop %v1658
      %v1661 = vmul.f32 %v1637, %v1659
      %v1662 = vmul.f32 %v1652, %v1660
      %v1663 = vpack.c.bf16 %v1661, %v1661
      %v1664 = vpack.c.bf16 %v1662, %v1662
      %s1665 = scalar_lea.vmem %s231, 24
      %1666 = vst [vmem:[%s1665] sm:$0xf] %v1663
      %1667 = vst [vmem:[%s1665 + $0x4] sm:$0xf] %v1664
      %s1668 = scalar_lea.vmem [#allocation6], 32
      %v1669 = vld [vmem:[%s1668] sm:$0xff]
      %v1670 = vld [vmem:[%s1668 + $0x8] sm:$0xff]
      %v1671 = vld [vmem:[%s1668 + $0x10] sm:$0xff]
      %v1672 = vld [vmem:[%s1668 + $0x18] sm:$0xff]
      %v1673 = vunpack.c.l.bf16 %v1669
      %v1674 = vunpack.c.h.bf16 %v1669
      %v1675 = vunpack.c.l.bf16 %v1670
      %v1676 = vunpack.c.h.bf16 %v1670
      %v1677 = vunpack.c.l.bf16 %v1671
      %v1678 = vunpack.c.h.bf16 %v1671
      %v1679 = vunpack.c.l.bf16 %v1672
      %v1680 = vunpack.c.h.bf16 %v1672
      %v1683 = vunpack.c.l.b16 %v1295
      %v1684 = vunpack.c.l.b16 %v1296
      %v1685 = vpack.c.b16 %v1684, %v1683
      %1687 = vmatpush.bf16.msra.mxu0 %v1069
      %1688 = vmatpush.bf16.msra.mxu0 %v1065
      %1689 = vmatpush.bf16.msra.mxu0 %v1061
      %1690 = vmatpush.bf16.msra.mxu0 %v1057
      %1691 = vmatpush.bf16.msra.mxu0 %v1053
      %1692 = vmatpush.bf16.msra.mxu0 %v1049
      %1693 = vmatpush.bf16.msra.mxu0 %v1045
      %1694 = vmatpush.bf16.msra.mxu0 %v1041
      %1695 = vmatmul.bf16.gmra.mxu0 %v1685
      %v1696 = vpop.f32.mrf.mxu0
      %v1697 = vadd.f32 0.0, %v1696
      %v1698 = vpop.f32.mrf.mxu0
      %v1699 = vadd.f32 0.0, %v1698
      %1700 = vdwg.mxu0
      %1701 = vmatpush.bf16.msra.mxu0 %v1070
      %1702 = vmatpush.bf16.msra.mxu0 %v1066
      %1703 = vmatpush.bf16.msra.mxu0 %v1062
      %1704 = vmatpush.bf16.msra.mxu0 %v1058
      %1705 = vmatpush.bf16.msra.mxu0 %v1054
      %1706 = vmatpush.bf16.msra.mxu0 %v1050
      %1707 = vmatpush.bf16.msra.mxu0 %v1046
      %1708 = vmatpush.bf16.msra.mxu0 %v1042
      %1709 = vmatmul.bf16.gmra.mxu0 %v1685
      %v1710 = vpop.f32.mrf.mxu0
      %v1711 = vadd.f32 0.0, %v1710
      %v1712 = vpop.f32.mrf.mxu0
      %v1713 = vadd.f32 0.0, %v1712
      %1714 = vdwg.mxu0
      %1715 = vmatpush.bf16.msra.mxu0 %v1071
      %1716 = vmatpush.bf16.msra.mxu0 %v1067
      %1717 = vmatpush.bf16.msra.mxu0 %v1063
      %1718 = vmatpush.bf16.msra.mxu0 %v1059
      %1719 = vmatpush.bf16.msra.mxu0 %v1055
      %1720 = vmatpush.bf16.msra.mxu0 %v1051
      %1721 = vmatpush.bf16.msra.mxu0 %v1047
      %1722 = vmatpush.bf16.msra.mxu0 %v1043
      %1723 = vmatmul.bf16.gmra.mxu0 %v1685
      %v1724 = vpop.f32.mrf.mxu0
      %v1725 = vadd.f32 0.0, %v1724
      %v1726 = vpop.f32.mrf.mxu0
      %v1727 = vadd.f32 0.0, %v1726
      %1728 = vdwg.mxu0
      %1729 = vmatpush.bf16.msra.mxu0 %v1072
      %1730 = vmatpush.bf16.msra.mxu0 %v1068
      %1731 = vmatpush.bf16.msra.mxu0 %v1064
      %1732 = vmatpush.bf16.msra.mxu0 %v1060
      %1733 = vmatpush.bf16.msra.mxu0 %v1056
      %1734 = vmatpush.bf16.msra.mxu0 %v1052
      %1735 = vmatpush.bf16.msra.mxu0 %v1048
      %1736 = vmatpush.bf16.msra.mxu0 %v1044
      %1737 = vmatmul.bf16.gmra.mxu0 %v1685
      %v1738 = vpop.f32.mrf.mxu0
      %v1739 = vadd.f32 0.0, %v1738
      %v1740 = vpop.f32.mrf.mxu0
      %v1741 = vadd.f32 0.0, %v1740
      %1742 = vdwg.mxu0
      %v1743 = vadd.f32 %v1673, %v1697
      %v1744 = vadd.f32 %v1674, %v1711
      %v1745 = vadd.f32 %v1675, %v1725
      %v1746 = vadd.f32 %v1676, %v1739
      %v1747 = vadd.f32 %v1677, %v1699
      %v1748 = vadd.f32 %v1678, %v1713
      %v1749 = vadd.f32 %v1679, %v1727
      %v1750 = vadd.f32 %v1680, %v1741
      %v1751 = vxor.u32 %v1743, 2147483648
      %v1752 = vxor.u32 %v1747, 2147483648
      %v1753 = vmul.f32 %v1751, 1.442695
      %v1754 = vpow.pop %v1753
      %v1755 = vmul.f32 %v1752, 1.442695
      %v1756 = vpow.pop %v1755
      %v1757 = vadd.f32 %v1754, 1.0
      %v1758 = vadd.f32 %v1756, 1.0
      %v1759 = vrcp.pop %v1757
      %v1760 = vmul.f32 %v1757, %v1759
      %v1761 = vsub.f32 1.0, %v1760
      %v1762 = vmul.f32 %v1759, %v1761
      %v1763 = vadd.f32 %v1759, %v1762
      %vm1764 = vweird.f32 %v1757
      %vm1765 = vweird.f32 %v1759
      %vm1766 = vmor %vm1764, %vm1765
      %v1767 = vsel %vm1766, %v1759, %v1763
      %v1768 = vand.u32 2147483647, %v1757
      %vm1769 = vcmp.eq.f32.partialorder %v1768, 8.507059e+37
      %v1770 = vand.u32 %v1757, 2147483648
      %v1771 = vor.u32 1.1754944e-38, %v1770
      %v1772 = vsel %vm1769, %v1771, %v1767
      %v1773 = vmul.f32 1.0, %v1772
      %v1774 = vrcp.pop %v1758
      %v1775 = vmul.f32 %v1758, %v1774
      %v1776 = vsub.f32 1.0, %v1775
      %v1777 = vmul.f32 %v1774, %v1776
      %v1778 = vadd.f32 %v1774, %v1777
      %vm1779 = vweird.f32 %v1758
      %vm1780 = vweird.f32 %v1774
      %vm1781 = vmor %vm1779, %vm1780
      %v1782 = vsel %vm1781, %v1774, %v1778
      %v1783 = vand.u32 2147483647, %v1758
      %vm1784 = vcmp.eq.f32.partialorder %v1783, 8.507059e+37
      %v1785 = vand.u32 %v1758, 2147483648
      %v1786 = vor.u32 1.1754944e-38, %v1785
      %v1787 = vsel %vm1784, %v1786, %v1782
      %v1788 = vmul.f32 1.0, %v1787
      %v1789 = vxor.u32 %v1744, 2147483648
      %v1790 = vxor.u32 %v1748, 2147483648
      %v1791 = vmul.f32 %v1789, 1.442695
      %v1792 = vpow.pop %v1791
      %v1793 = vmul.f32 %v1790, 1.442695
      %v1794 = vpow.pop %v1793
      %v1795 = vadd.f32 %v1792, 1.0
      %v1796 = vadd.f32 %v1794, 1.0
      %v1797 = vrcp.pop %v1795
      %v1798 = vmul.f32 %v1795, %v1797
      %v1799 = vsub.f32 1.0, %v1798
      %v1800 = vmul.f32 %v1797, %v1799
      %v1801 = vadd.f32 %v1797, %v1800
      %vm1802 = vweird.f32 %v1795
      %vm1803 = vweird.f32 %v1797
      %vm1804 = vmor %vm1802, %vm1803
      %v1805 = vsel %vm1804, %v1797, %v1801
      %v1806 = vand.u32 2147483647, %v1795
      %vm1807 = vcmp.eq.f32.partialorder %v1806, 8.507059e+37
      %v1808 = vand.u32 %v1795, 2147483648
      %v1809 = vor.u32 1.1754944e-38, %v1808
      %v1810 = vsel %vm1807, %v1809, %v1805
      %v1811 = vmul.f32 1.0, %v1810
      %v1812 = vrcp.pop %v1796
      %v1813 = vmul.f32 %v1796, %v1812
      %v1814 = vsub.f32 1.0, %v1813
      %v1815 = vmul.f32 %v1812, %v1814
      %v1816 = vadd.f32 %v1812, %v1815
      %vm1817 = vweird.f32 %v1796
      %vm1818 = vweird.f32 %v1812
      %vm1819 = vmor %vm1817, %vm1818
      %v1820 = vsel %vm1819, %v1812, %v1816
      %v1821 = vand.u32 2147483647, %v1796
      %vm1822 = vcmp.eq.f32.partialorder %v1821, 8.507059e+37
      %v1823 = vand.u32 %v1796, 2147483648
      %v1824 = vor.u32 1.1754944e-38, %v1823
      %v1825 = vsel %vm1822, %v1824, %v1820
      %v1826 = vmul.f32 1.0, %v1825
      %v1827 = vtanh.pop %v1745
      %v1828 = vtanh.pop %v1749
      %v1829 = vxor.u32 %v1746, 2147483648
      %v1830 = vxor.u32 %v1750, 2147483648
      %v1831 = vmul.f32 %v1829, 1.442695
      %v1832 = vpow.pop %v1831
      %v1833 = vmul.f32 %v1830, 1.442695
      %v1834 = vpow.pop %v1833
      %v1835 = vadd.f32 %v1832, 1.0
      %v1836 = vadd.f32 %v1834, 1.0
      %v1837 = vrcp.pop %v1835
      %v1838 = vmul.f32 %v1835, %v1837
      %v1839 = vsub.f32 1.0, %v1838
      %v1840 = vmul.f32 %v1837, %v1839
      %v1841 = vadd.f32 %v1837, %v1840
      %vm1842 = vweird.f32 %v1835
      %vm1843 = vweird.f32 %v1837
      %vm1844 = vmor %vm1842, %vm1843
      %v1845 = vsel %vm1844, %v1837, %v1841
      %v1846 = vand.u32 2147483647, %v1835
      %vm1847 = vcmp.eq.f32.partialorder %v1846, 8.507059e+37
      %v1848 = vand.u32 %v1835, 2147483648
      %v1849 = vor.u32 1.1754944e-38, %v1848
      %v1850 = vsel %vm1847, %v1849, %v1845
      %v1851 = vmul.f32 1.0, %v1850
      %v1852 = vrcp.pop %v1836
      %v1853 = vmul.f32 %v1836, %v1852
      %v1854 = vsub.f32 1.0, %v1853
      %v1855 = vmul.f32 %v1852, %v1854
      %v1856 = vadd.f32 %v1852, %v1855
      %vm1857 = vweird.f32 %v1836
      %vm1858 = vweird.f32 %v1852
      %vm1859 = vmor %vm1857, %vm1858
      %v1860 = vsel %vm1859, %v1852, %v1856
      %v1861 = vand.u32 2147483647, %v1836
      %vm1862 = vcmp.eq.f32.partialorder %v1861, 8.507059e+37
      %v1863 = vand.u32 %v1836, 2147483648
      %v1864 = vor.u32 1.1754944e-38, %v1863
      %v1865 = vsel %vm1862, %v1864, %v1860
      %v1866 = vmul.f32 1.0, %v1865
      %v1867 = vmul.f32 %v1811, %v1289
      %v1868 = vmul.f32 %v1826, %v1290
      %v1869 = vmul.f32 %v1773, %v1827
      %v1870 = vmul.f32 %v1788, %v1828
      %v1871 = vadd.f32 %v1867, %v1869
      %v1872 = vadd.f32 %v1868, %v1870
      %v1873 = vtanh.pop %v1871
      %v1874 = vtanh.pop %v1872
      %v1875 = vmul.f32 %v1851, %v1873
      %v1876 = vmul.f32 %v1866, %v1874
      %v1877 = vpack.c.bf16 %v1875, %v1875
      %v1878 = vpack.c.bf16 %v1876, %v1876
      %s1879 = scalar_lea.vmem %s223, 8
      %1880 = vst [vmem:[%s1879] sm:$0xf] %v1877
      %1881 = vst [vmem:[%s1879 + $0x4] sm:$0xf] %v1878
      %s1882 = scalar_lea.vmem [#allocation7], 64
      %v1883 = vld [vmem:[%s1882] sm:$0xff]
      %v1884 = vld [vmem:[%s1882 + $0x8] sm:$0xff]
      %v1885 = vld [vmem:[%s1882 + $0x10] sm:$0xff]
      %v1886 = vld [vmem:[%s1882 + $0x18] sm:$0xff]
      %v1887 = vunpack.c.l.bf16 %v1883
      %v1888 = vunpack.c.h.bf16 %v1883
      %v1889 = vunpack.c.l.bf16 %v1884
      %v1890 = vunpack.c.h.bf16 %v1884
      %v1891 = vunpack.c.l.bf16 %v1885
      %v1892 = vunpack.c.h.bf16 %v1885
      %v1893 = vunpack.c.l.bf16 %v1886
      %v1894 = vunpack.c.h.bf16 %v1886
      %v1897 = vunpack.c.l.b16 %v1663
      %v1898 = vunpack.c.l.b16 %v1664
      %v1899 = vpack.c.b16 %v1898, %v1897
      %1901 = vmatpush.bf16.msra.mxu0 %v1437
      %1902 = vmatpush.bf16.msra.mxu0 %v1433
      %1903 = vmatpush.bf16.msra.mxu0 %v1429
      %1904 = vmatpush.bf16.msra.mxu0 %v1425
      %1905 = vmatpush.bf16.msra.mxu0 %v1421
      %1906 = vmatpush.bf16.msra.mxu0 %v1417
      %1907 = vmatpush.bf16.msra.mxu0 %v1413
      %1908 = vmatpush.bf16.msra.mxu0 %v1409
      %1909 = vmatmul.bf16.gmra.mxu0 %v1899
      %v1910 = vpop.f32.mrf.mxu0
      %v1911 = vadd.f32 0.0, %v1910
      %v1912 = vpop.f32.mrf.mxu0
      %v1913 = vadd.f32 0.0, %v1912
      %1914 = vdwg.mxu0
      %1915 = vmatpush.bf16.msra.mxu0 %v1438
      %1916 = vmatpush.bf16.msra.mxu0 %v1434
      %1917 = vmatpush.bf16.msra.mxu0 %v1430
      %1918 = vmatpush.bf16.msra.mxu0 %v1426
      %1919 = vmatpush.bf16.msra.mxu0 %v1422
      %1920 = vmatpush.bf16.msra.mxu0 %v1418
      %1921 = vmatpush.bf16.msra.mxu0 %v1414
      %1922 = vmatpush.bf16.msra.mxu0 %v1410
      %1923 = vmatmul.bf16.gmra.mxu0 %v1899
      %v1924 = vpop.f32.mrf.mxu0
      %v1925 = vadd.f32 0.0, %v1924
      %v1926 = vpop.f32.mrf.mxu0
      %v1927 = vadd.f32 0.0, %v1926
      %1928 = vdwg.mxu0
      %1929 = vmatpush.bf16.msra.mxu0 %v1439
      %1930 = vmatpush.bf16.msra.mxu0 %v1435
      %1931 = vmatpush.bf16.msra.mxu0 %v1431
      %1932 = vmatpush.bf16.msra.mxu0 %v1427
      %1933 = vmatpush.bf16.msra.mxu0 %v1423
      %1934 = vmatpush.bf16.msra.mxu0 %v1419
      %1935 = vmatpush.bf16.msra.mxu0 %v1415
      %1936 = vmatpush.bf16.msra.mxu0 %v1411
      %1937 = vmatmul.bf16.gmra.mxu0 %v1899
      %v1938 = vpop.f32.mrf.mxu0
      %v1939 = vadd.f32 0.0, %v1938
      %v1940 = vpop.f32.mrf.mxu0
      %v1941 = vadd.f32 0.0, %v1940
      %1942 = vdwg.mxu0
      %1943 = vmatpush.bf16.msra.mxu0 %v1440
      %1944 = vmatpush.bf16.msra.mxu0 %v1436
      %1945 = vmatpush.bf16.msra.mxu0 %v1432
      %1946 = vmatpush.bf16.msra.mxu0 %v1428
      %1947 = vmatpush.bf16.msra.mxu0 %v1424
      %1948 = vmatpush.bf16.msra.mxu0 %v1420
      %1949 = vmatpush.bf16.msra.mxu0 %v1416
      %1950 = vmatpush.bf16.msra.mxu0 %v1412
      %1951 = vmatmul.bf16.gmra.mxu0 %v1899
      %v1952 = vpop.f32.mrf.mxu0
      %v1953 = vadd.f32 0.0, %v1952
      %v1954 = vpop.f32.mrf.mxu0
      %v1955 = vadd.f32 0.0, %v1954
      %1956 = vdwg.mxu0
      %v1957 = vadd.f32 %v1887, %v1911
      %v1958 = vadd.f32 %v1888, %v1925
      %v1959 = vadd.f32 %v1889, %v1939
      %v1960 = vadd.f32 %v1890, %v1953
      %v1961 = vadd.f32 %v1891, %v1913
      %v1962 = vadd.f32 %v1892, %v1927
      %v1963 = vadd.f32 %v1893, %v1941
      %v1964 = vadd.f32 %v1894, %v1955
      %v1965 = vxor.u32 %v1957, 2147483648
      %v1966 = vxor.u32 %v1961, 2147483648
      %v1967 = vmul.f32 %v1965, 1.442695
      %v1968 = vpow.pop %v1967
      %v1969 = vmul.f32 %v1966, 1.442695
      %v1970 = vpow.pop %v1969
      %v1971 = vadd.f32 %v1968, 1.0
      %v1972 = vadd.f32 %v1970, 1.0
      %v1973 = vrcp.pop %v1971
      %v1974 = vmul.f32 %v1971, %v1973
      %v1975 = vsub.f32 1.0, %v1974
      %v1976 = vmul.f32 %v1973, %v1975
      %v1977 = vadd.f32 %v1973, %v1976
      %vm1978 = vweird.f32 %v1971
      %vm1979 = vweird.f32 %v1973
      %vm1980 = vmor %vm1978, %vm1979
      %v1981 = vsel %vm1980, %v1973, %v1977
      %v1982 = vand.u32 2147483647, %v1971
      %vm1983 = vcmp.eq.f32.partialorder %v1982, 8.507059e+37
      %v1984 = vand.u32 %v1971, 2147483648
      %v1985 = vor.u32 1.1754944e-38, %v1984
      %v1986 = vsel %vm1983, %v1985, %v1981
      %v1987 = vmul.f32 1.0, %v1986
      %v1988 = vrcp.pop %v1972
      %v1989 = vmul.f32 %v1972, %v1988
      %v1990 = vsub.f32 1.0, %v1989
      %v1991 = vmul.f32 %v1988, %v1990
      %v1992 = vadd.f32 %v1988, %v1991
      %vm1993 = vweird.f32 %v1972
      %vm1994 = vweird.f32 %v1988
      %vm1995 = vmor %vm1993, %vm1994
      %v1996 = vsel %vm1995, %v1988, %v1992
      %v1997 = vand.u32 2147483647, %v1972
      %vm1998 = vcmp.eq.f32.partialorder %v1997, 8.507059e+37
      %v1999 = vand.u32 %v1972, 2147483648
      %v2000 = vor.u32 1.1754944e-38, %v1999
      %v2001 = vsel %vm1998, %v2000, %v1996
      %v2002 = vmul.f32 1.0, %v2001
      %v2003 = vxor.u32 %v1958, 2147483648
      %v2004 = vxor.u32 %v1962, 2147483648
      %v2005 = vmul.f32 %v2003, 1.442695
      %v2006 = vpow.pop %v2005
      %v2007 = vmul.f32 %v2004, 1.442695
      %v2008 = vpow.pop %v2007
      %v2009 = vadd.f32 %v2006, 1.0
      %v2010 = vadd.f32 %v2008, 1.0
      %v2011 = vrcp.pop %v2009
      %v2012 = vmul.f32 %v2009, %v2011
      %v2013 = vsub.f32 1.0, %v2012
      %v2014 = vmul.f32 %v2011, %v2013
      %v2015 = vadd.f32 %v2011, %v2014
      %vm2016 = vweird.f32 %v2009
      %vm2017 = vweird.f32 %v2011
      %vm2018 = vmor %vm2016, %vm2017
      %v2019 = vsel %vm2018, %v2011, %v2015
      %v2020 = vand.u32 2147483647, %v2009
      %vm2021 = vcmp.eq.f32.partialorder %v2020, 8.507059e+37
      %v2022 = vand.u32 %v2009, 2147483648
      %v2023 = vor.u32 1.1754944e-38, %v2022
      %v2024 = vsel %vm2021, %v2023, %v2019
      %v2025 = vmul.f32 1.0, %v2024
      %v2026 = vrcp.pop %v2010
      %v2027 = vmul.f32 %v2010, %v2026
      %v2028 = vsub.f32 1.0, %v2027
      %v2029 = vmul.f32 %v2026, %v2028
      %v2030 = vadd.f32 %v2026, %v2029
      %vm2031 = vweird.f32 %v2010
      %vm2032 = vweird.f32 %v2026
      %vm2033 = vmor %vm2031, %vm2032
      %v2034 = vsel %vm2033, %v2026, %v2030
      %v2035 = vand.u32 2147483647, %v2010
      %vm2036 = vcmp.eq.f32.partialorder %v2035, 8.507059e+37
      %v2037 = vand.u32 %v2010, 2147483648
      %v2038 = vor.u32 1.1754944e-38, %v2037
      %v2039 = vsel %vm2036, %v2038, %v2034
      %v2040 = vmul.f32 1.0, %v2039
      %v2041 = vtanh.pop %v1959
      %v2042 = vtanh.pop %v1963
      %v2043 = vxor.u32 %v1960, 2147483648
      %v2044 = vxor.u32 %v1964, 2147483648
      %v2045 = vmul.f32 %v2043, 1.442695
      %v2046 = vpow.pop %v2045
      %v2047 = vmul.f32 %v2044, 1.442695
      %v2048 = vpow.pop %v2047
      %v2049 = vadd.f32 %v2046, 1.0
      %v2050 = vadd.f32 %v2048, 1.0
      %v2051 = vrcp.pop %v2049
      %v2052 = vmul.f32 %v2049, %v2051
      %v2053 = vsub.f32 1.0, %v2052
      %v2054 = vmul.f32 %v2051, %v2053
      %v2055 = vadd.f32 %v2051, %v2054
      %vm2056 = vweird.f32 %v2049
      %vm2057 = vweird.f32 %v2051
      %vm2058 = vmor %vm2056, %vm2057
      %v2059 = vsel %vm2058, %v2051, %v2055
      %v2060 = vand.u32 2147483647, %v2049
      %vm2061 = vcmp.eq.f32.partialorder %v2060, 8.507059e+37
      %v2062 = vand.u32 %v2049, 2147483648
      %v2063 = vor.u32 1.1754944e-38, %v2062
      %v2064 = vsel %vm2061, %v2063, %v2059
      %v2065 = vmul.f32 1.0, %v2064
      %v2066 = vrcp.pop %v2050
      %v2067 = vmul.f32 %v2050, %v2066
      %v2068 = vsub.f32 1.0, %v2067
      %v2069 = vmul.f32 %v2066, %v2068
      %v2070 = vadd.f32 %v2066, %v2069
      %vm2071 = vweird.f32 %v2050
      %vm2072 = vweird.f32 %v2066
      %vm2073 = vmor %vm2071, %vm2072
      %v2074 = vsel %vm2073, %v2066, %v2070
      %v2075 = vand.u32 2147483647, %v2050
      %vm2076 = vcmp.eq.f32.partialorder %v2075, 8.507059e+37
      %v2077 = vand.u32 %v2050, 2147483648
      %v2078 = vor.u32 1.1754944e-38, %v2077
      %v2079 = vsel %vm2076, %v2078, %v2074
      %v2080 = vmul.f32 1.0, %v2079
      %v2081 = vmul.f32 %v2025, %v1657
      %v2082 = vmul.f32 %v2040, %v1658
      %v2083 = vmul.f32 %v1987, %v2041
      %v2084 = vmul.f32 %v2002, %v2042
      %v2085 = vadd.f32 %v2081, %v2083
      %v2086 = vadd.f32 %v2082, %v2084
      %v2087 = vtanh.pop %v2085
      %v2088 = vtanh.pop %v2086
      %v2089 = vmul.f32 %v2065, %v2087
      %v2090 = vmul.f32 %v2080, %v2088
      %v2091 = vpack.c.bf16 %v2089, %v2089
      %v2092 = vpack.c.bf16 %v2090, %v2090
      %s2093 = scalar_lea.vmem %s231, 16
      %2094 = vst [vmem:[%s2093] sm:$0xf] %v2091
      %2095 = vst [vmem:[%s2093 + $0x4] sm:$0xf] %v2092
      %s2096 = scalar_lea.vmem [#allocation6], 64
      %v2097 = vld [vmem:[%s2096] sm:$0xff]
      %v2098 = vld [vmem:[%s2096 + $0x8] sm:$0xff]
      %v2099 = vld [vmem:[%s2096 + $0x10] sm:$0xff]
      %v2100 = vld [vmem:[%s2096 + $0x18] sm:$0xff]
      %v2101 = vunpack.c.l.bf16 %v2097
      %v2102 = vunpack.c.h.bf16 %v2097
      %v2103 = vunpack.c.l.bf16 %v2098
      %v2104 = vunpack.c.h.bf16 %v2098
      %v2105 = vunpack.c.l.bf16 %v2099
      %v2106 = vunpack.c.h.bf16 %v2099
      %v2107 = vunpack.c.l.bf16 %v2100
      %v2108 = vunpack.c.h.bf16 %v2100
      %v2111 = vunpack.c.l.b16 %v1877
      %v2112 = vunpack.c.l.b16 %v1878
      %v2113 = vpack.c.b16 %v2112, %v2111
      %2115 = vmatpush.bf16.msra.mxu0 %v1069
      %2116 = vmatpush.bf16.msra.mxu0 %v1065
      %2117 = vmatpush.bf16.msra.mxu0 %v1061
      %2118 = vmatpush.bf16.msra.mxu0 %v1057
      %2119 = vmatpush.bf16.msra.mxu0 %v1053
      %2120 = vmatpush.bf16.msra.mxu0 %v1049
      %2121 = vmatpush.bf16.msra.mxu0 %v1045
      %2122 = vmatpush.bf16.msra.mxu0 %v1041
      %2123 = vmatmul.bf16.gmra.mxu0 %v2113
      %v2124 = vpop.f32.mrf.mxu0
      %v2125 = vadd.f32 0.0, %v2124
      %v2126 = vpop.f32.mrf.mxu0
      %v2127 = vadd.f32 0.0, %v2126
      %2128 = vdwg.mxu0
      %2129 = vmatpush.bf16.msra.mxu0 %v1070
      %2130 = vmatpush.bf16.msra.mxu0 %v1066
      %2131 = vmatpush.bf16.msra.mxu0 %v1062
      %2132 = vmatpush.bf16.msra.mxu0 %v1058
      %2133 = vmatpush.bf16.msra.mxu0 %v1054
      %2134 = vmatpush.bf16.msra.mxu0 %v1050
      %2135 = vmatpush.bf16.msra.mxu0 %v1046
      %2136 = vmatpush.bf16.msra.mxu0 %v1042
      %2137 = vmatmul.bf16.gmra.mxu0 %v2113
      %v2138 = vpop.f32.mrf.mxu0
      %v2139 = vadd.f32 0.0, %v2138
      %v2140 = vpop.f32.mrf.mxu0
      %v2141 = vadd.f32 0.0, %v2140
      %2142 = vdwg.mxu0
      %2143 = vmatpush.bf16.msra.mxu0 %v1071
      %2144 = vmatpush.bf16.msra.mxu0 %v1067
      %2145 = vmatpush.bf16.msra.mxu0 %v1063
      %2146 = vmatpush.bf16.msra.mxu0 %v1059
      %2147 = vmatpush.bf16.msra.mxu0 %v1055
      %2148 = vmatpush.bf16.msra.mxu0 %v1051
      %2149 = vmatpush.bf16.msra.mxu0 %v1047
      %2150 = vmatpush.bf16.msra.mxu0 %v1043
      %2151 = vmatmul.bf16.gmra.mxu0 %v2113
      %v2152 = vpop.f32.mrf.mxu0
      %v2153 = vadd.f32 0.0, %v2152
      %v2154 = vpop.f32.mrf.mxu0
      %v2155 = vadd.f32 0.0, %v2154
      %2156 = vdwg.mxu0
      %2157 = vmatpush.bf16.msra.mxu0 %v1072
      %2158 = vmatpush.bf16.msra.mxu0 %v1068
      %2159 = vmatpush.bf16.msra.mxu0 %v1064
      %2160 = vmatpush.bf16.msra.mxu0 %v1060
      %2161 = vmatpush.bf16.msra.mxu0 %v1056
      %2162 = vmatpush.bf16.msra.mxu0 %v1052
      %2163 = vmatpush.bf16.msra.mxu0 %v1048
      %2164 = vmatpush.bf16.msra.mxu0 %v1044
      %2165 = vmatmul.bf16.gmra.mxu0 %v2113
      %v2166 = vpop.f32.mrf.mxu0
      %v2167 = vadd.f32 0.0, %v2166
      %v2168 = vpop.f32.mrf.mxu0
      %v2169 = vadd.f32 0.0, %v2168
      %2170 = vdwg.mxu0
      %v2171 = vadd.f32 %v2101, %v2125
      %v2172 = vadd.f32 %v2102, %v2139
      %v2173 = vadd.f32 %v2103, %v2153
      %v2174 = vadd.f32 %v2104, %v2167
      %v2175 = vadd.f32 %v2105, %v2127
      %v2176 = vadd.f32 %v2106, %v2141
      %v2177 = vadd.f32 %v2107, %v2155
      %v2178 = vadd.f32 %v2108, %v2169
      %v2179 = vxor.u32 %v2171, 2147483648
      %v2180 = vxor.u32 %v2175, 2147483648
      %v2181 = vmul.f32 %v2179, 1.442695
      %v2182 = vpow.pop %v2181
      %v2183 = vmul.f32 %v2180, 1.442695
      %v2184 = vpow.pop %v2183
      %v2185 = vadd.f32 %v2182, 1.0
      %v2186 = vadd.f32 %v2184, 1.0
      %v2187 = vrcp.pop %v2185
      %v2188 = vmul.f32 %v2185, %v2187
      %v2189 = vsub.f32 1.0, %v2188
      %v2190 = vmul.f32 %v2187, %v2189
      %v2191 = vadd.f32 %v2187, %v2190
      %vm2192 = vweird.f32 %v2185
      %vm2193 = vweird.f32 %v2187
      %vm2194 = vmor %vm2192, %vm2193
      %v2195 = vsel %vm2194, %v2187, %v2191
      %v2196 = vand.u32 2147483647, %v2185
      %vm2197 = vcmp.eq.f32.partialorder %v2196, 8.507059e+37
      %v2198 = vand.u32 %v2185, 2147483648
      %v2199 = vor.u32 1.1754944e-38, %v2198
      %v2200 = vsel %vm2197, %v2199, %v2195
      %v2201 = vmul.f32 1.0, %v2200
      %v2202 = vrcp.pop %v2186
      %v2203 = vmul.f32 %v2186, %v2202
      %v2204 = vsub.f32 1.0, %v2203
      %v2205 = vmul.f32 %v2202, %v2204
      %v2206 = vadd.f32 %v2202, %v2205
      %vm2207 = vweird.f32 %v2186
      %vm2208 = vweird.f32 %v2202
      %vm2209 = vmor %vm2207, %vm2208
      %v2210 = vsel %vm2209, %v2202, %v2206
      %v2211 = vand.u32 2147483647, %v2186
      %vm2212 = vcmp.eq.f32.partialorder %v2211, 8.507059e+37
      %v2213 = vand.u32 %v2186, 2147483648
      %v2214 = vor.u32 1.1754944e-38, %v2213
      %v2215 = vsel %vm2212, %v2214, %v2210
      %v2216 = vmul.f32 1.0, %v2215
      %v2217 = vxor.u32 %v2172, 2147483648
      %v2218 = vxor.u32 %v2176, 2147483648
      %v2219 = vmul.f32 %v2217, 1.442695
      %v2220 = vpow.pop %v2219
      %v2221 = vmul.f32 %v2218, 1.442695
      %v2222 = vpow.pop %v2221
      %v2223 = vadd.f32 %v2220, 1.0
      %v2224 = vadd.f32 %v2222, 1.0
      %v2225 = vrcp.pop %v2223
      %v2226 = vmul.f32 %v2223, %v2225
      %v2227 = vsub.f32 1.0, %v2226
      %v2228 = vmul.f32 %v2225, %v2227
      %v2229 = vadd.f32 %v2225, %v2228
      %vm2230 = vweird.f32 %v2223
      %vm2231 = vweird.f32 %v2225
      %vm2232 = vmor %vm2230, %vm2231
      %v2233 = vsel %vm2232, %v2225, %v2229
      %v2234 = vand.u32 2147483647, %v2223
      %vm2235 = vcmp.eq.f32.partialorder %v2234, 8.507059e+37
      %v2236 = vand.u32 %v2223, 2147483648
      %v2237 = vor.u32 1.1754944e-38, %v2236
      %v2238 = vsel %vm2235, %v2237, %v2233
      %v2239 = vmul.f32 1.0, %v2238
      %v2240 = vrcp.pop %v2224
      %v2241 = vmul.f32 %v2224, %v2240
      %v2242 = vsub.f32 1.0, %v2241
      %v2243 = vmul.f32 %v2240, %v2242
      %v2244 = vadd.f32 %v2240, %v2243
      %vm2245 = vweird.f32 %v2224
      %vm2246 = vweird.f32 %v2240
      %vm2247 = vmor %vm2245, %vm2246
      %v2248 = vsel %vm2247, %v2240, %v2244
      %v2249 = vand.u32 2147483647, %v2224
      %vm2250 = vcmp.eq.f32.partialorder %v2249, 8.507059e+37
      %v2251 = vand.u32 %v2224, 2147483648
      %v2252 = vor.u32 1.1754944e-38, %v2251
      %v2253 = vsel %vm2250, %v2252, %v2248
      %v2254 = vmul.f32 1.0, %v2253
      %v2255 = vtanh.pop %v2173
      %v2256 = vtanh.pop %v2177
      %v2257 = vxor.u32 %v2174, 2147483648
      %v2258 = vxor.u32 %v2178, 2147483648
      %v2259 = vmul.f32 %v2257, 1.442695
      %v2260 = vpow.pop %v2259
      %v2261 = vmul.f32 %v2258, 1.442695
      %v2262 = vpow.pop %v2261
      %v2263 = vadd.f32 %v2260, 1.0
      %v2264 = vadd.f32 %v2262, 1.0
      %v2265 = vrcp.pop %v2263
      %v2266 = vmul.f32 %v2263, %v2265
      %v2267 = vsub.f32 1.0, %v2266
      %v2268 = vmul.f32 %v2265, %v2267
      %v2269 = vadd.f32 %v2265, %v2268
      %vm2270 = vweird.f32 %v2263
      %vm2271 = vweird.f32 %v2265
      %vm2272 = vmor %vm2270, %vm2271
      %v2273 = vsel %vm2272, %v2265, %v2269
      %v2274 = vand.u32 2147483647, %v2263
      %vm2275 = vcmp.eq.f32.partialorder %v2274, 8.507059e+37
      %v2276 = vand.u32 %v2263, 2147483648
      %v2277 = vor.u32 1.1754944e-38, %v2276
      %v2278 = vsel %vm2275, %v2277, %v2273
      %v2279 = vmul.f32 1.0, %v2278
      %v2280 = vrcp.pop %v2264
      %v2281 = vmul.f32 %v2264, %v2280
      %v2282 = vsub.f32 1.0, %v2281
      %v2283 = vmul.f32 %v2280, %v2282
      %v2284 = vadd.f32 %v2280, %v2283
      %vm2285 = vweird.f32 %v2264
      %vm2286 = vweird.f32 %v2280
      %vm2287 = vmor %vm2285, %vm2286
      %v2288 = vsel %vm2287, %v2280, %v2284
      %v2289 = vand.u32 2147483647, %v2264
      %vm2290 = vcmp.eq.f32.partialorder %v2289, 8.507059e+37
      %v2291 = vand.u32 %v2264, 2147483648
      %v2292 = vor.u32 1.1754944e-38, %v2291
      %v2293 = vsel %vm2290, %v2292, %v2288
      %v2294 = vmul.f32 1.0, %v2293
      %v2295 = vmul.f32 %v2239, %v1871
      %v2296 = vmul.f32 %v2254, %v1872
      %v2297 = vmul.f32 %v2201, %v2255
      %v2298 = vmul.f32 %v2216, %v2256
      %v2299 = vadd.f32 %v2295, %v2297
      %v2300 = vadd.f32 %v2296, %v2298
      %v2301 = vtanh.pop %v2299
      %v2302 = vtanh.pop %v2300
      %v2303 = vmul.f32 %v2279, %v2301
      %v2304 = vmul.f32 %v2294, %v2302
      %v2305 = vpack.c.bf16 %v2303, %v2303
      %v2306 = vpack.c.bf16 %v2304, %v2304
      %s2307 = scalar_lea.vmem %s223, 16
      %2308 = vst [vmem:[%s2307] sm:$0xf] %v2305
      %2309 = vst [vmem:[%s2307 + $0x4] sm:$0xf] %v2306
      %s2310 = scalar_lea.vmem [#allocation7], 32
      %v2311 = vld [vmem:[%s2310] sm:$0xff]
      %v2312 = vld [vmem:[%s2310 + $0x8] sm:$0xff]
      %v2313 = vld [vmem:[%s2310 + $0x10] sm:$0xff]
      %v2314 = vld [vmem:[%s2310 + $0x18] sm:$0xff]
      %v2315 = vunpack.c.l.bf16 %v2311
      %v2316 = vunpack.c.h.bf16 %v2311
      %v2317 = vunpack.c.l.bf16 %v2312
      %v2318 = vunpack.c.h.bf16 %v2312
      %v2319 = vunpack.c.l.bf16 %v2313
      %v2320 = vunpack.c.h.bf16 %v2313
      %v2321 = vunpack.c.l.bf16 %v2314
      %v2322 = vunpack.c.h.bf16 %v2314
      %v2325 = vunpack.c.l.b16 %v2091
      %v2326 = vunpack.c.l.b16 %v2092
      %v2327 = vpack.c.b16 %v2326, %v2325
      %2329 = vmatpush.bf16.msra.mxu0 %v1437
      %2330 = vmatpush.bf16.msra.mxu0 %v1433
      %2331 = vmatpush.bf16.msra.mxu0 %v1429
      %2332 = vmatpush.bf16.msra.mxu0 %v1425
      %2333 = vmatpush.bf16.msra.mxu0 %v1421
      %2334 = vmatpush.bf16.msra.mxu0 %v1417
      %2335 = vmatpush.bf16.msra.mxu0 %v1413
      %2336 = vmatpush.bf16.msra.mxu0 %v1409
      %2337 = vmatmul.bf16.gmra.mxu0 %v2327
      %v2338 = vpop.f32.mrf.mxu0
      %v2339 = vadd.f32 0.0, %v2338
      %v2340 = vpop.f32.mrf.mxu0
      %v2341 = vadd.f32 0.0, %v2340
      %2342 = vdwg.mxu0
      %2343 = vmatpush.bf16.msra.mxu0 %v1438
      %2344 = vmatpush.bf16.msra.mxu0 %v1434
      %2345 = vmatpush.bf16.msra.mxu0 %v1430
      %2346 = vmatpush.bf16.msra.mxu0 %v1426
      %2347 = vmatpush.bf16.msra.mxu0 %v1422
      %2348 = vmatpush.bf16.msra.mxu0 %v1418
      %2349 = vmatpush.bf16.msra.mxu0 %v1414
      %2350 = vmatpush.bf16.msra.mxu0 %v1410
      %2351 = vmatmul.bf16.gmra.mxu0 %v2327
      %v2352 = vpop.f32.mrf.mxu0
      %v2353 = vadd.f32 0.0, %v2352
      %v2354 = vpop.f32.mrf.mxu0
      %v2355 = vadd.f32 0.0, %v2354
      %2356 = vdwg.mxu0
      %2357 = vmatpush.bf16.msra.mxu0 %v1439
      %2358 = vmatpush.bf16.msra.mxu0 %v1435
      %2359 = vmatpush.bf16.msra.mxu0 %v1431
      %2360 = vmatpush.bf16.msra.mxu0 %v1427
      %2361 = vmatpush.bf16.msra.mxu0 %v1423
      %2362 = vmatpush.bf16.msra.mxu0 %v1419
      %2363 = vmatpush.bf16.msra.mxu0 %v1415
      %2364 = vmatpush.bf16.msra.mxu0 %v1411
      %2365 = vmatmul.bf16.gmra.mxu0 %v2327
      %v2366 = vpop.f32.mrf.mxu0
      %v2367 = vadd.f32 0.0, %v2366
      %v2368 = vpop.f32.mrf.mxu0
      %v2369 = vadd.f32 0.0, %v2368
      %2370 = vdwg.mxu0
      %2371 = vmatpush.bf16.msra.mxu0 %v1440
      %2372 = vmatpush.bf16.msra.mxu0 %v1436
      %2373 = vmatpush.bf16.msra.mxu0 %v1432
      %2374 = vmatpush.bf16.msra.mxu0 %v1428
      %2375 = vmatpush.bf16.msra.mxu0 %v1424
      %2376 = vmatpush.bf16.msra.mxu0 %v1420
      %2377 = vmatpush.bf16.msra.mxu0 %v1416
      %2378 = vmatpush.bf16.msra.mxu0 %v1412
      %2379 = vmatmul.bf16.gmra.mxu0 %v2327
      %v2380 = vpop.f32.mrf.mxu0
      %v2381 = vadd.f32 0.0, %v2380
      %v2382 = vpop.f32.mrf.mxu0
      %v2383 = vadd.f32 0.0, %v2382
      %2384 = vdwg.mxu0
      %v2385 = vadd.f32 %v2315, %v2339
      %v2386 = vadd.f32 %v2316, %v2353
      %v2387 = vadd.f32 %v2317, %v2367
      %v2388 = vadd.f32 %v2318, %v2381
      %v2389 = vadd.f32 %v2319, %v2341
      %v2390 = vadd.f32 %v2320, %v2355
      %v2391 = vadd.f32 %v2321, %v2369
      %v2392 = vadd.f32 %v2322, %v2383
      %v2393 = vxor.u32 %v2385, 2147483648
      %v2394 = vxor.u32 %v2389, 2147483648
      %v2395 = vmul.f32 %v2393, 1.442695
      %v2396 = vpow.pop %v2395
      %v2397 = vmul.f32 %v2394, 1.442695
      %v2398 = vpow.pop %v2397
      %v2399 = vadd.f32 %v2396, 1.0
      %v2400 = vadd.f32 %v2398, 1.0
      %v2401 = vrcp.pop %v2399
      %v2402 = vmul.f32 %v2399, %v2401
      %v2403 = vsub.f32 1.0, %v2402
      %v2404 = vmul.f32 %v2401, %v2403
      %v2405 = vadd.f32 %v2401, %v2404
      %vm2406 = vweird.f32 %v2399
      %vm2407 = vweird.f32 %v2401
      %vm2408 = vmor %vm2406, %vm2407
      %v2409 = vsel %vm2408, %v2401, %v2405
      %v2410 = vand.u32 2147483647, %v2399
      %vm2411 = vcmp.eq.f32.partialorder %v2410, 8.507059e+37
      %v2412 = vand.u32 %v2399, 2147483648
      %v2413 = vor.u32 1.1754944e-38, %v2412
      %v2414 = vsel %vm2411, %v2413, %v2409
      %v2415 = vmul.f32 1.0, %v2414
      %v2416 = vrcp.pop %v2400
      %v2417 = vmul.f32 %v2400, %v2416
      %v2418 = vsub.f32 1.0, %v2417
      %v2419 = vmul.f32 %v2416, %v2418
      %v2420 = vadd.f32 %v2416, %v2419
      %vm2421 = vweird.f32 %v2400
      %vm2422 = vweird.f32 %v2416
      %vm2423 = vmor %vm2421, %vm2422
      %v2424 = vsel %vm2423, %v2416, %v2420
      %v2425 = vand.u32 2147483647, %v2400
      %vm2426 = vcmp.eq.f32.partialorder %v2425, 8.507059e+37
      %v2427 = vand.u32 %v2400, 2147483648
      %v2428 = vor.u32 1.1754944e-38, %v2427
      %v2429 = vsel %vm2426, %v2428, %v2424
      %v2430 = vmul.f32 1.0, %v2429
      %v2431 = vxor.u32 %v2386, 2147483648
      %v2432 = vxor.u32 %v2390, 2147483648
      %v2433 = vmul.f32 %v2431, 1.442695
      %v2434 = vpow.pop %v2433
      %v2435 = vmul.f32 %v2432, 1.442695
      %v2436 = vpow.pop %v2435
      %v2437 = vadd.f32 %v2434, 1.0
      %v2438 = vadd.f32 %v2436, 1.0
      %v2439 = vrcp.pop %v2437
      %v2440 = vmul.f32 %v2437, %v2439
      %v2441 = vsub.f32 1.0, %v2440
      %v2442 = vmul.f32 %v2439, %v2441
      %v2443 = vadd.f32 %v2439, %v2442
      %vm2444 = vweird.f32 %v2437
      %vm2445 = vweird.f32 %v2439
      %vm2446 = vmor %vm2444, %vm2445
      %v2447 = vsel %vm2446, %v2439, %v2443
      %v2448 = vand.u32 2147483647, %v2437
      %vm2449 = vcmp.eq.f32.partialorder %v2448, 8.507059e+37
      %v2450 = vand.u32 %v2437, 2147483648
      %v2451 = vor.u32 1.1754944e-38, %v2450
      %v2452 = vsel %vm2449, %v2451, %v2447
      %v2453 = vmul.f32 1.0, %v2452
      %v2454 = vrcp.pop %v2438
      %v2455 = vmul.f32 %v2438, %v2454
      %v2456 = vsub.f32 1.0, %v2455
      %v2457 = vmul.f32 %v2454, %v2456
      %v2458 = vadd.f32 %v2454, %v2457
      %vm2459 = vweird.f32 %v2438
      %vm2460 = vweird.f32 %v2454
      %vm2461 = vmor %vm2459, %vm2460
      %v2462 = vsel %vm2461, %v2454, %v2458
      %v2463 = vand.u32 2147483647, %v2438
      %vm2464 = vcmp.eq.f32.partialorder %v2463, 8.507059e+37
      %v2465 = vand.u32 %v2438, 2147483648
      %v2466 = vor.u32 1.1754944e-38, %v2465
      %v2467 = vsel %vm2464, %v2466, %v2462
      %v2468 = vmul.f32 1.0, %v2467
      %v2469 = vtanh.pop %v2387
      %v2470 = vtanh.pop %v2391
      %v2471 = vxor.u32 %v2388, 2147483648
      %v2472 = vxor.u32 %v2392, 2147483648
      %v2473 = vmul.f32 %v2471, 1.442695
      %v2474 = vpow.pop %v2473
      %v2475 = vmul.f32 %v2472, 1.442695
      %v2476 = vpow.pop %v2475
      %v2477 = vadd.f32 %v2474, 1.0
      %v2478 = vadd.f32 %v2476, 1.0
      %v2479 = vrcp.pop %v2477
      %v2480 = vmul.f32 %v2477, %v2479
      %v2481 = vsub.f32 1.0, %v2480
      %v2482 = vmul.f32 %v2479, %v2481
      %v2483 = vadd.f32 %v2479, %v2482
      %vm2484 = vweird.f32 %v2477
      %vm2485 = vweird.f32 %v2479
      %vm2486 = vmor %vm2484, %vm2485
      %v2487 = vsel %vm2486, %v2479, %v2483
      %v2488 = vand.u32 2147483647, %v2477
      %vm2489 = vcmp.eq.f32.partialorder %v2488, 8.507059e+37
      %v2490 = vand.u32 %v2477, 2147483648
      %v2491 = vor.u32 1.1754944e-38, %v2490
      %v2492 = vsel %vm2489, %v2491, %v2487
      %v2493 = vmul.f32 1.0, %v2492
      %v2494 = vrcp.pop %v2478
      %v2495 = vmul.f32 %v2478, %v2494
      %v2496 = vsub.f32 1.0, %v2495
      %v2497 = vmul.f32 %v2494, %v2496
      %v2498 = vadd.f32 %v2494, %v2497
      %vm2499 = vweird.f32 %v2478
      %vm2500 = vweird.f32 %v2494
      %vm2501 = vmor %vm2499, %vm2500
      %v2502 = vsel %vm2501, %v2494, %v2498
      %v2503 = vand.u32 2147483647, %v2478
      %vm2504 = vcmp.eq.f32.partialorder %v2503, 8.507059e+37
      %v2505 = vand.u32 %v2478, 2147483648
      %v2506 = vor.u32 1.1754944e-38, %v2505
      %v2507 = vsel %vm2504, %v2506, %v2502
      %v2508 = vmul.f32 1.0, %v2507
      %v2509 = vmul.f32 %v2453, %v2085
      %v2510 = vmul.f32 %v2468, %v2086
      %v2511 = vmul.f32 %v2415, %v2469
      %v2512 = vmul.f32 %v2430, %v2470
      %v2513 = vadd.f32 %v2509, %v2511
      %v2514 = vadd.f32 %v2510, %v2512
      %v2515 = vtanh.pop %v2513
      %v2516 = vtanh.pop %v2514
      %v2517 = vmul.f32 %v2493, %v2515
      %v2518 = vmul.f32 %v2508, %v2516
      %v2519 = vpack.c.bf16 %v2517, %v2517
      %v2520 = vpack.c.bf16 %v2518, %v2518
      %s2521 = scalar_lea.vmem %s231, 8
      %2522 = vst [vmem:[%s2521] sm:$0xf] %v2519
      %2523 = vst [vmem:[%s2521 + $0x4] sm:$0xf] %v2520
      %s2524 = scalar_lea.vmem [#allocation6], 96
      %v2525 = vld [vmem:[%s2524] sm:$0xff]
      %v2526 = vld [vmem:[%s2524 + $0x8] sm:$0xff]
      %v2527 = vld [vmem:[%s2524 + $0x10] sm:$0xff]
      %v2528 = vld [vmem:[%s2524 + $0x18] sm:$0xff]
      %v2529 = vunpack.c.l.bf16 %v2525
      %v2530 = vunpack.c.h.bf16 %v2525
      %v2531 = vunpack.c.l.bf16 %v2526
      %v2532 = vunpack.c.h.bf16 %v2526
      %v2533 = vunpack.c.l.bf16 %v2527
      %v2534 = vunpack.c.h.bf16 %v2527
      %v2535 = vunpack.c.l.bf16 %v2528
      %v2536 = vunpack.c.h.bf16 %v2528
      %v2539 = vunpack.c.l.b16 %v2305
      %v2540 = vunpack.c.l.b16 %v2306
      %v2541 = vpack.c.b16 %v2540, %v2539
      %2543 = vmatpush.bf16.msra.mxu0 %v1069
      %2544 = vmatpush.bf16.msra.mxu0 %v1065
      %2545 = vmatpush.bf16.msra.mxu0 %v1061
      %2546 = vmatpush.bf16.msra.mxu0 %v1057
      %2547 = vmatpush.bf16.msra.mxu0 %v1053
      %2548 = vmatpush.bf16.msra.mxu0 %v1049
      %2549 = vmatpush.bf16.msra.mxu0 %v1045
      %2550 = vmatpush.bf16.msra.mxu0 %v1041
      %2551 = vmatmul.bf16.gmra.mxu0 %v2541
      %v2552 = vpop.f32.mrf.mxu0
      %v2553 = vadd.f32 0.0, %v2552
      %v2554 = vpop.f32.mrf.mxu0
      %v2555 = vadd.f32 0.0, %v2554
      %2556 = vdwg.mxu0
      %2557 = vmatpush.bf16.msra.mxu0 %v1070
      %2558 = vmatpush.bf16.msra.mxu0 %v1066
      %2559 = vmatpush.bf16.msra.mxu0 %v1062
      %2560 = vmatpush.bf16.msra.mxu0 %v1058
      %2561 = vmatpush.bf16.msra.mxu0 %v1054
      %2562 = vmatpush.bf16.msra.mxu0 %v1050
      %2563 = vmatpush.bf16.msra.mxu0 %v1046
      %2564 = vmatpush.bf16.msra.mxu0 %v1042
      %2565 = vmatmul.bf16.gmra.mxu0 %v2541
      %v2566 = vpop.f32.mrf.mxu0
      %v2567 = vadd.f32 0.0, %v2566
      %v2568 = vpop.f32.mrf.mxu0
      %v2569 = vadd.f32 0.0, %v2568
      %2570 = vdwg.mxu0
      %2571 = vmatpush.bf16.msra.mxu0 %v1071
      %2572 = vmatpush.bf16.msra.mxu0 %v1067
      %2573 = vmatpush.bf16.msra.mxu0 %v1063
      %2574 = vmatpush.bf16.msra.mxu0 %v1059
      %2575 = vmatpush.bf16.msra.mxu0 %v1055
      %2576 = vmatpush.bf16.msra.mxu0 %v1051
      %2577 = vmatpush.bf16.msra.mxu0 %v1047
      %2578 = vmatpush.bf16.msra.mxu0 %v1043
      %2579 = vmatmul.bf16.gmra.mxu0 %v2541
      %v2580 = vpop.f32.mrf.mxu0
      %v2581 = vadd.f32 0.0, %v2580
      %v2582 = vpop.f32.mrf.mxu0
      %v2583 = vadd.f32 0.0, %v2582
      %2584 = vdwg.mxu0
      %2585 = vmatpush.bf16.msra.mxu0 %v1072
      %2586 = vmatpush.bf16.msra.mxu0 %v1068
      %2587 = vmatpush.bf16.msra.mxu0 %v1064
      %2588 = vmatpush.bf16.msra.mxu0 %v1060
      %2589 = vmatpush.bf16.msra.mxu0 %v1056
      %2590 = vmatpush.bf16.msra.mxu0 %v1052
      %2591 = vmatpush.bf16.msra.mxu0 %v1048
      %2592 = vmatpush.bf16.msra.mxu0 %v1044
      %2593 = vmatmul.bf16.gmra.mxu0 %v2541
      %v2594 = vpop.f32.mrf.mxu0
      %v2595 = vadd.f32 0.0, %v2594
      %v2596 = vpop.f32.mrf.mxu0
      %v2597 = vadd.f32 0.0, %v2596
      %2598 = vdwg.mxu0
      %v2599 = vadd.f32 %v2529, %v2553
      %v2600 = vadd.f32 %v2530, %v2567
      %v2601 = vadd.f32 %v2531, %v2581
      %v2602 = vadd.f32 %v2532, %v2595
      %v2603 = vadd.f32 %v2533, %v2555
      %v2604 = vadd.f32 %v2534, %v2569
      %v2605 = vadd.f32 %v2535, %v2583
      %v2606 = vadd.f32 %v2536, %v2597
      %v2607 = vxor.u32 %v2599, 2147483648
      %v2608 = vxor.u32 %v2603, 2147483648
      %v2609 = vmul.f32 %v2607, 1.442695
      %v2610 = vpow.pop %v2609
      %v2611 = vmul.f32 %v2608, 1.442695
      %v2612 = vpow.pop %v2611
      %v2613 = vadd.f32 %v2610, 1.0
      %v2614 = vadd.f32 %v2612, 1.0
      %v2615 = vrcp.pop %v2613
      %v2616 = vmul.f32 %v2613, %v2615
      %v2617 = vsub.f32 1.0, %v2616
      %v2618 = vmul.f32 %v2615, %v2617
      %v2619 = vadd.f32 %v2615, %v2618
      %vm2620 = vweird.f32 %v2613
      %vm2621 = vweird.f32 %v2615
      %vm2622 = vmor %vm2620, %vm2621
      %v2623 = vsel %vm2622, %v2615, %v2619
      %v2624 = vand.u32 2147483647, %v2613
      %vm2625 = vcmp.eq.f32.partialorder %v2624, 8.507059e+37
      %v2626 = vand.u32 %v2613, 2147483648
      %v2627 = vor.u32 1.1754944e-38, %v2626
      %v2628 = vsel %vm2625, %v2627, %v2623
      %v2629 = vmul.f32 1.0, %v2628
      %v2630 = vrcp.pop %v2614
      %v2631 = vmul.f32 %v2614, %v2630
      %v2632 = vsub.f32 1.0, %v2631
      %v2633 = vmul.f32 %v2630, %v2632
      %v2634 = vadd.f32 %v2630, %v2633
      %vm2635 = vweird.f32 %v2614
      %vm2636 = vweird.f32 %v2630
      %vm2637 = vmor %vm2635, %vm2636
      %v2638 = vsel %vm2637, %v2630, %v2634
      %v2639 = vand.u32 2147483647, %v2614
      %vm2640 = vcmp.eq.f32.partialorder %v2639, 8.507059e+37
      %v2641 = vand.u32 %v2614, 2147483648
      %v2642 = vor.u32 1.1754944e-38, %v2641
      %v2643 = vsel %vm2640, %v2642, %v2638
      %v2644 = vmul.f32 1.0, %v2643
      %v2645 = vxor.u32 %v2600, 2147483648
      %v2646 = vxor.u32 %v2604, 2147483648
      %v2647 = vmul.f32 %v2645, 1.442695
      %v2648 = vpow.pop %v2647
      %v2649 = vmul.f32 %v2646, 1.442695
      %v2650 = vpow.pop %v2649
      %v2651 = vadd.f32 %v2648, 1.0
      %v2652 = vadd.f32 %v2650, 1.0
      %v2653 = vrcp.pop %v2651
      %v2654 = vmul.f32 %v2651, %v2653
      %v2655 = vsub.f32 1.0, %v2654
      %v2656 = vmul.f32 %v2653, %v2655
      %v2657 = vadd.f32 %v2653, %v2656
      %vm2658 = vweird.f32 %v2651
      %vm2659 = vweird.f32 %v2653
      %vm2660 = vmor %vm2658, %vm2659
      %v2661 = vsel %vm2660, %v2653, %v2657
      %v2662 = vand.u32 2147483647, %v2651
      %vm2663 = vcmp.eq.f32.partialorder %v2662, 8.507059e+37
      %v2664 = vand.u32 %v2651, 2147483648
      %v2665 = vor.u32 1.1754944e-38, %v2664
      %v2666 = vsel %vm2663, %v2665, %v2661
      %v2667 = vmul.f32 1.0, %v2666
      %v2668 = vrcp.pop %v2652
      %v2669 = vmul.f32 %v2652, %v2668
      %v2670 = vsub.f32 1.0, %v2669
      %v2671 = vmul.f32 %v2668, %v2670
      %v2672 = vadd.f32 %v2668, %v2671
      %vm2673 = vweird.f32 %v2652
      %vm2674 = vweird.f32 %v2668
      %vm2675 = vmor %vm2673, %vm2674
      %v2676 = vsel %vm2675, %v2668, %v2672
      %v2677 = vand.u32 2147483647, %v2652
      %vm2678 = vcmp.eq.f32.partialorder %v2677, 8.507059e+37
      %v2679 = vand.u32 %v2652, 2147483648
      %v2680 = vor.u32 1.1754944e-38, %v2679
      %v2681 = vsel %vm2678, %v2680, %v2676
      %v2682 = vmul.f32 1.0, %v2681
      %v2683 = vtanh.pop %v2601
      %v2684 = vtanh.pop %v2605
      %v2685 = vxor.u32 %v2602, 2147483648
      %v2686 = vxor.u32 %v2606, 2147483648
      %v2687 = vmul.f32 %v2685, 1.442695
      %v2688 = vpow.pop %v2687
      %v2689 = vmul.f32 %v2686, 1.442695
      %v2690 = vpow.pop %v2689
      %v2691 = vadd.f32 %v2688, 1.0
      %v2692 = vadd.f32 %v2690, 1.0
      %v2693 = vrcp.pop %v2691
      %v2694 = vmul.f32 %v2691, %v2693
      %v2695 = vsub.f32 1.0, %v2694
      %v2696 = vmul.f32 %v2693, %v2695
      %v2697 = vadd.f32 %v2693, %v2696
      %vm2698 = vweird.f32 %v2691
      %vm2699 = vweird.f32 %v2693
      %vm2700 = vmor %vm2698, %vm2699
      %v2701 = vsel %vm2700, %v2693, %v2697
      %v2702 = vand.u32 2147483647, %v2691
      %vm2703 = vcmp.eq.f32.partialorder %v2702, 8.507059e+37
      %v2704 = vand.u32 %v2691, 2147483648
      %v2705 = vor.u32 1.1754944e-38, %v2704
      %v2706 = vsel %vm2703, %v2705, %v2701
      %v2707 = vmul.f32 1.0, %v2706
      %v2708 = vrcp.pop %v2692
      %v2709 = vmul.f32 %v2692, %v2708
      %v2710 = vsub.f32 1.0, %v2709
      %v2711 = vmul.f32 %v2708, %v2710
      %v2712 = vadd.f32 %v2708, %v2711
      %vm2713 = vweird.f32 %v2692
      %vm2714 = vweird.f32 %v2708
      %vm2715 = vmor %vm2713, %vm2714
      %v2716 = vsel %vm2715, %v2708, %v2712
      %v2717 = vand.u32 2147483647, %v2692
      %vm2718 = vcmp.eq.f32.partialorder %v2717, 8.507059e+37
      %v2719 = vand.u32 %v2692, 2147483648
      %v2720 = vor.u32 1.1754944e-38, %v2719
      %v2721 = vsel %vm2718, %v2720, %v2716
      %v2722 = vmul.f32 1.0, %v2721
      %v2723 = vmul.f32 %v2667, %v2299
      %v2724 = vmul.f32 %v2682, %v2300
      %v2725 = vmul.f32 %v2629, %v2683
      %v2726 = vmul.f32 %v2644, %v2684
      %v2727 = vadd.f32 %v2723, %v2725
      %v2728 = vadd.f32 %v2724, %v2726
      %v2729 = vtanh.pop %v2727
      %v2730 = vtanh.pop %v2728
      %v2731 = vmul.f32 %v2707, %v2729
      %v2732 = vmul.f32 %v2722, %v2730
      %v2733 = vpack.c.bf16 %v2731, %v2731
      %v2734 = vpack.c.bf16 %v2732, %v2732
      %s2735 = scalar_lea.vmem %s223, 24
      %2736 = vst [vmem:[%s2735] sm:$0xf] %v2733
      %2737 = vst [vmem:[%s2735 + $0x4] sm:$0xf] %v2734
      %v2738 = vld [vmem:[#allocation7] sm:$0xff]
      %v2739 = vld [vmem:[#allocation7 + $0x8] sm:$0xff]
      %v2740 = vld [vmem:[#allocation7 + $0x10] sm:$0xff]
      %v2741 = vld [vmem:[#allocation7 + $0x18] sm:$0xff]
      %v2742 = vunpack.c.l.bf16 %v2738
      %v2743 = vunpack.c.h.bf16 %v2738
      %v2744 = vunpack.c.l.bf16 %v2739
      %v2745 = vunpack.c.h.bf16 %v2739
      %v2746 = vunpack.c.l.bf16 %v2740
      %v2747 = vunpack.c.h.bf16 %v2740
      %v2748 = vunpack.c.l.bf16 %v2741
      %v2749 = vunpack.c.h.bf16 %v2741
      %v2752 = vunpack.c.l.b16 %v2519
      %v2753 = vunpack.c.l.b16 %v2520
      %v2754 = vpack.c.b16 %v2753, %v2752
      %2756 = vmatpush.bf16.msra.mxu0 %v1437
      %2757 = vmatpush.bf16.msra.mxu0 %v1433
      %2758 = vmatpush.bf16.msra.mxu0 %v1429
      %2759 = vmatpush.bf16.msra.mxu0 %v1425
      %2760 = vmatpush.bf16.msra.mxu0 %v1421
      %2761 = vmatpush.bf16.msra.mxu0 %v1417
      %2762 = vmatpush.bf16.msra.mxu0 %v1413
      %2763 = vmatpush.bf16.msra.mxu0 %v1409
      %2764 = vmatmul.bf16.gmra.mxu0 %v2754
      %v2765 = vpop.f32.mrf.mxu0
      %v2766 = vadd.f32 0.0, %v2765
      %v2767 = vpop.f32.mrf.mxu0
      %v2768 = vadd.f32 0.0, %v2767
      %2769 = vdwg.mxu0
      %2770 = vmatpush.bf16.msra.mxu0 %v1438
      %2771 = vmatpush.bf16.msra.mxu0 %v1434
      %2772 = vmatpush.bf16.msra.mxu0 %v1430
      %2773 = vmatpush.bf16.msra.mxu0 %v1426
      %2774 = vmatpush.bf16.msra.mxu0 %v1422
      %2775 = vmatpush.bf16.msra.mxu0 %v1418
      %2776 = vmatpush.bf16.msra.mxu0 %v1414
      %2777 = vmatpush.bf16.msra.mxu0 %v1410
      %2778 = vmatmul.bf16.gmra.mxu0 %v2754
      %v2779 = vpop.f32.mrf.mxu0
      %v2780 = vadd.f32 0.0, %v2779
      %v2781 = vpop.f32.mrf.mxu0
      %v2782 = vadd.f32 0.0, %v2781
      %2783 = vdwg.mxu0
      %2784 = vmatpush.bf16.msra.mxu0 %v1439
      %2785 = vmatpush.bf16.msra.mxu0 %v1435
      %2786 = vmatpush.bf16.msra.mxu0 %v1431
      %2787 = vmatpush.bf16.msra.mxu0 %v1427
      %2788 = vmatpush.bf16.msra.mxu0 %v1423
      %2789 = vmatpush.bf16.msra.mxu0 %v1419
      %2790 = vmatpush.bf16.msra.mxu0 %v1415
      %2791 = vmatpush.bf16.msra.mxu0 %v1411
      %2792 = vmatmul.bf16.gmra.mxu0 %v2754
      %v2793 = vpop.f32.mrf.mxu0
      %v2794 = vadd.f32 0.0, %v2793
      %v2795 = vpop.f32.mrf.mxu0
      %v2796 = vadd.f32 0.0, %v2795
      %2797 = vdwg.mxu0
      %2798 = vmatpush.bf16.msra.mxu0 %v1440
      %2799 = vmatpush.bf16.msra.mxu0 %v1436
      %2800 = vmatpush.bf16.msra.mxu0 %v1432
      %2801 = vmatpush.bf16.msra.mxu0 %v1428
      %2802 = vmatpush.bf16.msra.mxu0 %v1424
      %2803 = vmatpush.bf16.msra.mxu0 %v1420
      %2804 = vmatpush.bf16.msra.mxu0 %v1416
      %2805 = vmatpush.bf16.msra.mxu0 %v1412
      %2806 = vmatmul.bf16.gmra.mxu0 %v2754
      %v2807 = vpop.f32.mrf.mxu0
      %v2808 = vadd.f32 0.0, %v2807
      %v2809 = vpop.f32.mrf.mxu0
      %v2810 = vadd.f32 0.0, %v2809
      %2811 = vdwg.mxu0
      %v2812 = vadd.f32 %v2742, %v2766
      %v2813 = vadd.f32 %v2743, %v2780
      %v2814 = vadd.f32 %v2744, %v2794
      %v2815 = vadd.f32 %v2745, %v2808
      %v2816 = vadd.f32 %v2746, %v2768
      %v2817 = vadd.f32 %v2747, %v2782
      %v2818 = vadd.f32 %v2748, %v2796
      %v2819 = vadd.f32 %v2749, %v2810
      %v2820 = vxor.u32 %v2812, 2147483648
      %v2821 = vxor.u32 %v2816, 2147483648
      %v2822 = vmul.f32 %v2820, 1.442695
      %v2823 = vpow.pop %v2822
      %v2824 = vmul.f32 %v2821, 1.442695
      %v2825 = vpow.pop %v2824
      %v2826 = vadd.f32 %v2823, 1.0
      %v2827 = vadd.f32 %v2825, 1.0
      %v2828 = vrcp.pop %v2826
      %v2829 = vmul.f32 %v2826, %v2828
      %v2830 = vsub.f32 1.0, %v2829
      %v2831 = vmul.f32 %v2828, %v2830
      %v2832 = vadd.f32 %v2828, %v2831
      %vm2833 = vweird.f32 %v2826
      %vm2834 = vweird.f32 %v2828
      %vm2835 = vmor %vm2833, %vm2834
      %v2836 = vsel %vm2835, %v2828, %v2832
      %v2837 = vand.u32 2147483647, %v2826
      %vm2838 = vcmp.eq.f32.partialorder %v2837, 8.507059e+37
      %v2839 = vand.u32 %v2826, 2147483648
      %v2840 = vor.u32 1.1754944e-38, %v2839
      %v2841 = vsel %vm2838, %v2840, %v2836
      %v2842 = vmul.f32 1.0, %v2841
      %v2843 = vrcp.pop %v2827
      %v2844 = vmul.f32 %v2827, %v2843
      %v2845 = vsub.f32 1.0, %v2844
      %v2846 = vmul.f32 %v2843, %v2845
      %v2847 = vadd.f32 %v2843, %v2846
      %vm2848 = vweird.f32 %v2827
      %vm2849 = vweird.f32 %v2843
      %vm2850 = vmor %vm2848, %vm2849
      %v2851 = vsel %vm2850, %v2843, %v2847
      %v2852 = vand.u32 2147483647, %v2827
      %vm2853 = vcmp.eq.f32.partialorder %v2852, 8.507059e+37
      %v2854 = vand.u32 %v2827, 2147483648
      %v2855 = vor.u32 1.1754944e-38, %v2854
      %v2856 = vsel %vm2853, %v2855, %v2851
      %v2857 = vmul.f32 1.0, %v2856
      %v2858 = vxor.u32 %v2813, 2147483648
      %v2859 = vxor.u32 %v2817, 2147483648
      %v2860 = vmul.f32 %v2858, 1.442695
      %v2861 = vpow.pop %v2860
      %v2862 = vmul.f32 %v2859, 1.442695
      %v2863 = vpow.pop %v2862
      %v2864 = vadd.f32 %v2861, 1.0
      %v2865 = vadd.f32 %v2863, 1.0
      %v2866 = vrcp.pop %v2864
      %v2867 = vmul.f32 %v2864, %v2866
      %v2868 = vsub.f32 1.0, %v2867
      %v2869 = vmul.f32 %v2866, %v2868
      %v2870 = vadd.f32 %v2866, %v2869
      %vm2871 = vweird.f32 %v2864
      %vm2872 = vweird.f32 %v2866
      %vm2873 = vmor %vm2871, %vm2872
      %v2874 = vsel %vm2873, %v2866, %v2870
      %v2875 = vand.u32 2147483647, %v2864
      %vm2876 = vcmp.eq.f32.partialorder %v2875, 8.507059e+37
      %v2877 = vand.u32 %v2864, 2147483648
      %v2878 = vor.u32 1.1754944e-38, %v2877
      %v2879 = vsel %vm2876, %v2878, %v2874
      %v2880 = vmul.f32 1.0, %v2879
      %v2881 = vrcp.pop %v2865
      %v2882 = vmul.f32 %v2865, %v2881
      %v2883 = vsub.f32 1.0, %v2882
      %v2884 = vmul.f32 %v2881, %v2883
      %v2885 = vadd.f32 %v2881, %v2884
      %vm2886 = vweird.f32 %v2865
      %vm2887 = vweird.f32 %v2881
      %vm2888 = vmor %vm2886, %vm2887
      %v2889 = vsel %vm2888, %v2881, %v2885
      %v2890 = vand.u32 2147483647, %v2865
      %vm2891 = vcmp.eq.f32.partialorder %v2890, 8.507059e+37
      %v2892 = vand.u32 %v2865, 2147483648
      %v2893 = vor.u32 1.1754944e-38, %v2892
      %v2894 = vsel %vm2891, %v2893, %v2889
      %v2895 = vmul.f32 1.0, %v2894
      %v2896 = vtanh.pop %v2814
      %v2897 = vtanh.pop %v2818
      %v2898 = vxor.u32 %v2815, 2147483648
      %v2899 = vxor.u32 %v2819, 2147483648
      %v2900 = vmul.f32 %v2898, 1.442695
      %v2901 = vpow.pop %v2900
      %v2902 = vmul.f32 %v2899, 1.442695
      %v2903 = vpow.pop %v2902
      %v2904 = vadd.f32 %v2901, 1.0
      %v2905 = vadd.f32 %v2903, 1.0
      %v2906 = vrcp.pop %v2904
      %v2907 = vmul.f32 %v2904, %v2906
      %v2908 = vsub.f32 1.0, %v2907
      %v2909 = vmul.f32 %v2906, %v2908
      %v2910 = vadd.f32 %v2906, %v2909
      %vm2911 = vweird.f32 %v2904
      %vm2912 = vweird.f32 %v2906
      %vm2913 = vmor %vm2911, %vm2912
      %v2914 = vsel %vm2913, %v2906, %v2910
      %v2915 = vand.u32 2147483647, %v2904
      %vm2916 = vcmp.eq.f32.partialorder %v2915, 8.507059e+37
      %v2917 = vand.u32 %v2904, 2147483648
      %v2918 = vor.u32 1.1754944e-38, %v2917
      %v2919 = vsel %vm2916, %v2918, %v2914
      %v2920 = vmul.f32 1.0, %v2919
      %v2921 = vrcp.pop %v2905
      %v2922 = vmul.f32 %v2905, %v2921
      %v2923 = vsub.f32 1.0, %v2922
      %v2924 = vmul.f32 %v2921, %v2923
      %v2925 = vadd.f32 %v2921, %v2924
      %vm2926 = vweird.f32 %v2905
      %vm2927 = vweird.f32 %v2921
      %vm2928 = vmor %vm2926, %vm2927
      %v2929 = vsel %vm2928, %v2921, %v2925
      %v2930 = vand.u32 2147483647, %v2905
      %vm2931 = vcmp.eq.f32.partialorder %v2930, 8.507059e+37
      %v2932 = vand.u32 %v2905, 2147483648
      %v2933 = vor.u32 1.1754944e-38, %v2932
      %v2934 = vsel %vm2931, %v2933, %v2929
      %v2935 = vmul.f32 1.0, %v2934
      %v2936 = vmul.f32 %v2880, %v2513
      %v2937 = vmul.f32 %v2895, %v2514
      %v2938 = vmul.f32 %v2842, %v2896
      %v2939 = vmul.f32 %v2857, %v2897
      %v2940 = vadd.f32 %v2936, %v2938
      %v2941 = vadd.f32 %v2937, %v2939
      %v2942 = vtanh.pop %v2940
      %v2943 = vtanh.pop %v2941
      %v2944 = vmul.f32 %v2920, %v2942
      %v2945 = vmul.f32 %v2935, %v2943
      %v2946 = vpack.c.bf16 %v2944, %v2944
      %v2947 = vpack.c.bf16 %v2945, %v2945
      %2948 = vst [vmem:[%s231] sm:$0xf] %v2946
      %2949 = vst [vmem:[%s231 + $0x4] sm:$0xf] %v2947
      %2950 = vst [vmem:[#allocation2] sm:$0xff] %v2731
      %2951 = vst [vmem:[#allocation2 + $0x8] sm:$0xff] %v2732
      %2952 = vst [vmem:[#allocation3] sm:$0xff] %v2727
      %2953 = vst [vmem:[#allocation3 + $0x8] sm:$0xff] %v2728
      %2954 = vst [vmem:[#allocation4] sm:$0xff] %v2944
      %2955 = vst [vmem:[#allocation4 + $0x8] sm:$0xff] %v2945
      %2956 = vst [vmem:[#allocation5] sm:$0xff] %v2940
      %2957 = vst [vmem:[#allocation5 + $0x8] sm:$0xff] %v2941
      %s2958 = smul.u32 4, %s17
      %p2959 = scmp.lt.s32.totalorder %s2958, 7
      %s2960 = scalar_select %p2959, %s2958, 7
      %s2961 = smul.addr %s2960, 2
      %s2962 = smul.addr %s2961, 4
      %s2963 = scalar_lea.vmem %s4, %s2962
      %s2964 = ssub.s32 1, %s17
      %s2965 = smul.u32 4, %s2964
      %p2966 = scmp.lt.s32.totalorder %s2965, 7
      %s2967 = scalar_select %p2966, %s2965, 7
      %s2968 = smul.addr %s2967, 2
      %s2969 = smul.addr %s2968, 4
      %s2970 = scalar_lea.vmem %s5, %s2969
      // Predicated region
      $region71: #{bilstm_module_forward.2} parent=27 // pred_check
        %p2971 = pneg %p89
      $region72: #{bilstm_module_forward.2} parent=27 // pred_check_branch
        %2973 = sbr.rel (%p2971) target = $region74
      $region73: #{bilstm_module_forward.2} parent=27 // pred_region
        %s2974 = smul.u32 4, %s17
      $region74: #{bilstm_module_forward.2} parent=27 // pred_fallthru
        _
      // Predicated region
      $region75: #{bilstm_module_forward.2} parent=27 // pred_check
        %p2975 = pneg %p117
      $region76: #{bilstm_module_forward.2} parent=27 // pred_check_branch
        %2977 = sbr.rel (%p2975) target = $region78
      $region77: #{bilstm_module_forward.2} parent=27 // pred_region
        %s2978 = ssub.s32 1, %s17
        %s2979 = smul.u32 4, %s2978
      $region78: #{bilstm_module_forward.2} parent=27 // pred_fallthru
        _
    $region28: #{bilstm_module_forward.2} parent=5 // pred_fallthru
      _
    %p2980 = scmp.le.s32.totalorder 2, %s12
    // Predicated region
    $region79: #{bilstm_module_forward.2} parent=5 // pred_check
      %p2981 = pneg %p2980
    $region80: #{bilstm_module_forward.2} parent=5 // pred_check_branch
      %2983 = sbr.rel (%p2981) target = $region82
    $region81: #{bilstm_module_forward.2} parent=5 // pred_region
      %s2984 = ssub.s32 %s12, 2
      // Predicated region
      $region83: #{bilstm_module_forward.2} parent=81 // pred_check
        %p2985 = pneg %p95
      $region84: #{bilstm_module_forward.2} parent=81 // pred_check_branch
        %2987 = sbr.rel (%p2985) target = $region86
      $region85: #{bilstm_module_forward.2} parent=81 // pred_region
        %s2988 = smul.u32 4, %s18
        %p2989 = scmp.lt.s32.totalorder %s2988, 7
        %s2990 = scalar_select %p2989, %s2988, 7
        %s2991 = smul.addr %s2990, 2
        %s2992 = smul.addr %s2991, 4
        %s2993 = scalar_lea.vmem %s4, %s2992
      $region86: #{bilstm_module_forward.2} parent=81 // pred_fallthru
        _
      // Predicated region
      $region87: #{bilstm_module_forward.2} parent=81 // pred_check
        %p2994 = pneg %p123
      $region88: #{bilstm_module_forward.2} parent=81 // pred_check_branch
        %2996 = sbr.rel (%p2994) target = $region90
      $region89: #{bilstm_module_forward.2} parent=81 // pred_region
        %s2997 = ssub.s32 1, %s18
        %s2998 = smul.u32 4, %s2997
        %p2999 = scmp.lt.s32.totalorder %s2998, 7
        %s3000 = scalar_select %p2999, %s2998, 7
        %s3001 = smul.addr %s3000, 2
        %s3002 = smul.addr %s3001, 4
        %s3003 = scalar_lea.vmem %s5, %s3002
      $region90: #{bilstm_module_forward.2} parent=81 // pred_fallthru
        _
    $region82: #{bilstm_module_forward.2} parent=5 // pred_fallthru
      _
  $region6: #{bilstm_module_forward.2} parent=0 // loop_footer
    %s16 = sadd.s32 1, %s12
  $region7: #{bilstm_module_forward.2} parent=0 // loop_footer_branch
    %11 = sbr.rel target = $region3
  $region8: #{bilstm_module_forward.2} parent=0 // loop_exit
    _
  %3004 = vsyncmov [#allocation10]
  %s3005 = vpop.sfrf %3004
  %p3006 = scmp.eq.s32.totalorder %s3005, 0
  %p3007 = pneg %p3006
  %3009 = shalt.err (%p3007)
  %s3010 = scalar_lea.sflag [#allocation10], 1
  %3011 = vsyncmov %s3010
  %s3012 = vpop.sfrf %3011
  %p3013 = scmp.eq.s32.totalorder %s3012, 0
  %p3014 = pneg %p3013
  %3016 = shalt.err (%p3014)

</llo_original>
